<compile_context>
chip_gen: v6e
topology: v6e:2x2x1
jax: 0.10.0
libtpu: 0.0.40
codegen_flags: <defaults>
</compile_context>

<pallas_src>
import math
from functools import partial

import jax
import jax.numpy as jnp
from jax import lax
from jax.experimental import pallas as pl
from jax.experimental.pallas import tpu as pltpu


# ------------------------------- kernel --------------------------------------


def _rms_norm(v, scale, eps=1e-6):
    # v: (T, D) f32, scale: (1, D) f32
    ms = jnp.mean(v * v, axis=-1, keepdims=True)
    return v * lax.rsqrt(ms + eps) * scale


def fused_latent_transformer_kernel(
    tok_ref,    # (1, Tq, D)    f32   latent tokens (grid-invariant, resident)
    x_ref,      # (1, S,  D)    f32   context for this batch element
    sc_ref,     # (1, 8,  D)    f32   rows: 0=ctx 1=queries 2=ff 3=out (4..7 pad)
    wq_ref,     # (1, D, D)     bf16
    wkv_ref,    # (1, D, 2D)    bf16  [wk | wv]
    wc_ref,     # (1, D, D)     bf16
    w13_ref,    # (1, D, 2Hff)  bf16  [w1 | w3]
    w2_ref,     # (1, Hff, D)   bf16
    out_ref,    # (1, Tq, D)    f32
    lat_sc,     # (B, Tq, D)    f32   per-batch latents carried across layers
    *,
    n_head: int,
):
    layer = pl.program_id(0)
    n_layer = pl.num_programs(0)
    b = pl.program_id(1)

    # Initialize this batch element's carried latents at the first layer.
    @pl.when(layer == 0)
    def _init():
        lat_sc[b] = tok_ref[0].astype(jnp.float32)

    sc = sc_ref[0]                               # (8, D) f32
    lat = lat_sc[b]                              # (Tq, D) f32
    ctx = x_ref[0].astype(jnp.float32)           # (S, D) f32

    # --- pre-norms (f32 elementwise) ---
    nq16 = _rms_norm(lat, sc[1:2, :]).astype(jnp.bfloat16)   # (Tq, D)
    nc16 = _rms_norm(ctx, sc[0:1, :]).astype(jnp.bfloat16)   # (S,  D)

    # --- q and fused k|v projections: bf16 MXU operands, f32 accumulation ---
    q = jnp.dot(nq16, wq_ref[0], preferred_element_type=jnp.float32)    # (Tq, D)
    kv = jnp.dot(nc16, wkv_ref[0], preferred_element_type=jnp.float32)  # (S, 2D)

    Tq, D = q.shape
    hd = D // n_head
    # Kept as an in-kernel f32 multiply (8xD VPU mults, negligible) so the
    # bf16-cast boundary exactly matches the reference / module semantics.
    q = q * (1.0 / math.sqrt(hd))

    q16 = q.astype(jnp.bfloat16)
    k16 = kv[:, :D].astype(jnp.bfloat16)         # lane-slice at a 128 multiple
    v16 = kv[:, D:].astype(jnp.bfloat16)
    wc = wc_ref[0]                               # (D, D) bf16

    # --- per-head attention; output projection absorbed per head so head
    #     outputs accumulate in f32 (no lane-axis concat / masked stores).
    y = jnp.zeros((Tq, D), jnp.float32)
    for h in range(n_head):
        lo, hi = h * hd, (h + 1) * hd
        s = lax.dot_general(q16[:, lo:hi], k16[:, lo:hi],
                            (((1,), (1,)), ((), ())),
                            preferred_element_type=jnp.float32)         # (Tq, S)
        m = jnp.max(s, axis=-1, keepdims=True)
        p = jnp.exp(s - m)
        p = p / jnp.sum(p, axis=-1, keepdims=True)   # exact softmax normalizer
        oh = jnp.dot(p.astype(jnp.bfloat16), v16[:, lo:hi],
                     preferred_element_type=jnp.float32)                # (Tq, hd)
        y = y + jnp.dot(oh.astype(jnp.bfloat16), wc[lo:hi, :],
                        preferred_element_type=jnp.float32)             # (Tq, D)
    lat = lat + y

    # --- SwiGLU FFN + residual (w1|w3 fused into one matmul) ---
    # TODO(synk): for production D/Hff on v7x (64 MiB VMEM), tile the FFN over
    # Hff with an extra "arbitrary" grid axis (or pltpu.emit_pipeline) instead
    # of holding w13/w2 whole.
    Hff = w2_ref.shape[1]
    nff = _rms_norm(lat, sc[2:3, :]).astype(jnp.bfloat16)
    h13 = jnp.dot(nff, w13_ref[0], preferred_element_type=jnp.float32)  # (Tq, 2Hff)
    h1 = h13[:, :Hff]
    h3 = h13[:, Hff:]
    hh = (h1 * jax.nn.sigmoid(h1)) * h3                                 # SiLU gate, f32
    ff = jnp.dot(hh.astype(jnp.bfloat16), w2_ref[0],
                 preferred_element_type=jnp.float32)                    # (Tq, D)
    lat = lat + ff

    lat_sc[b] = lat

    # --- fused final RMSNorm, written only at the last layer.  Earlier layers
    #     write back whatever is in the out buffer (stale); the layer L-1 write
    #     is the last one for this batch block, so last-write-wins.
    @pl.when(layer == n_layer - 1)
    def _finalize():
        out_ref[0] = _rms_norm(lat, sc[3:4, :]).astype(out_ref.dtype)


# ------------------------------- wrapper --------------------------------------


def _pick_vmem_limit():
    # Generation-aware VMEM cap: leave ~12 MiB compiler headroom, never ask for
    # more than ~100 MiB (v5e/v6e have 128 MiB, v7x has 64 MiB).
    try:
        cap = int(pltpu.get_tpu_info().vmem_capacity_bytes)
        return min(cap - 12 * 1024 * 1024, 100 * 1024 * 1024)
    except Exception:
        return 48 * 1024 * 1024


def latent_transformer_forward(x, params):
    """x: (B, S, D) f32 -> latents (B, n_latent, D) f32 (eval-mode forward)."""
    B, S, D = x.shape
    L = params["wq"].shape[0]
    Tq = params["latent_tokens"].shape[1]
    Hff = params["w1"].shape[-1]
    n_head = params["n_head"]

    # Host-side weight packing: one MXU pass for k|v and for w1|w3.
    wkv = jnp.concatenate([params["wk"], params["wv"]], axis=-1)   # (L, D, 2D)
    w13 = jnp.concatenate([params["w1"], params["w3"]], axis=-1)   # (L, D, 2Hff)

    # Grid is (layer, batch): weight index_maps depend only on the layer index,
    # so weight slabs are fetched once per layer (not once per (layer, batch)).
    per_layer = lambda *tail: pl.BlockSpec((1,) + tail, lambda l, b: (l, 0, 0))
    per_batch = lambda *tail: pl.BlockSpec((1,) + tail, lambda l, b: (b, 0, 0))

    return pl.pallas_call(
        partial(fused_latent_transformer_kernel, n_head=n_head),
        out_shape=jax.ShapeDtypeStruct((B, Tq, D), jnp.float32),
        grid=(L, B),
        in_specs=[
            pl.BlockSpec((1, Tq, D), lambda l, b: (0, 0, 0)),   # latent tokens (resident)
            per_batch(S, D),                                    # context, per batch element
            per_layer(8, D),                                    # packed RMSNorm scales
            per_layer(D, D),                                    # wq
            per_layer(D, 2 * D),                                # wk|wv
            per_layer(D, D),                                    # wc
            per_layer(D, 2 * Hff),                              # w1|w3
            per_layer(Hff, D),                                  # w2
        ],
        out_specs=per_batch(Tq, D),
        scratch_shapes=[pltpu.VMEM((B, Tq, D), jnp.float32)],
        # Layer axis is a carried dependence; batch axis kept "arbitrary" too so
        # the (sequential-major layer, minor batch) ordering is always legal.
        # TODO(synk): shard the batch axis across TensorCores (v7x) via core_map
        # or an outer shard_map if per-chip batch gets large.
        compiler_params=pltpu.CompilerParams(
            dimension_semantics=("arbitrary", "arbitrary"),
            vmem_limit_bytes=_pick_vmem_limit()),
    )(
        params["latent_tokens"], x, params["scales"],
        params["wq"], wkv, params["wc"], w13, params["w2"],
    )


# --------------------- pure-JAX reference (for checking) ----------------------


def _ref_forward(x, params):
    """Mirrors the module math with the same precision policy as the kernel:
    bf16 matmul operands, f32 accumulation, f32 elementwise."""
    def rms(v, scale, eps=1e-6):
        ms = jnp.mean(v * v, axis=-1, keepdims=True)
        return v * lax.rsqrt(ms + eps) * scale

    bf = jnp.bfloat16
    f32 = jnp.float32
    B, S, D = x.shape
    H = params["n_head"]
    hd = D // H
    L = params["wq"].shape[0]
    Tq = params["latent_tokens"].shape[1]

    lat = jnp.broadcast_to(params["latent_tokens"], (B, Tq, D)).astype(f32)
    xf = x.astype(f32)
    for l in range(L):
        sc = params["scales"][l]
        nq = rms(lat, sc[1]).astype(bf)
        nc = rms(xf, sc[0]).astype(bf)
        q = jnp.einsum("btd,de->bte", nq, params["wq"][l], preferred_element_type=f32)
        k = jnp.einsum("bsd,de->bse", nc, params["wk"][l], preferred_element_type=f32)
        v = jnp.einsum("bsd,de->bse", nc, params["wv"][l], preferred_element_type=f32)
        q = q * (1.0 / math.sqrt(hd))
        qh = q.astype(bf).reshape(B, Tq, H, hd).transpose(0, 2, 1, 3)
        kh = k.astype(bf).reshape(B, S, H, hd).transpose(0, 2, 1, 3)
        vh = v.astype(bf).reshape(B, S, H, hd).transpose(0, 2, 1, 3)
        s = jnp.einsum("bhqd,bhkd->bhqk", qh, kh, preferred_element_type=f32)
        m = jnp.max(s, axis=-1, keepdims=True)
        p = jnp.exp(s - m)
        p = p / jnp.sum(p, axis=-1, keepdims=True)
        o = jnp.einsum("bhqk,bhkd->bhqd", p.astype(bf), vh, preferred_element_type=f32)
        o = o.transpose(0, 2, 1, 3).reshape(B, Tq, D)
        lat = lat + jnp.einsum("btd,de->bte", o.astype(bf), params["wc"][l],
                               preferred_element_type=f32)
        nff = rms(lat, sc[2]).astype(bf)
        h1 = jnp.einsum("btd,dh->bth", nff, params["w1"][l], preferred_element_type=f32)
        h3 = jnp.einsum("btd,dh->bth", nff, params["w3"][l], preferred_element_type=f32)
        hh = (h1 * jax.nn.sigmoid(h1)) * h3
        lat = lat + jnp.einsum("bth,hd->btd", hh.astype(bf), params["w2"][l],
                               preferred_element_type=f32)
    return rms(lat, params["scales"][-1, 3])


# ------------------------------- param init -----------------------------------


def init_params(key, n_latent, d_model, n_head, n_layer, dim_feedforward=None):
    hff = dim_feedforward if dim_feedforward is not None else 4 * d_model
    ks = jax.random.split(key, 9)

    def w(k, shape, fan_in):
        return (jax.random.normal(k, shape, jnp.float32)
                / math.sqrt(fan_in)).astype(jnp.bfloat16)

    latent_tokens = 0.02 * jax.random.normal(
        ks[0], (1, n_latent, d_model), jnp.float32)
    # Packed RMSNorm scales: rows 0=context, 1=queries, 2=ff, 3=final out-norm,
    # rows 4..7 sublane padding.  Module init is all-ones; perturb so the
    # correctness check actually exercises the scale rows.
    scales = jnp.ones((n_layer, 8, d_model), jnp.float32)
    scales = scales.at[:, :4, :].add(
        0.1 * jax.random.normal(ks[1], (n_layer, 4, d_model), jnp.float32))
    return {
        "latent_tokens": latent_tokens,
        "scales": scales,
        "wq": w(ks[2], (n_layer, d_model, d_model), d_model),
        "wk": w(ks[3], (n_layer, d_model, d_model), d_model),
        "wv": w(ks[4], (n_layer, d_model, d_model), d_model),
        "wc": w(ks[5], (n_layer, d_model, d_model), d_model),
        "w1": w(ks[6], (n_layer, d_model, hff), d_model),
        "w3": w(ks[7], (n_layer, d_model, hff), d_model),
        "w2": w(ks[8], (n_layer, hff, d_model), hff),
        "n_head": n_head,
    }


# ---------------------------------- main ---------------------------------------


if __name__ == "__main__":
    B, S, D = 2, 128, 128
    n_latent, n_head, n_layer = 8, 4, 2

    key = jax.random.PRNGKey(0)
    kx, kp = jax.random.split(key)
    x = jax.random.normal(kx, (B, S, D), jnp.float32)
    params = init_params(kp, n_latent, D, n_head, n_layer)

    out = jax.block_until_ready(latent_transformer_forward(x, params))
    assert out.shape == (B, n_latent, D), out.shape

    ref = jax.block_until_ready(_ref_forward(x, params))
    err = float(jnp.max(jnp.abs(out - ref)))
    assert err < 2e-2, f"max abs err {err}"

    print("KERNEL_OK")
</pallas_src>

<mosaic_0001>
module attributes {stable_mosaic.version = 11 : i64} {
  func.func @fused_latent_transformer_kernel(%arg0: i32, %arg1: i32, %arg2: memref<1x8x128xf32, #tpu.memory_space<vmem>>, %arg3: memref<1x128x128xf32, #tpu.memory_space<vmem>>, %arg4: memref<1x8x128xf32, #tpu.memory_space<vmem>>, %arg5: memref<1x128x128xbf16, #tpu.memory_space<vmem>>, %arg6: memref<1x128x256xbf16, #tpu.memory_space<vmem>>, %arg7: memref<1x128x128xbf16, #tpu.memory_space<vmem>>, %arg8: memref<1x128x1024xbf16, #tpu.memory_space<vmem>>, %arg9: memref<1x512x128xbf16, #tpu.memory_space<vmem>>, %arg10: memref<1x8x128xf32, #tpu.memory_space<vmem>>, %arg11: memref<2x8x128xf32, #tpu.memory_space<vmem>>) attributes {dimension_semantics = [#tpu.dimension_semantics<arbitrary>, #tpu.dimension_semantics<arbitrary>], iteration_bounds = array<i64: 2, 2>, scalar_prefetch = 0 : i64, scratch_operands = 1 : i64, tpu.core_type = #tpu.core_type<tc>, window_params = [{pipeline_mode = #tpu.pipeline_mode<synchronous>, transform_indices = @transform_0, window_bounds = array<i64: 1, 8, 128>}, {transform_indices = @transform_1, window_bounds = array<i64: 1, 128, 128>}, {transform_indices = @transform_2, window_bounds = array<i64: 1, 8, 128>}, {transform_indices = @transform_3, window_bounds = array<i64: 1, 128, 128>}, {transform_indices = @transform_4, window_bounds = array<i64: 1, 128, 256>}, {transform_indices = @transform_5, window_bounds = array<i64: 1, 128, 128>}, {transform_indices = @transform_6, window_bounds = array<i64: 1, 128, 1024>}, {transform_indices = @transform_7, window_bounds = array<i64: 1, 512, 128>}, {transform_indices = @transform_8, window_bounds = array<i64: 1, 8, 128>}]} {
    %c0_i32 = arith.constant 0 : i32
    %0 = arith.cmpi eq, %arg0, %c0_i32 : i32
    %1 = arith.extui %0 : i1 to i32
    %c0_i32_0 = arith.constant 0 : i32
    %2 = arith.cmpi ne, %1, %c0_i32_0 : i32
    scf.if %2 {
      %c0_61 = arith.constant 0 : index
      %c0_62 = arith.constant 0 : index
      %c0_63 = arith.constant 0 : index
      %169 = vector.load %arg2[%c0_61, %c0_62, %c0_63] : memref<1x8x128xf32, #tpu.memory_space<vmem>>, vector<1x8x128xf32>
      %170 = vector.shape_cast %169 : vector<1x8x128xf32> to vector<8x128xf32>
      %171 = arith.index_cast %arg1 : i32 to index
      %c0_64 = arith.constant 0 : index
      %c0_65 = arith.constant 0 : index
      %172 = vector.load %arg11[%171, %c0_64, %c0_65] : memref<2x8x128xf32, #tpu.memory_space<vmem>>, vector<1x8x128xf32>
      %173 = vector.shape_cast %172 : vector<1x8x128xf32> to vector<8x128xf32>
      %174 = vector.shape_cast %170 : vector<8x128xf32> to vector<1x8x128xf32>
      tpu.vector_store %arg11[%171, %c0_64, %c0_65], %174 {strides = array<i32>} : memref<2x8x128xf32, #tpu.memory_space<vmem>>, vector<1x8x128xf32>,
    } else {
    }
    %c0 = arith.constant 0 : index
    %c0_1 = arith.constant 0 : index
    %c0_2 = arith.constant 0 : index
    %3 = vector.load %arg4[%c0, %c0_1, %c0_2] : memref<1x8x128xf32, #tpu.memory_space<vmem>>, vector<1x8x128xf32>
    %4 = vector.shape_cast %3 : vector<1x8x128xf32> to vector<8x128xf32>
    %5 = arith.index_cast %arg1 : i32 to index
    %c0_3 = arith.constant 0 : index
    %c0_4 = arith.constant 0 : index
    %6 = vector.load %arg11[%5, %c0_3, %c0_4] : memref<2x8x128xf32, #tpu.memory_space<vmem>>, vector<1x8x128xf32>
    %7 = vector.shape_cast %6 : vector<1x8x128xf32> to vector<8x128xf32>
    %c0_5 = arith.constant 0 : index
    %c0_6 = arith.constant 0 : index
    %c0_7 = arith.constant 0 : index
    %8 = vector.load %arg3[%c0_5, %c0_6, %c0_7] : memref<1x128x128xf32, #tpu.memory_space<vmem>>, vector<1x128x128xf32>
    %9 = vector.shape_cast %8 : vector<1x128x128xf32> to vector<128x128xf32>
    %10 = vector.extract_strided_slice %4 {offsets = [1, 0], sizes = [1, 128], strides = [1, 1]} : vector<8x128xf32> to vector<1x128xf32>
    %11 = arith.mulf %7, %7 : vector<8x128xf32>
    %cst = arith.constant dense<0.000000e+00> : vector<8xf32>
    %12 = vector.multi_reduction <add>, %11, %cst [1] : vector<8x128xf32> to vector<8xf32>
    %13 = vector.shape_cast %12 : vector<8xf32> to vector<8x1xf32>
    %cst_8 = arith.constant 1.280000e+02 : f32
    %14 = vector.broadcast %cst_8 : f32 to vector<8x1xf32>
    %15 = arith.divf %13, %14 : vector<8x1xf32>
    %cst_9 = arith.constant 9.99999997E-7 : f32
    %16 = vector.broadcast %cst_9 : f32 to vector<8x1xf32>
    %17 = arith.addf %15, %16 : vector<8x1xf32>
    %18 = math.rsqrt %17 : vector<8x1xf32>
    %19 = vector.broadcast %18 : vector<8x1xf32> to vector<8x128xf32>
    %20 = arith.mulf %7, %19 : vector<8x128xf32>
    %21 = vector.broadcast %10 : vector<1x128xf32> to vector<8x128xf32>
    %22 = arith.mulf %20, %21 : vector<8x128xf32>
    %23 = arith.truncf %22 : vector<8x128xf32> to vector<8x128xbf16>
    %24 = vector.extract_strided_slice %4 {offsets = [0, 0], sizes = [1, 128], strides = [1, 1]} : vector<8x128xf32> to vector<1x128xf32>
    %25 = arith.mulf %9, %9 : vector<128x128xf32>
    %cst_10 = arith.constant dense<0.000000e+00> : vector<128xf32>
    %26 = vector.multi_reduction <add>, %25, %cst_10 [1] : vector<128x128xf32> to vector<128xf32>
    %27 = vector.shape_cast %26 : vector<128xf32> to vector<128x1xf32>
    %cst_11 = arith.constant 1.280000e+02 : f32
    %28 = vector.broadcast %cst_11 : f32 to vector<128x1xf32>
    %29 = arith.divf %27, %28 : vector<128x1xf32>
    %cst_12 = arith.constant 9.99999997E-7 : f32
    %30 = vector.broadcast %cst_12 : f32 to vector<128x1xf32>
    %31 = arith.addf %29, %30 : vector<128x1xf32>
    %32 = math.rsqrt %31 : vector<128x1xf32>
    %33 = vector.broadcast %32 : vector<128x1xf32> to vector<128x128xf32>
    %34 = arith.mulf %9, %33 : vector<128x128xf32>
    %35 = vector.broadcast %24 : vector<1x128xf32> to vector<128x128xf32>
    %36 = arith.mulf %34, %35 : vector<128x128xf32>
    %37 = arith.truncf %36 : vector<128x128xf32> to vector<128x128xbf16>
    %c0_13 = arith.constant 0 : index
    %c0_14 = arith.constant 0 : index
    %c0_15 = arith.constant 0 : index
    %38 = vector.load %arg5[%c0_13, %c0_14, %c0_15] : memref<1x128x128xbf16, #tpu.memory_space<vmem>>, vector<1x128x128xbf16>
    %39 = vector.shape_cast %38 : vector<1x128x128xbf16> to vector<128x128xbf16>
    %cst_16 = arith.constant dense<0.000000e+00> : vector<8x128xf32>
    %40 = tpu.matmul %23, %39, %cst_16 {dimension_numbers = #tpu.dot_dimension_numbers<[1], [0], [0], [1], [0, 0, 1, 1], [], []>} : vector<8x128xbf16>, vector<128x128xbf16>, vector<8x128xf32> -> vector<8x128xf32>
    %c0_17 = arith.constant 0 : index
    %c0_18 = arith.constant 0 : index
    %c0_19 = arith.constant 0 : index
    %41 = vector.load %arg6[%c0_17, %c0_18, %c0_19] : memref<1x128x256xbf16, #tpu.memory_space<vmem>>, vector<1x128x256xbf16>
    %42 = vector.shape_cast %41 : vector<1x128x256xbf16> to vector<128x256xbf16>
    %cst_20 = arith.constant dense<0.000000e+00> : vector<128x256xf32>
    %43 = tpu.matmul %37, %42, %cst_20 {dimension_numbers = #tpu.dot_dimension_numbers<[1], [0], [0], [1], [0, 0, 1, 1], [], []>} : vector<128x128xbf16>, vector<128x256xbf16>, vector<128x256xf32> -> vector<128x256xf32>
    %cst_21 = arith.constant 0.176776692 : f32
    %44 = vector.broadcast %cst_21 : f32 to vector<8x128xf32>
    %45 = arith.mulf %40, %44 : vector<8x128xf32>
    %46 = arith.truncf %45 : vector<8x128xf32> to vector<8x128xbf16>
    %47 = vector.extract_strided_slice %43 {offsets = [0, 0], sizes = [128, 128], strides = [1, 1]} : vector<128x256xf32> to vector<128x128xf32>
    %48 = arith.truncf %47 : vector<128x128xf32> to vector<128x128xbf16>
    %49 = vector.extract_strided_slice %43 {offsets = [0, 128], sizes = [128, 128], strides = [1, 1]} : vector<128x256xf32> to vector<128x128xf32>
    %50 = arith.truncf %49 : vector<128x128xf32> to vector<128x128xbf16>
    %c0_22 = arith.constant 0 : index
    %c0_23 = arith.constant 0 : index
    %c0_24 = arith.constant 0 : index
    %51 = vector.load %arg7[%c0_22, %c0_23, %c0_24] : memref<1x128x128xbf16, #tpu.memory_space<vmem>>, vector<1x128x128xbf16>
    %52 = vector.shape_cast %51 : vector<1x128x128xbf16> to vector<128x128xbf16>
    %cst_25 = arith.constant 0.000000e+00 : f32
    %53 = vector.broadcast %cst_25 : f32 to vector<8x128xf32>
    %54 = vector.extract_strided_slice %46 {offsets = [0, 0], sizes = [8, 32], strides = [1, 1]} : vector<8x128xbf16> to vector<8x32xbf16>
    %55 = vector.extract_strided_slice %48 {offsets = [0, 0], sizes = [128, 32], strides = [1, 1]} : vector<128x128xbf16> to vector<128x32xbf16>
    %cst_26 = arith.constant dense<0.000000e+00> : vector<8x128xf32>
    %56 = tpu.matmul %54, %55, %cst_26 {dimension_numbers = #tpu.dot_dimension_numbers<[1], [1], [0], [0], [0, 0, 1, 0], [], []>} : vector<8x32xbf16>, vector<128x32xbf16>, vector<8x128xf32> -> vector<8x128xf32>
    %cst_27 = arith.constant dense<0xFF800000> : vector<8xf32>
    %57 = vector.multi_reduction <maximumf>, %56, %cst_27 [1] : vector<8x128xf32> to vector<8xf32>
    %58 = vector.shape_cast %57 : vector<8xf32> to vector<8x1xf32>
    %59 = vector.broadcast %58 : vector<8x1xf32> to vector<8x128xf32>
    %60 = arith.subf %56, %59 : vector<8x128xf32>
    %61 = math.exp %60 : vector<8x128xf32>
    %cst_28 = arith.constant dense<0.000000e+00> : vector<8xf32>
    %62 = vector.multi_reduction <add>, %61, %cst_28 [1] : vector<8x128xf32> to vector<8xf32>
    %63 = vector.shape_cast %62 : vector<8xf32> to vector<8x1xf32>
    %64 = vector.broadcast %63 : vector<8x1xf32> to vector<8x128xf32>
    %65 = arith.divf %61, %64 : vector<8x128xf32>
    %66 = arith.truncf %65 : vector<8x128xf32> to vector<8x128xbf16>
    %67 = vector.extract_strided_slice %50 {offsets = [0, 0], sizes = [128, 32], strides = [1, 1]} : vector<128x128xbf16> to vector<128x32xbf16>
    %cst_29 = arith.constant dense<0.000000e+00> : vector<8x32xf32>
    %68 = tpu.matmul %66, %67, %cst_29 {dimension_numbers = #tpu.dot_dimension_numbers<[1], [0], [0], [1], [0, 0, 1, 1], [], []>} : vector<8x128xbf16>, vector<128x32xbf16>, vector<8x32xf32> -> vector<8x32xf32>
    %69 = arith.truncf %68 : vector<8x32xf32> to vector<8x32xbf16>
    %70 = vector.extract_strided_slice %52 {offsets = [0, 0], sizes = [32, 128], strides = [1, 1]} : vector<128x128xbf16> to vector<32x128xbf16>
    %cst_30 = arith.constant dense<0.000000e+00> : vector<8x128xf32>
    %71 = tpu.matmul %69, %70, %cst_30 {dimension_numbers = #tpu.dot_dimension_numbers<[1], [0], [0], [1], [0, 0, 1, 1], [], []>} : vector<8x32xbf16>, vector<32x128xbf16>, vector<8x128xf32> -> vector<8x128xf32>
    %72 = arith.addf %53, %71 : vector<8x128xf32>
    %73 = vector.extract_strided_slice %46 {offsets = [0, 32], sizes = [8, 32], strides = [1, 1]} : vector<8x128xbf16> to vector<8x32xbf16>
    %74 = vector.extract_strided_slice %48 {offsets = [0, 32], sizes = [128, 32], strides = [1, 1]} : vector<128x128xbf16> to vector<128x32xbf16>
    %cst_31 = arith.constant dense<0.000000e+00> : vector<8x128xf32>
    %75 = tpu.matmul %73, %74, %cst_31 {dimension_numbers = #tpu.dot_dimension_numbers<[1], [1], [0], [0], [0, 0, 1, 0], [], []>} : vector<8x32xbf16>, vector<128x32xbf16>, vector<8x128xf32> -> vector<8x128xf32>
    %cst_32 = arith.constant dense<0xFF800000> : vector<8xf32>
    %76 = vector.multi_reduction <maximumf>, %75, %cst_32 [1] : vector<8x128xf32> to vector<8xf32>
    %77 = vector.shape_cast %76 : vector<8xf32> to vector<8x1xf32>
    %78 = vector.broadcast %77 : vector<8x1xf32> to vector<8x128xf32>
    %79 = arith.subf %75, %78 : vector<8x128xf32>
    %80 = math.exp %79 : vector<8x128xf32>
    %cst_33 = arith.constant dense<0.000000e+00> : vector<8xf32>
    %81 = vector.multi_reduction <add>, %80, %cst_33 [1] : vector<8x128xf32> to vector<8xf32>
    %82 = vector.shape_cast %81 : vector<8xf32> to vector<8x1xf32>
    %83 = vector.broadcast %82 : vector<8x1xf32> to vector<8x128xf32>
    %84 = arith.divf %80, %83 : vector<8x128xf32>
    %85 = arith.truncf %84 : vector<8x128xf32> to vector<8x128xbf16>
    %86 = vector.extract_strided_slice %50 {offsets = [0, 32], sizes = [128, 32], strides = [1, 1]} : vector<128x128xbf16> to vector<128x32xbf16>
    %cst_34 = arith.constant dense<0.000000e+00> : vector<8x32xf32>
    %87 = tpu.matmul %85, %86, %cst_34 {dimension_numbers = #tpu.dot_dimension_numbers<[1], [0], [0], [1], [0, 0, 1, 1], [], []>} : vector<8x128xbf16>, vector<128x32xbf16>, vector<8x32xf32> -> vector<8x32xf32>
    %88 = arith.truncf %87 : vector<8x32xf32> to vector<8x32xbf16>
    %89 = vector.extract_strided_slice %52 {offsets = [32, 0], sizes = [32, 128], strides = [1, 1]} : vector<128x128xbf16> to vector<32x128xbf16>
    %cst_35 = arith.constant dense<0.000000e+00> : vector<8x128xf32>
    %90 = tpu.matmul %88, %89, %cst_35 {dimension_numbers = #tpu.dot_dimension_numbers<[1], [0], [0], [1], [0, 0, 1, 1], [], []>} : vector<8x32xbf16>, vector<32x128xbf16>, vector<8x128xf32> -> vector<8x128xf32>
    %91 = arith.addf %72, %90 : vector<8x128xf32>
    %92 = vector.extract_strided_slice %46 {offsets = [0, 64], sizes = [8, 32], strides = [1, 1]} : vector<8x128xbf16> to vector<8x32xbf16>
    %93 = vector.extract_strided_slice %48 {offsets = [0, 64], sizes = [128, 32], strides = [1, 1]} : vector<128x128xbf16> to vector<128x32xbf16>
    %cst_36 = arith.constant dense<0.000000e+00> : vector<8x128xf32>
    %94 = tpu.matmul %92, %93, %cst_36 {dimension_numbers = #tpu.dot_dimension_numbers<[1], [1], [0], [0], [0, 0, 1, 0], [], []>} : vector<8x32xbf16>, vector<128x32xbf16>, vector<8x128xf32> -> vector<8x128xf32>
    %cst_37 = arith.constant dense<0xFF800000> : vector<8xf32>
    %95 = vector.multi_reduction <maximumf>, %94, %cst_37 [1] : vector<8x128xf32> to vector<8xf32>
    %96 = vector.shape_cast %95 : vector<8xf32> to vector<8x1xf32>
    %97 = vector.broadcast %96 : vector<8x1xf32> to vector<8x128xf32>
    %98 = arith.subf %94, %97 : vector<8x128xf32>
    %99 = math.exp %98 : vector<8x128xf32>
    %cst_38 = arith.constant dense<0.000000e+00> : vector<8xf32>
    %100 = vector.multi_reduction <add>, %99, %cst_38 [1] : vector<8x128xf32> to vector<8xf32>
    %101 = vector.shape_cast %100 : vector<8xf32> to vector<8x1xf32>
    %102 = vector.broadcast %101 : vector<8x1xf32> to vector<8x128xf32>
    %103 = arith.divf %99, %102 : vector<8x128xf32>
    %104 = arith.truncf %103 : vector<8x128xf32> to vector<8x128xbf16>
    %105 = vector.extract_strided_slice %50 {offsets = [0, 64], sizes = [128, 32], strides = [1, 1]} : vector<128x128xbf16> to vector<128x32xbf16>
    %cst_39 = arith.constant dense<0.000000e+00> : vector<8x32xf32>
    %106 = tpu.matmul %104, %105, %cst_39 {dimension_numbers = #tpu.dot_dimension_numbers<[1], [0], [0], [1], [0, 0, 1, 1], [], []>} : vector<8x128xbf16>, vector<128x32xbf16>, vector<8x32xf32> -> vector<8x32xf32>
    %107 = arith.truncf %106 : vector<8x32xf32> to vector<8x32xbf16>
    %108 = vector.extract_strided_slice %52 {offsets = [64, 0], sizes = [32, 128], strides = [1, 1]} : vector<128x128xbf16> to vector<32x128xbf16>
    %cst_40 = arith.constant dense<0.000000e+00> : vector<8x128xf32>
    %109 = tpu.matmul %107, %108, %cst_40 {dimension_numbers = #tpu.dot_dimension_numbers<[1], [0], [0], [1], [0, 0, 1, 1], [], []>} : vector<8x32xbf16>, vector<32x128xbf16>, vector<8x128xf32> -> vector<8x128xf32>
    %110 = arith.addf %91, %109 : vector<8x128xf32>
    %111 = vector.extract_strided_slice %46 {offsets = [0, 96], sizes = [8, 32], strides = [1, 1]} : vector<8x128xbf16> to vector<8x32xbf16>
    %112 = vector.extract_strided_slice %48 {offsets = [0, 96], sizes = [128, 32], strides = [1, 1]} : vector<128x128xbf16> to vector<128x32xbf16>
    %cst_41 = arith.constant dense<0.000000e+00> : vector<8x128xf32>
    %113 = tpu.matmul %111, %112, %cst_41 {dimension_numbers = #tpu.dot_dimension_numbers<[1], [1], [0], [0], [0, 0, 1, 0], [], []>} : vector<8x32xbf16>, vector<128x32xbf16>, vector<8x128xf32> -> vector<8x128xf32>
    %cst_42 = arith.constant dense<0xFF800000> : vector<8xf32>
    %114 = vector.multi_reduction <maximumf>, %113, %cst_42 [1] : vector<8x128xf32> to vector<8xf32>
    %115 = vector.shape_cast %114 : vector<8xf32> to vector<8x1xf32>
    %116 = vector.broadcast %115 : vector<8x1xf32> to vector<8x128xf32>
    %117 = arith.subf %113, %116 : vector<8x128xf32>
    %118 = math.exp %117 : vector<8x128xf32>
    %cst_43 = arith.constant dense<0.000000e+00> : vector<8xf32>
    %119 = vector.multi_reduction <add>, %118, %cst_43 [1] : vector<8x128xf32> to vector<8xf32>
    %120 = vector.shape_cast %119 : vector<8xf32> to vector<8x1xf32>
    %121 = vector.broadcast %120 : vector<8x1xf32> to vector<8x128xf32>
    %122 = arith.divf %118, %121 : vector<8x128xf32>
    %123 = arith.truncf %122 : vector<8x128xf32> to vector<8x128xbf16>
    %124 = vector.extract_strided_slice %50 {offsets = [0, 96], sizes = [128, 32], strides = [1, 1]} : vector<128x128xbf16> to vector<128x32xbf16>
    %cst_44 = arith.constant dense<0.000000e+00> : vector<8x32xf32>
    %125 = tpu.matmul %123, %124, %cst_44 {dimension_numbers = #tpu.dot_dimension_numbers<[1], [0], [0], [1], [0, 0, 1, 1], [], []>} : vector<8x128xbf16>, vector<128x32xbf16>, vector<8x32xf32> -> vector<8x32xf32>
    %126 = arith.truncf %125 : vector<8x32xf32> to vector<8x32xbf16>
    %127 = vector.extract_strided_slice %52 {offsets = [96, 0], sizes = [32, 128], strides = [1, 1]} : vector<128x128xbf16> to vector<32x128xbf16>
    %cst_45 = arith.constant dense<0.000000e+00> : vector<8x128xf32>
    %128 = tpu.matmul %126, %127, %cst_45 {dimension_numbers = #tpu.dot_dimension_numbers<[1], [0], [0], [1], [0, 0, 1, 1], [], []>} : vector<8x32xbf16>, vector<32x128xbf16>, vector<8x128xf32> -> vector<8x128xf32>
    %129 = arith.addf %110, %128 : vector<8x128xf32>
    %130 = arith.addf %7, %129 : vector<8x128xf32>
    %131 = vector.extract_strided_slice %4 {offsets = [2, 0], sizes = [1, 128], strides = [1, 1]} : vector<8x128xf32> to vector<1x128xf32>
    %132 = arith.mulf %130, %130 : vector<8x128xf32>
    %cst_46 = arith.constant dense<0.000000e+00> : vector<8xf32>
    %133 = vector.multi_reduction <add>, %132, %cst_46 [1] : vector<8x128xf32> to vector<8xf32>
    %134 = vector.shape_cast %133 : vector<8xf32> to vector<8x1xf32>
    %cst_47 = arith.constant 1.280000e+02 : f32
    %135 = vector.broadcast %cst_47 : f32 to vector<8x1xf32>
    %136 = arith.divf %134, %135 : vector<8x1xf32>
    %cst_48 = arith.constant 9.99999997E-7 : f32
    %137 = vector.broadcast %cst_48 : f32 to vector<8x1xf32>
    %138 = arith.addf %136, %137 : vector<8x1xf32>
    %139 = math.rsqrt %138 : vector<8x1xf32>
    %140 = vector.broadcast %139 : vector<8x1xf32> to vector<8x128xf32>
    %141 = arith.mulf %130, %140 : vector<8x128xf32>
    %142 = vector.broadcast %131 : vector<1x128xf32> to vector<8x128xf32>
    %143 = arith.mulf %141, %142 : vector<8x128xf32>
    %144 = arith.truncf %143 : vector<8x128xf32> to vector<8x128xbf16>
    %c0_49 = arith.constant 0 : index
    %c0_50 = arith.constant 0 : index
    %c0_51 = arith.constant 0 : index
    %145 = vector.load %arg8[%c0_49, %c0_50, %c0_51] : memref<1x128x1024xbf16, #tpu.memory_space<vmem>>, vector<1x128x1024xbf16>
    %146 = vector.shape_cast %145 : vector<1x128x1024xbf16> to vector<128x1024xbf16>
    %cst_52 = arith.constant dense<0.000000e+00> : vector<8x1024xf32>
    %147 = tpu.matmul %144, %146, %cst_52 {dimension_numbers = #tpu.dot_dimension_numbers<[1], [0], [0], [1], [0, 0, 1, 1], [], []>} : vector<8x128xbf16>, vector<128x1024xbf16>, vector<8x1024xf32> -> vector<8x1024xf32>
    %148 = vector.extract_strided_slice %147 {offsets = [0, 0], sizes = [8, 512], strides = [1, 1]} : vector<8x1024xf32> to vector<8x512xf32>
    %149 = vector.extract_strided_slice %147 {offsets = [0, 512], sizes = [8, 512], strides = [1, 1]} : vector<8x1024xf32> to vector<8x512xf32>
    %150 = arith.negf %148 : vector<8x512xf32>
    %151 = math.exp %150 : vector<8x512xf32>
    %cst_53 = arith.constant 1.000000e+00 : f32
    %152 = vector.broadcast %cst_53 : f32 to vector<8x512xf32>
    %153 = arith.addf %152, %151 : vector<8x512xf32>
    %154 = arith.divf %152, %153 : vector<8x512xf32>
    %155 = arith.mulf %148, %154 : vector<8x512xf32>
    %156 = arith.mulf %155, %149 : vector<8x512xf32>
    %157 = arith.truncf %156 : vector<8x512xf32> to vector<8x512xbf16>
    %c0_54 = arith.constant 0 : index
    %c0_55 = arith.constant 0 : index
    %c0_56 = arith.constant 0 : index
    %158 = vector.load %arg9[%c0_54, %c0_55, %c0_56] : memref<1x512x128xbf16, #tpu.memory_space<vmem>>, vector<1x512x128xbf16>
    %159 = vector.shape_cast %158 : vector<1x512x128xbf16> to vector<512x128xbf16>
    %cst_57 = arith.constant dense<0.000000e+00> : vector<8x128xf32>
    %160 = tpu.matmul %157, %159, %cst_57 {dimension_numbers = #tpu.dot_dimension_numbers<[1], [0], [0], [1], [0, 0, 1, 1], [], []>} : vector<8x512xbf16>, vector<512x128xbf16>, vector<8x128xf32> -> vector<8x128xf32>
    %161 = arith.addf %130, %160 : vector<8x128xf32>
    %162 = arith.index_cast %arg1 : i32 to index
    %c0_58 = arith.constant 0 : index
    %c0_59 = arith.constant 0 : index
    %163 = vector.load %arg11[%162, %c0_58, %c0_59] : memref<2x8x128xf32, #tpu.memory_space<vmem>>, vector<1x8x128xf32>
    %164 = vector.shape_cast %163 : vector<1x8x128xf32> to vector<8x128xf32>
    %165 = vector.shape_cast %161 : vector<8x128xf32> to vector<1x8x128xf32>
    tpu.vector_store %arg11[%162, %c0_58, %c0_59], %165 {strides = array<i32>} : memref<2x8x128xf32, #tpu.memory_space<vmem>>, vector<1x8x128xf32>,
    %c1_i32 = arith.constant 1 : i32
    %166 = arith.cmpi eq, %arg0, %c1_i32 : i32
    %167 = arith.extui %166 : i1 to i32
    %c0_i32_60 = arith.constant 0 : i32
    %168 = arith.cmpi ne, %167, %c0_i32_60 : i32
    scf.if %168 {
      %169 = vector.extract_strided_slice %4 {offsets = [3, 0], sizes = [1, 128], strides = [1, 1]} : vector<8x128xf32> to vector<1x128xf32>
      %170 = arith.mulf %161, %161 : vector<8x128xf32>
      %cst_61 = arith.constant dense<0.000000e+00> : vector<8xf32>
      %171 = vector.multi_reduction <add>, %170, %cst_61 [1] : vector<8x128xf32> to vector<8xf32>
      %172 = vector.shape_cast %171 : vector<8xf32> to vector<8x1xf32>
      %cst_62 = arith.constant 1.280000e+02 : f32
      %173 = vector.broadcast %cst_62 : f32 to vector<8x1xf32>
      %174 = arith.divf %172, %173 : vector<8x1xf32>
      %cst_63 = arith.constant 9.99999997E-7 : f32
      %175 = vector.broadcast %cst_63 : f32 to vector<8x1xf32>
      %176 = arith.addf %174, %175 : vector<8x1xf32>
      %177 = math.rsqrt %176 : vector<8x1xf32>
      %178 = vector.broadcast %177 : vector<8x1xf32> to vector<8x128xf32>
      %179 = arith.mulf %161, %178 : vector<8x128xf32>
      %180 = vector.broadcast %169 : vector<1x128xf32> to vector<8x128xf32>
      %181 = arith.mulf %179, %180 : vector<8x128xf32>
      %c0_64 = arith.constant 0 : index
      %c0_65 = arith.constant 0 : index
      %c0_66 = arith.constant 0 : index
      %182 = vector.load %arg10[%c0_64, %c0_65, %c0_66] : memref<1x8x128xf32, #tpu.memory_space<vmem>>, vector<1x8x128xf32>
      %183 = vector.shape_cast %182 : vector<1x8x128xf32> to vector<8x128xf32>
      %184 = vector.shape_cast %181 : vector<8x128xf32> to vector<1x8x128xf32>
      tpu.vector_store %arg10[%c0_64, %c0_65, %c0_66], %184 {strides = array<i32>} : memref<1x8x128xf32, #tpu.memory_space<vmem>>, vector<1x8x128xf32>,
    } else {
    }
    return
  }
  func.func @transform_0(%arg0: i32, %arg1: i32) -> (i32, i32, i32) {
    %c0_i32 = arith.constant 0 : i32
    %c0_i32_0 = arith.constant 0 : i32
    %c0_i32_1 = arith.constant 0 : i32
    %c0_i32_2 = arith.constant 0 : i32
    return %c0_i32, %c0_i32_0, %c0_i32_1 : i32, i32, i32
  }
  func.func @transform_1(%arg0: i32, %arg1: i32) -> (i32, i32, i32) {
    %c0_i32 = arith.constant 0 : i32
    %c0_i32_0 = arith.constant 0 : i32
    %c0_i32_1 = arith.constant 0 : i32
    return %arg1, %c0_i32, %c0_i32_0 : i32, i32, i32
  }
  func.func @transform_2(%arg0: i32, %arg1: i32) -> (i32, i32, i32) {
    %c0_i32 = arith.constant 0 : i32
    %c0_i32_0 = arith.constant 0 : i32
    %c0_i32_1 = arith.constant 0 : i32
    return %arg0, %c0_i32, %c0_i32_0 : i32, i32, i32
  }
  func.func @transform_3(%arg0: i32, %arg1: i32) -> (i32, i32, i32) {
    %c0_i32 = arith.constant 0 : i32
    %c0_i32_0 = arith.constant 0 : i32
    %c0_i32_1 = arith.constant 0 : i32
    return %arg0, %c0_i32, %c0_i32_0 : i32, i32, i32
  }
  func.func @transform_4(%arg0: i32, %arg1: i32) -> (i32, i32, i32) {
    %c0_i32 = arith.constant 0 : i32
    %c0_i32_0 = arith.constant 0 : i32
    %c0_i32_1 = arith.constant 0 : i32
    return %arg0, %c0_i32, %c0_i32_0 : i32, i32, i32
  }
  func.func @transform_5(%arg0: i32, %arg1: i32) -> (i32, i32, i32) {
    %c0_i32 = arith.constant 0 : i32
    %c0_i32_0 = arith.constant 0 : i32
    %c0_i32_1 = arith.constant 0 : i32
    return %arg0, %c0_i32, %c0_i32_0 : i32, i32, i32
  }
  func.func @transform_6(%arg0: i32, %arg1: i32) -> (i32, i32, i32) {
    %c0_i32 = arith.constant 0 : i32
    %c0_i32_0 = arith.constant 0 : i32
    %c0_i32_1 = arith.constant 0 : i32
    return %arg0, %c0_i32, %c0_i32_0 : i32, i32, i32
  }
  func.func @transform_7(%arg0: i32, %arg1: i32) -> (i32, i32, i32) {
    %c0_i32 = arith.constant 0 : i32
    %c0_i32_0 = arith.constant 0 : i32
    %c0_i32_1 = arith.constant 0 : i32
    return %arg0, %c0_i32, %c0_i32_0 : i32, i32, i32
  }
  func.func @transform_8(%arg0: i32, %arg1: i32) -> (i32, i32, i32) {
    %c0_i32 = arith.constant 0 : i32
    %c0_i32_0 = arith.constant 0 : i32
    %c0_i32_1 = arith.constant 0 : i32
    return %arg1, %c0_i32, %c0_i32_0 : i32, i32, i32
  }
}

</mosaic_0001>

<llo_original>
// kernel: tpu_custom_call.1
$region0: #{tpu_custom_call.1}
  #allocation0 [shape = 'u32[]', space=smem, size = 0x4, offset = 0x4, fixed_abs, tag = 'smem constant byte address 0x4 - core index']
  #allocation1 [shape = 'u32[144,128]{1,0:T(1,128)}', space=vmem, size = 0x12000, scoped, tag = 'internal scratch']
  #allocation2 [shape = 'f32[2,8,128]{2,1,0:T(8,128)}', space=vmem, size = 0x2000, scoped, tag = 'scratch operand']
  %s0 = inlined_call_operand.hbm [shape: f32[1,8,128], index: 0, kind: input, shape index: {}]
  %s1 = inlined_call_operand.hbm [shape: f32[2,128,128], index: 1, kind: input, shape index: {}]
  %s2 = inlined_call_operand.hbm [shape: f32[2,8,128], index: 2, kind: input, shape index: {}]
  %s3 = inlined_call_operand.hbm [shape: bf16[2,128,128], index: 3, kind: input, shape index: {}]
  %s4 = inlined_call_operand.hbm [shape: bf16[2,128,256], index: 4, kind: input, shape index: {}]
  %s5 = inlined_call_operand.hbm [shape: bf16[2,128,128], index: 5, kind: input, shape index: {}]
  %s6 = inlined_call_operand.hbm [shape: bf16[2,128,1024], index: 6, kind: input, shape index: {}]
  %s7 = inlined_call_operand.hbm [shape: bf16[2,512,128], index: 7, kind: input, shape index: {}]
  %s8 = inlined_call_operand.hbm [shape: f32[2,8,128], index: 8, kind: output, shape index: {}]
  %s9 = sld [smem:[#allocation0]]
  $region105: #{tpu_custom_call.1} parent=0
    _
  %s11 = ssub.s32 1, %s9
  %s12 = scalar_select 0, %s11, %s9
  $region1: #{tpu_custom_call.1} parent=0
    #allocation3 [shape = 'u8[4096]{0}', space=vmem, size = 0x1000, scoped, tag = 'input window, operand 0, single buffered']
    #allocation4 [shape = 's32[2]{0}', space=sflag, size = 0x8, scoped, tag = 'scoped memory for tpu_custom_call.1']
    #allocation5 [shape = 's32[2]{0}', space=sflag, size = 0x8, scoped, tag = 'scoped memory for tpu_custom_call.1']
    #allocation6 [shape = 'u8[131072]{0}', space=vmem, size = 0x20000, scoped, tag = 'input window, operand 1']
    #allocation7 [shape = 's32[2]{0}', space=sflag, size = 0x8, scoped, tag = 'scoped memory for tpu_custom_call.1']
    #allocation8 [shape = 'u8[8192]{0}', space=vmem, size = 0x2000, scoped, tag = 'input window, operand 2']
    #allocation9 [shape = 'u8[65536]{0}', space=vmem, size = 0x10000, scoped, tag = 'input window, operand 3']
    #allocation10 [shape = 's32[2]{0}', space=sflag, size = 0x8, scoped, tag = 'scoped memory for tpu_custom_call.1']
    #allocation11 [shape = 'u8[131072]{0}', space=vmem, size = 0x20000, scoped, tag = 'input window, operand 4']
    #allocation12 [shape = 'u8[65536]{0}', space=vmem, size = 0x10000, scoped, tag = 'input window, operand 5']
    #allocation13 [shape = 's32[2]{0}', space=sflag, size = 0x8, scoped, tag = 'scoped memory for tpu_custom_call.1']
    #allocation14 [shape = 'u8[524288]{0}', space=vmem, size = 0x80000, scoped, tag = 'input window, operand 6']
    #allocation15 [shape = 'u8[262144]{0}', space=vmem, size = 0x40000, scoped, tag = 'input window, operand 7']
    #allocation16 [shape = 's32[2]{0}', space=sflag, size = 0x8, scoped, tag = 'scoped memory for tpu_custom_call.1']
    #allocation17 [shape = 'u8[8192]{0}', space=vmem, size = 0x2000, scoped, tag = 'output window, operand 0']
    %13 = vsyncpa [#allocation4], 0
    %14 = vsyncpa [#allocation7], 0
    %s15 = scalar_lea.sflag [#allocation7], 1
    %16 = vsyncpa %s15, 0
    %17 = vsyncpa [#allocation10], 0
    %s18 = scalar_lea.sflag [#allocation10], 1
    %19 = vsyncpa %s18, 0
    %20 = vsyncpa [#allocation13], 0
    %s21 = scalar_lea.sflag [#allocation13], 1
    %22 = vsyncpa %s21, 0
    %23 = vsyncpa [#allocation16], 0
    %s24 = scalar_lea.sflag [#allocation16], 1
    %25 = vsyncpa %s24, 0
    %26 = vsyncpa [#allocation5], 0
    %s27 = scalar_lea.sflag [#allocation5], 1
    %28 = vsyncpa %s27, 0
    loop: start=0, step=1, limit=6
    $region2: #{tpu_custom_call.1} parent=1 // loop_pre_header
      _
    $region3: #{tpu_custom_call.1} parent=1 // loop_header
      %s30 = sphi 0, %s34
      %p31 = scmp.ge.s32.totalorder %s30, 6
      %s37 = sphi 0, %s49
      %s38 = sphi 0, %s45
      %s39 = sphi 0, %s37
      %s40 = sphi 0, %s38
      %s41 = sphi 0, %s39
      %s42 = sphi 0, %s40
      %s50 = sphi 0, %s50
      %s52 = sphi 0, %s50
      %s53 = sphi 0, %s52
      %s67 = sphi 0, %s53
      %s73 = sphi 0, %s75
      %s76 = sphi 0, %s73
      %s77 = sphi 0, %s76
      %s93 = sphi 0, %s77
      %s99 = sphi 0, %s101
      %s102 = sphi 0, %s99
      %s103 = sphi 0, %s102
      %s119 = sphi 0, %s103
      %s125 = sphi 0, %s127
      %s128 = sphi 0, %s125
      %s129 = sphi 0, %s128
      %s145 = sphi 0, %s129
      %s151 = sphi 0, %s153
      %s154 = sphi 0, %s151
      %s155 = sphi 0, %s154
      %s171 = sphi 0, %s155
      %s177 = sphi 0, %s179
      %s180 = sphi 0, %s177
      %s181 = sphi 0, %s180
      %s197 = sphi 0, %s181
      %s203 = sphi 0, %s205
      %s206 = sphi 0, %s203
      %s207 = sphi 0, %s206
      %s223 = sphi 0, %s207
      %s229 = sphi 0, %s231
      %s232 = sphi 0, %s229
      %s233 = sphi 0, %s232
      %s249 = sphi 0, %s233
      %s255 = sphi 0, %s257
      %s258 = sphi 0, %s255
      %s259 = sphi 0, %s258
      %s275 = sphi 0, %s259
    $region4: #{tpu_custom_call.1} parent=1 // loop_header_branch
      %33 = sbr.rel (%p31) target = $region8
    $region5: #{tpu_custom_call.1} parent=1 // loop_body
      %s35 = ssub.s32 %s30, 1
      %s36 = ssub.s32 %s30, 2
      %s43 = sadd.s32 1, %s38
      %p44 = scmp.ge.s32.totalorder %s43, 2
      %s45 = scalar_select %p44, 0, %s43
      %s46 = sadd.s32 1, %s37
      %s47 = scalar_select %p44, %s46, %s37
      %p48 = scmp.ge.s32.totalorder %s47, 2
      %s49 = scalar_select %p48, 0, %s47
      %s51 = sadd.s32 %s50, 1
      %p54 = scmp.eq.s32.totalorder %s30, 3
      %p55 = scmp.ne.s32.totalorder %s50, %s52
      %p56 = scmp.eq.s32.totalorder %s30, 0
      %p57 = por %p55, %p56
      %p58 = scmp.ne.s32.totalorder %s50, %s52
      %p59 = scmp.eq.s32.totalorder %s35, 3
      %p60 = por %p58, %p59
      %p61 = scmp.ne.s32.totalorder %s52, %s53
      %p62 = scmp.eq.s32.totalorder %s35, 0
      %p63 = por %p61, %p62
      %p64 = scmp.ne.s32.totalorder %s52, %s53
      %p65 = scmp.eq.s32.totalorder %s36, 3
      %p66 = por %p64, %p65
      %p68 = scmp.ne.s32.totalorder %s53, %s67
      %p69 = scmp.eq.s32.totalorder %s36, 0
      %p70 = por %p68, %p69
      %s71 = ssub.s32 %s38, %s45
      %p72 = scmp.eq.s32.totalorder %s71, 0
      %s74 = sadd.s32 %s73, 1
      %s75 = scalar_select %p72, %s73, %s74
      %p78 = pneg %p72
      %p79 = scmp.eq.s32.totalorder %s30, 3
      %p80 = por %p78, %p79
      %p81 = scmp.ne.s32.totalorder %s73, %s76
      %p82 = scmp.eq.s32.totalorder %s30, 0
      %p83 = por %p81, %p82
      %p84 = scmp.ne.s32.totalorder %s73, %s76
      %p85 = scmp.eq.s32.totalorder %s35, 3
      %p86 = por %p84, %p85
      %p87 = scmp.ne.s32.totalorder %s76, %s77
      %p88 = scmp.eq.s32.totalorder %s35, 0
      %p89 = por %p87, %p88
      %p90 = scmp.ne.s32.totalorder %s76, %s77
      %p91 = scmp.eq.s32.totalorder %s36, 3
      %p92 = por %p90, %p91
      %p94 = scmp.ne.s32.totalorder %s77, %s93
      %p95 = scmp.eq.s32.totalorder %s36, 0
      %p96 = por %p94, %p95
      %s97 = ssub.s32 %s37, %s49
      %p98 = scmp.eq.s32.totalorder %s97, 0
      %s100 = sadd.s32 %s99, 1
      %s101 = scalar_select %p98, %s99, %s100
      %p104 = pneg %p98
      %p105 = scmp.eq.s32.totalorder %s30, 3
      %p106 = por %p104, %p105
      %p107 = scmp.ne.s32.totalorder %s99, %s102
      %p108 = scmp.eq.s32.totalorder %s30, 0
      %p109 = por %p107, %p108
      %p110 = scmp.ne.s32.totalorder %s99, %s102
      %p111 = scmp.eq.s32.totalorder %s35, 3
      %p112 = por %p110, %p111
      %p113 = scmp.ne.s32.totalorder %s102, %s103
      %p114 = scmp.eq.s32.totalorder %s35, 0
      %p115 = por %p113, %p114
      %p116 = scmp.ne.s32.totalorder %s102, %s103
      %p117 = scmp.eq.s32.totalorder %s36, 3
      %p118 = por %p116, %p117
      %p120 = scmp.ne.s32.totalorder %s103, %s119
      %p121 = scmp.eq.s32.totalorder %s36, 0
      %p122 = por %p120, %p121
      %s123 = ssub.s32 %s37, %s49
      %p124 = scmp.eq.s32.totalorder %s123, 0
      %s126 = sadd.s32 %s125, 1
      %s127 = scalar_select %p124, %s125, %s126
      %p130 = pneg %p124
      %p131 = scmp.eq.s32.totalorder %s30, 3
      %p132 = por %p130, %p131
      %p133 = scmp.ne.s32.totalorder %s125, %s128
      %p134 = scmp.eq.s32.totalorder %s30, 0
      %p135 = por %p133, %p134
      %p136 = scmp.ne.s32.totalorder %s125, %s128
      %p137 = scmp.eq.s32.totalorder %s35, 3
      %p138 = por %p136, %p137
      %p139 = scmp.ne.s32.totalorder %s128, %s129
      %p140 = scmp.eq.s32.totalorder %s35, 0
      %p141 = por %p139, %p140
      %p142 = scmp.ne.s32.totalorder %s128, %s129
      %p143 = scmp.eq.s32.totalorder %s36, 3
      %p144 = por %p142, %p143
      %p146 = scmp.ne.s32.totalorder %s129, %s145
      %p147 = scmp.eq.s32.totalorder %s36, 0
      %p148 = por %p146, %p147
      %s149 = ssub.s32 %s37, %s49
      %p150 = scmp.eq.s32.totalorder %s149, 0
      %s152 = sadd.s32 %s151, 1
      %s153 = scalar_select %p150, %s151, %s152
      %p156 = pneg %p150
      %p157 = scmp.eq.s32.totalorder %s30, 3
      %p158 = por %p156, %p157
      %p159 = scmp.ne.s32.totalorder %s151, %s154
      %p160 = scmp.eq.s32.totalorder %s30, 0
      %p161 = por %p159, %p160
      %p162 = scmp.ne.s32.totalorder %s151, %s154
      %p163 = scmp.eq.s32.totalorder %s35, 3
      %p164 = por %p162, %p163
      %p165 = scmp.ne.s32.totalorder %s154, %s155
      %p166 = scmp.eq.s32.totalorder %s35, 0
      %p167 = por %p165, %p166
      %p168 = scmp.ne.s32.totalorder %s154, %s155
      %p169 = scmp.eq.s32.totalorder %s36, 3
      %p170 = por %p168, %p169
      %p172 = scmp.ne.s32.totalorder %s155, %s171
      %p173 = scmp.eq.s32.totalorder %s36, 0
      %p174 = por %p172, %p173
      %s175 = ssub.s32 %s37, %s49
      %p176 = scmp.eq.s32.totalorder %s175, 0
      %s178 = sadd.s32 %s177, 1
      %s179 = scalar_select %p176, %s177, %s178
      %p182 = pneg %p176
      %p183 = scmp.eq.s32.totalorder %s30, 3
      %p184 = por %p182, %p183
      %p185 = scmp.ne.s32.totalorder %s177, %s180
      %p186 = scmp.eq.s32.totalorder %s30, 0
      %p187 = por %p185, %p186
      %p188 = scmp.ne.s32.totalorder %s177, %s180
      %p189 = scmp.eq.s32.totalorder %s35, 3
      %p190 = por %p188, %p189
      %p191 = scmp.ne.s32.totalorder %s180, %s181
      %p192 = scmp.eq.s32.totalorder %s35, 0
      %p193 = por %p191, %p192
      %p194 = scmp.ne.s32.totalorder %s180, %s181
      %p195 = scmp.eq.s32.totalorder %s36, 3
      %p196 = por %p194, %p195
      %p198 = scmp.ne.s32.totalorder %s181, %s197
      %p199 = scmp.eq.s32.totalorder %s36, 0
      %p200 = por %p198, %p199
      %s201 = ssub.s32 %s37, %s49
      %p202 = scmp.eq.s32.totalorder %s201, 0
      %s204 = sadd.s32 %s203, 1
      %s205 = scalar_select %p202, %s203, %s204
      %p208 = pneg %p202
      %p209 = scmp.eq.s32.totalorder %s30, 3
      %p210 = por %p208, %p209
      %p211 = scmp.ne.s32.totalorder %s203, %s206
      %p212 = scmp.eq.s32.totalorder %s30, 0
      %p213 = por %p211, %p212
      %p214 = scmp.ne.s32.totalorder %s203, %s206
      %p215 = scmp.eq.s32.totalorder %s35, 3
      %p216 = por %p214, %p215
      %p217 = scmp.ne.s32.totalorder %s206, %s207
      %p218 = scmp.eq.s32.totalorder %s35, 0
      %p219 = por %p217, %p218
      %p220 = scmp.ne.s32.totalorder %s206, %s207
      %p221 = scmp.eq.s32.totalorder %s36, 3
      %p222 = por %p220, %p221
      %p224 = scmp.ne.s32.totalorder %s207, %s223
      %p225 = scmp.eq.s32.totalorder %s36, 0
      %p226 = por %p224, %p225
      %s227 = ssub.s32 %s37, %s49
      %p228 = scmp.eq.s32.totalorder %s227, 0
      %s230 = sadd.s32 %s229, 1
      %s231 = scalar_select %p228, %s229, %s230
      %p234 = pneg %p228
      %p235 = scmp.eq.s32.totalorder %s30, 3
      %p236 = por %p234, %p235
      %p237 = scmp.ne.s32.totalorder %s229, %s232
      %p238 = scmp.eq.s32.totalorder %s30, 0
      %p239 = por %p237, %p238
      %p240 = scmp.ne.s32.totalorder %s229, %s232
      %p241 = scmp.eq.s32.totalorder %s35, 3
      %p242 = por %p240, %p241
      %p243 = scmp.ne.s32.totalorder %s232, %s233
      %p244 = scmp.eq.s32.totalorder %s35, 0
      %p245 = por %p243, %p244
      %p246 = scmp.ne.s32.totalorder %s232, %s233
      %p247 = scmp.eq.s32.totalorder %s36, 3
      %p248 = por %p246, %p247
      %p250 = scmp.ne.s32.totalorder %s233, %s249
      %p251 = scmp.eq.s32.totalorder %s36, 0
      %p252 = por %p250, %p251
      %s253 = ssub.s32 %s38, %s45
      %p254 = scmp.eq.s32.totalorder %s253, 0
      %s256 = sadd.s32 %s255, 1
      %s257 = scalar_select %p254, %s255, %s256
      %p260 = pneg %p254
      %p261 = scmp.eq.s32.totalorder %s30, 3
      %p262 = por %p260, %p261
      %p263 = scmp.ne.s32.totalorder %s255, %s258
      %p264 = scmp.eq.s32.totalorder %s30, 0
      %p265 = por %p263, %p264
      %p266 = scmp.ne.s32.totalorder %s255, %s258
      %p267 = scmp.eq.s32.totalorder %s35, 3
      %p268 = por %p266, %p267
      %p269 = scmp.ne.s32.totalorder %s258, %s259
      %p270 = scmp.eq.s32.totalorder %s35, 0
      %p271 = por %p269, %p270
      %p272 = scmp.ne.s32.totalorder %s258, %s259
      %p273 = scmp.eq.s32.totalorder %s36, 3
      %p274 = por %p272, %p273
      %p276 = scmp.ne.s32.totalorder %s259, %s275
      %p277 = scmp.eq.s32.totalorder %s36, 0
      %p278 = por %p276, %p277
      %p279 = scmp.le.s32.totalorder 1, %s30
      %p280 = scmp.lt.s32.totalorder %s30, 5
      %p281 = pnand %p279, %p280
      %p282 = pneg %p281
      // Predicated region
      $region9: #{tpu_custom_call.1} parent=5 // pred_check
        _
      $region10: #{tpu_custom_call.1} parent=5 // pred_check_branch
        %284 = sbr.rel (%p281) target = $region12
      $region11: #{tpu_custom_call.1} parent=5 // pred_region
        %s285 = ssub.s32 %s30, 1
        // Predicated region
        $region13: #{tpu_custom_call.1} parent=11 // pred_check
          %p286 = pneg %p63
        $region14: #{tpu_custom_call.1} parent=11 // pred_check_branch
          %288 = sbr.rel (%p286) target = $region16
        $region15: #{tpu_custom_call.1} parent=11 // pred_region
          %s290 = ssub.s32 128, 128
          %291 = vsyncadd [#allocation4], %s290
          %s293 = sshll.u32 [#allocation3], 4
          %s294 = int_to_ptr.vmem [resolvable:$true] %s293
          %296 = dma.hbm_to_vmem [thread:$0]  %s0, 128, %s294, [#allocation4]
        $region16: #{tpu_custom_call.1} parent=11 // pred_fallthru
          _
      $region12: #{tpu_custom_call.1} parent=5 // pred_fallthru
        _
      %p297 = scmp.lt.s32.totalorder %s30, 4
      // Predicated region
      $region17: #{tpu_custom_call.1} parent=5 // pred_check
        %p298 = pneg %p297
      $region18: #{tpu_custom_call.1} parent=5 // pred_check_branch
        %300 = sbr.rel (%p298) target = $region20
      $region19: #{tpu_custom_call.1} parent=5 // pred_region
        // Predicated region
        $region21: #{tpu_custom_call.1} parent=19 // pred_check
          %p301 = pneg %p83
        $region22: #{tpu_custom_call.1} parent=19 // pred_check_branch
          %303 = sbr.rel (%p301) target = $region24
        $region23: #{tpu_custom_call.1} parent=19 // pred_region
          %s304 = sand.u32 %s30, 1
          %s305 = scalar_lea.sflag [#allocation7], %s304
          %s306 = sand.u32 %s73, 1
          %s307 = smul.addr %s306, 128
          %s308 = scalar_lea.vmem [#allocation6], %s307
          %s310 = ssub.s32 2048, 2048
          %311 = vsyncadd %s305, %s310
          %s312 = smul.addr %s38, 16
          %s313 = smul.addr %s312, 128
          %s314 = scalar_lea.hbm %s1, %s313
          %s315 = sshll.u32 %s308, 4
          %s316 = int_to_ptr.vmem [resolvable:$true] %s315
          %321 = dma.hbm_to_vmem [thread:$0]  %s314, 2048, %s316, %s305, 128, 128, 8
        $region24: #{tpu_custom_call.1} parent=19 // pred_fallthru
          _
        // Predicated region
        $region25: #{tpu_custom_call.1} parent=19 // pred_check
          %p322 = pneg %p109
        $region26: #{tpu_custom_call.1} parent=19 // pred_check_branch
          %324 = sbr.rel (%p322) target = $region28
        $region27: #{tpu_custom_call.1} parent=19 // pred_region
          %s325 = sand.u32 %s30, 1
          %s326 = scalar_lea.sflag [#allocation7], %s325
          %s327 = sand.u32 %s99, 1
          %s328 = smul.addr %s327, 8
          %s329 = scalar_lea.vmem [#allocation8], %s328
          %s331 = ssub.s32 128, 128
          %332 = vsyncadd %s326, %s331
          %s333 = smul.addr %s37, 128
          %s334 = scalar_lea.hbm %s2, %s333
          %s336 = sshll.u32 %s329, 4
          %s337 = int_to_ptr.vmem [resolvable:$true] %s336
          %339 = dma.hbm_to_vmem [thread:$0]  %s334, 128, %s337, %s326
        $region28: #{tpu_custom_call.1} parent=19 // pred_fallthru
          _
        // Predicated region
        $region29: #{tpu_custom_call.1} parent=19 // pred_check
          %p340 = pneg %p135
        $region30: #{tpu_custom_call.1} parent=19 // pred_check_branch
          %342 = sbr.rel (%p340) target = $region32
        $region31: #{tpu_custom_call.1} parent=19 // pred_region
          %s343 = sand.u32 %s30, 1
          %s344 = scalar_lea.sflag [#allocation10], %s343
          %s345 = sand.u32 %s125, 1
          %s346 = smul.addr %s345, 64
          %s347 = scalar_lea.vmem [#allocation9], %s346
          %s349 = ssub.s32 1024, 1024
          %350 = vsyncadd %s344, %s349
          %s351 = smul.addr %s37, 16
          %s352 = smul.addr %s351, 64
          %s353 = scalar_lea.hbm %s3, %s352
          %s354 = sshll.u32 %s347, 4
          %s355 = int_to_ptr.vmem [resolvable:$true] %s354
          %360 = dma.hbm_to_vmem [thread:$0]  %s353, 1024, %s355, %s344, 64, 64, 4
        $region32: #{tpu_custom_call.1} parent=19 // pred_fallthru
          _
        // Predicated region
        $region33: #{tpu_custom_call.1} parent=19 // pred_check
          %p361 = pneg %p161
        $region34: #{tpu_custom_call.1} parent=19 // pred_check_branch
          %363 = sbr.rel (%p361) target = $region36
        $region35: #{tpu_custom_call.1} parent=19 // pred_region
          %s364 = sand.u32 %s30, 1
          %s365 = scalar_lea.sflag [#allocation10], %s364
          %s366 = sand.u32 %s151, 1
          %s367 = smul.addr %s366, 128
          %s368 = scalar_lea.vmem [#allocation11], %s367
          %s370 = ssub.s32 2048, 2048
          %371 = vsyncadd %s365, %s370
          %s372 = smul.addr %s37, 32
          %s373 = smul.addr %s372, 64
          %s374 = scalar_lea.hbm %s4, %s373
          %s375 = sshll.u32 %s368, 4
          %s376 = int_to_ptr.vmem [resolvable:$true] %s375
          %381 = dma.hbm_to_vmem [thread:$0]  %s374, 2048, %s376, %s365, 128, 128, 8
        $region36: #{tpu_custom_call.1} parent=19 // pred_fallthru
          _
        // Predicated region
        $region37: #{tpu_custom_call.1} parent=19 // pred_check
          %p382 = pneg %p187
        $region38: #{tpu_custom_call.1} parent=19 // pred_check_branch
          %384 = sbr.rel (%p382) target = $region40
        $region39: #{tpu_custom_call.1} parent=19 // pred_region
          %s385 = sand.u32 %s30, 1
          %s386 = scalar_lea.sflag [#allocation13], %s385
          %s387 = sand.u32 %s177, 1
          %s388 = smul.addr %s387, 64
          %s389 = scalar_lea.vmem [#allocation12], %s388
          %s391 = ssub.s32 1024, 1024
          %392 = vsyncadd %s386, %s391
          %s393 = smul.addr %s37, 16
          %s394 = smul.addr %s393, 64
          %s395 = scalar_lea.hbm %s5, %s394
          %s396 = sshll.u32 %s389, 4
          %s397 = int_to_ptr.vmem [resolvable:$true] %s396
          %402 = dma.hbm_to_vmem [thread:$0]  %s395, 1024, %s397, %s386, 64, 64, 4
        $region40: #{tpu_custom_call.1} parent=19 // pred_fallthru
          _
        // Predicated region
        $region41: #{tpu_custom_call.1} parent=19 // pred_check
          %p403 = pneg %p213
        $region42: #{tpu_custom_call.1} parent=19 // pred_check_branch
          %405 = sbr.rel (%p403) target = $region44
        $region43: #{tpu_custom_call.1} parent=19 // pred_region
          %s406 = sand.u32 %s30, 1
          %s407 = scalar_lea.sflag [#allocation13], %s406
          %s408 = sand.u32 %s203, 1
          %s409 = smul.addr %s408, 512
          %s410 = scalar_lea.vmem [#allocation14], %s409
          %s412 = ssub.s32 8192, 8192
          %413 = vsyncadd %s407, %s412
          %s414 = smul.addr %s37, 128
          %s415 = smul.addr %s414, 64
          %s416 = scalar_lea.hbm %s6, %s415
          %s417 = sshll.u32 %s410, 4
          %s418 = int_to_ptr.vmem [resolvable:$true] %s417
          %423 = dma.hbm_to_vmem [thread:$0]  %s416, 8192, %s418, %s407, 512, 512, 32
        $region44: #{tpu_custom_call.1} parent=19 // pred_fallthru
          _
        // Predicated region
        $region45: #{tpu_custom_call.1} parent=19 // pred_check
          %p424 = pneg %p239
        $region46: #{tpu_custom_call.1} parent=19 // pred_check_branch
          %426 = sbr.rel (%p424) target = $region48
        $region47: #{tpu_custom_call.1} parent=19 // pred_region
          %s427 = sand.u32 %s229, 1
          %s428 = scalar_lea.sflag [#allocation16], %s427
          %s429 = sand.u32 %s229, 1
          %s430 = smul.addr %s429, 256
          %s431 = scalar_lea.vmem [#allocation15], %s430
          %s433 = ssub.s32 4096, 4096
          %434 = vsyncadd %s428, %s433
          %s435 = smul.addr %s37, 64
          %s436 = smul.addr %s435, 64
          %s437 = scalar_lea.hbm %s7, %s436
          %s438 = sshll.u32 %s431, 4
          %s439 = int_to_ptr.vmem [resolvable:$true] %s438
          %444 = dma.hbm_to_vmem [thread:$0]  %s437, 4096, %s439, %s428, 64, 64, 4
        $region48: #{tpu_custom_call.1} parent=19 // pred_fallthru
          _
      $region20: #{tpu_custom_call.1} parent=5 // pred_fallthru
        _
      %p445 = scmp.le.s32.totalorder 1, %s30
      %p446 = scmp.lt.s32.totalorder %s30, 5
      %p447 = pnand %p445, %p446
      %p448 = pneg %p447
      // Predicated region
      $region49: #{tpu_custom_call.1} parent=5 // pred_check
        _
      $region50: #{tpu_custom_call.1} parent=5 // pred_check_branch
        %450 = sbr.rel (%p447) target = $region52
      $region51: #{tpu_custom_call.1} parent=5 // pred_region
        %s451 = ssub.s32 %s30, 1
        // Predicated region
        $region53: #{tpu_custom_call.1} parent=51 // pred_check
          %p452 = pneg %p63
        $region54: #{tpu_custom_call.1} parent=51 // pred_check_branch
          %454 = sbr.rel (%p452) target = $region56
        $region55: #{tpu_custom_call.1} parent=51 // pred_region
          %455 = dma.done [#allocation4], 128
        $region56: #{tpu_custom_call.1} parent=51 // pred_fallthru
          _
        %s456 = sand.u32 %s35, 1
        %s457 = scalar_lea.sflag [#allocation7], %s456
        %s458 = sand.u32 %s76, 1
        %s459 = smul.addr %s458, 128
        %s460 = scalar_lea.vmem [#allocation6], %s459
        // Predicated region
        $region57: #{tpu_custom_call.1} parent=51 // pred_check
          %p461 = pneg %p89
        $region58: #{tpu_custom_call.1} parent=51 // pred_check_branch
          %463 = sbr.rel (%p461) target = $region60
        $region59: #{tpu_custom_call.1} parent=51 // pred_region
          %464 = dma.done %s457, 2048
        $region60: #{tpu_custom_call.1} parent=51 // pred_fallthru
          _
        %s465 = sand.u32 %s35, 1
        %s466 = scalar_lea.sflag [#allocation7], %s465
        %s467 = sand.u32 %s102, 1
        %s468 = smul.addr %s467, 8
        %s469 = scalar_lea.vmem [#allocation8], %s468
        // Predicated region
        $region61: #{tpu_custom_call.1} parent=51 // pred_check
          %p470 = pneg %p115
        $region62: #{tpu_custom_call.1} parent=51 // pred_check_branch
          %472 = sbr.rel (%p470) target = $region64
        $region63: #{tpu_custom_call.1} parent=51 // pred_region
          %473 = dma.done %s466, 128
        $region64: #{tpu_custom_call.1} parent=51 // pred_fallthru
          _
        %s474 = sand.u32 %s35, 1
        %s475 = scalar_lea.sflag [#allocation10], %s474
        %s476 = sand.u32 %s128, 1
        %s477 = smul.addr %s476, 64
        %s478 = scalar_lea.vmem [#allocation9], %s477
        // Predicated region
        $region65: #{tpu_custom_call.1} parent=51 // pred_check
          %p479 = pneg %p141
        $region66: #{tpu_custom_call.1} parent=51 // pred_check_branch
          %481 = sbr.rel (%p479) target = $region68
        $region67: #{tpu_custom_call.1} parent=51 // pred_region
          %482 = dma.done %s475, 1024
        $region68: #{tpu_custom_call.1} parent=51 // pred_fallthru
          _
        %s483 = sand.u32 %s35, 1
        %s484 = scalar_lea.sflag [#allocation10], %s483
        %s485 = sand.u32 %s154, 1
        %s486 = smul.addr %s485, 128
        %s487 = scalar_lea.vmem [#allocation11], %s486
        // Predicated region
        $region69: #{tpu_custom_call.1} parent=51 // pred_check
          %p488 = pneg %p167
        $region70: #{tpu_custom_call.1} parent=51 // pred_check_branch
          %490 = sbr.rel (%p488) target = $region72
        $region71: #{tpu_custom_call.1} parent=51 // pred_region
          %491 = dma.done %s484, 2048
        $region72: #{tpu_custom_call.1} parent=51 // pred_fallthru
          _
        %s492 = sand.u32 %s35, 1
        %s493 = scalar_lea.sflag [#allocation13], %s492
        %s494 = sand.u32 %s180, 1
        %s495 = smul.addr %s494, 64
        %s496 = scalar_lea.vmem [#allocation12], %s495
        // Predicated region
        $region73: #{tpu_custom_call.1} parent=51 // pred_check
          %p497 = pneg %p193
        $region74: #{tpu_custom_call.1} parent=51 // pred_check_branch
          %499 = sbr.rel (%p497) target = $region76
        $region75: #{tpu_custom_call.1} parent=51 // pred_region
          %500 = dma.done %s493, 1024
        $region76: #{tpu_custom_call.1} parent=51 // pred_fallthru
          _
        %s501 = sand.u32 %s35, 1
        %s502 = scalar_lea.sflag [#allocation13], %s501
        %s503 = sand.u32 %s206, 1
        %s504 = smul.addr %s503, 512
        %s505 = scalar_lea.vmem [#allocation14], %s504
        // Predicated region
        $region77: #{tpu_custom_call.1} parent=51 // pred_check
          %p506 = pneg %p219
        $region78: #{tpu_custom_call.1} parent=51 // pred_check_branch
          %508 = sbr.rel (%p506) target = $region80
        $region79: #{tpu_custom_call.1} parent=51 // pred_region
          %509 = dma.done %s502, 8192
        $region80: #{tpu_custom_call.1} parent=51 // pred_fallthru
          _
        %s510 = sand.u32 %s232, 1
        %s511 = scalar_lea.sflag [#allocation16], %s510
        %s512 = sand.u32 %s232, 1
        %s513 = smul.addr %s512, 256
        %s514 = scalar_lea.vmem [#allocation15], %s513
        // Predicated region
        $region81: #{tpu_custom_call.1} parent=51 // pred_check
          %p515 = pneg %p245
        $region82: #{tpu_custom_call.1} parent=51 // pred_check_branch
          %517 = sbr.rel (%p515) target = $region84
        $region83: #{tpu_custom_call.1} parent=51 // pred_region
          %518 = dma.done %s511, 4096
        $region84: #{tpu_custom_call.1} parent=51 // pred_fallthru
          _
        %p519 = pneg %p63
        %p520 = pneg %p60
        %s521 = sand.u32 %s35, 1
        %s522 = scalar_lea.sflag [#allocation7], %s521
        %s523 = sand.u32 %s76, 1
        %s524 = smul.addr %s523, 128
        %s525 = scalar_lea.vmem [#allocation6], %s524
        %p526 = pneg %p89
        %p527 = pneg %p86
        %s528 = sand.u32 %s35, 1
        %s529 = scalar_lea.sflag [#allocation7], %s528
        %s530 = sand.u32 %s102, 1
        %s531 = smul.addr %s530, 8
        %s532 = scalar_lea.vmem [#allocation8], %s531
        %p533 = pneg %p115
        %p534 = pneg %p112
        %s535 = sand.u32 %s35, 1
        %s536 = scalar_lea.sflag [#allocation10], %s535
        %s537 = sand.u32 %s128, 1
        %s538 = smul.addr %s537, 64
        %s539 = scalar_lea.vmem [#allocation9], %s538
        %p540 = pneg %p141
        %p541 = pneg %p138
        %s542 = sand.u32 %s35, 1
        %s543 = scalar_lea.sflag [#allocation10], %s542
        %s544 = sand.u32 %s154, 1
        %s545 = smul.addr %s544, 128
        %s546 = scalar_lea.vmem [#allocation11], %s545
        %p547 = pneg %p167
        %p548 = pneg %p164
        %s549 = sand.u32 %s35, 1
        %s550 = scalar_lea.sflag [#allocation13], %s549
        %s551 = sand.u32 %s180, 1
        %s552 = smul.addr %s551, 64
        %s553 = scalar_lea.vmem [#allocation12], %s552
        %p554 = pneg %p193
        %p555 = pneg %p190
        %s556 = sand.u32 %s35, 1
        %s557 = scalar_lea.sflag [#allocation13], %s556
        %s558 = sand.u32 %s206, 1
        %s559 = smul.addr %s558, 512
        %s560 = scalar_lea.vmem [#allocation14], %s559
        %p561 = pneg %p219
        %p562 = pneg %p216
        %s563 = sand.u32 %s232, 1
        %s564 = scalar_lea.sflag [#allocation16], %s563
        %s565 = sand.u32 %s232, 1
        %s566 = smul.addr %s565, 256
        %s567 = scalar_lea.vmem [#allocation15], %s566
        %p568 = pneg %p245
        %p569 = pneg %p242
        %p570 = pneg %p271
        %p571 = pneg %p268
        %s572 = sand.u32 %s258, 1
        %s573 = scalar_lea.sflag [#allocation5], %s572
        %s574 = sand.u32 %s258, 1
        %s575 = smul.addr %s574, 8
        %s576 = scalar_lea.vmem [#allocation17], %s575
        %p578 = scmp.eq.s32.totalorder %s39, 0
        // Predicated region
        $region85: #{tpu_custom_call.1} parent=51 // pred_check
          %p579 = pneg %p578
        $region86: #{tpu_custom_call.1} parent=51 // pred_check_branch
          %581 = sbr.rel (%p579) target = $region88
        $region87: #{tpu_custom_call.1} parent=51 // pred_region
          %v582 = vld [vmem:[#allocation3] sm:$0xff]
          %s583 = smul.u32 %s40, 8
          %s584 = scalar_lea.vmem [#allocation2], %s583
          %585 = vst [vmem:[%s584] sm:$0xff] %v582
        $region88: #{tpu_custom_call.1} parent=51 // pred_fallthru
          _
        %v586 = vld [vmem:[%s469] sm:$0xff]
        %s587 = smul.u32 %s40, 8
        %s588 = scalar_lea.vmem [#allocation2], %s587
        %v589 = vld [vmem:[%s588] sm:$0xff]
        %v590 = vld [vmem:[%s460] sm:$0xff]
        %v591 = vld [vmem:[%s460 + $0x8] sm:$0xff]
        %v592 = vld [vmem:[%s460 + $0x10] sm:$0xff]
        %v593 = vld [vmem:[%s460 + $0x18] sm:$0xff]
        %v594 = vld [vmem:[%s460 + $0x20] sm:$0xff]
        %v595 = vld [vmem:[%s460 + $0x28] sm:$0xff]
        %v596 = vld [vmem:[%s460 + $0x30] sm:$0xff]
        %v597 = vld [vmem:[%s460 + $0x38] sm:$0xff]
        %v598 = vld [vmem:[%s460 + $0x40] sm:$0xff]
        %v599 = vld [vmem:[%s460 + $0x48] sm:$0xff]
        %v600 = vld [vmem:[%s460 + $0x50] sm:$0xff]
        %v601 = vld [vmem:[%s460 + $0x58] sm:$0xff]
        %v602 = vld [vmem:[%s460 + $0x60] sm:$0xff]
        %v603 = vld [vmem:[%s460 + $0x68] sm:$0xff]
        %v604 = vld [vmem:[%s460 + $0x70] sm:$0xff]
        %v605 = vld [vmem:[%s460 + $0x78] sm:$0xff]
        %v606 = vmul.f32 %v589, %v589
        %607 = vadd.xlane.f32.xlu0 %v606
        %v608 = vpop.xlane.xlu0 %607
        %v609 = vrcp.pop 128.0
        %v610 = vmul.f32 %v608, %v609
        %v611 = vadd.f32 %v610, 1e-06
        %v612 = vrsqrt.pop %v611
        %v613 = vmul.f32 %v589, %v612
        %v614 = vlaneseq
        %v615 = vshrl.u32 %v614, 7
        %v616 = vsub.s32 1, %v615
        %v617 = vrot.slane %v586, %v616
        %v618 = vmul.f32 %v613, %v617
        %v619 = vpack.c.bf16 %v618, %v618
        %v620 = vmul.f32 %v590, %v590
        %v621 = vmul.f32 %v591, %v591
        %v622 = vmul.f32 %v592, %v592
        %v623 = vmul.f32 %v593, %v593
        %v624 = vmul.f32 %v594, %v594
        %v625 = vmul.f32 %v595, %v595
        %v626 = vmul.f32 %v596, %v596
        %v627 = vmul.f32 %v597, %v597
        %v628 = vmul.f32 %v598, %v598
        %v629 = vmul.f32 %v599, %v599
        %v630 = vmul.f32 %v600, %v600
        %v631 = vmul.f32 %v601, %v601
        %v632 = vmul.f32 %v602, %v602
        %v633 = vmul.f32 %v603, %v603
        %v634 = vmul.f32 %v604, %v604
        %v635 = vmul.f32 %v605, %v605
        %636 = vadd.xlane.f32.xlu0 %v620
        %v637 = vpop.xlane.xlu0 %636
        %638 = vadd.xlane.f32.xlu0 %v621
        %v639 = vpop.xlane.xlu0 %638
        %640 = vadd.xlane.f32.xlu0 %v622
        %v641 = vpop.xlane.xlu0 %640
        %642 = vadd.xlane.f32.xlu0 %v623
        %v643 = vpop.xlane.xlu0 %642
        %644 = vadd.xlane.f32.xlu0 %v624
        %v645 = vpop.xlane.xlu0 %644
        %646 = vadd.xlane.f32.xlu0 %v625
        %v647 = vpop.xlane.xlu0 %646
        %648 = vadd.xlane.f32.xlu0 %v626
        %v649 = vpop.xlane.xlu0 %648
        %650 = vadd.xlane.f32.xlu0 %v627
        %v651 = vpop.xlane.xlu0 %650
        %652 = vadd.xlane.f32.xlu0 %v628
        %v653 = vpop.xlane.xlu0 %652
        %654 = vadd.xlane.f32.xlu0 %v629
        %v655 = vpop.xlane.xlu0 %654
        %656 = vadd.xlane.f32.xlu0 %v630
        %v657 = vpop.xlane.xlu0 %656
        %658 = vadd.xlane.f32.xlu0 %v631
        %v659 = vpop.xlane.xlu0 %658
        %660 = vadd.xlane.f32.xlu0 %v632
        %v661 = vpop.xlane.xlu0 %660
        %662 = vadd.xlane.f32.xlu0 %v633
        %v663 = vpop.xlane.xlu0 %662
        %664 = vadd.xlane.f32.xlu0 %v634
        %v665 = vpop.xlane.xlu0 %664
        %666 = vadd.xlane.f32.xlu0 %v635
        %v667 = vpop.xlane.xlu0 %666
        %v668 = vmul.f32 %v637, %v609
        %v669 = vmul.f32 %v639, %v609
        %v670 = vmul.f32 %v641, %v609
        %v671 = vmul.f32 %v643, %v609
        %v672 = vmul.f32 %v645, %v609
        %v673 = vmul.f32 %v647, %v609
        %v674 = vmul.f32 %v649, %v609
        %v675 = vmul.f32 %v651, %v609
        %v676 = vmul.f32 %v653, %v609
        %v677 = vmul.f32 %v655, %v609
        %v678 = vmul.f32 %v657, %v609
        %v679 = vmul.f32 %v659, %v609
        %v680 = vmul.f32 %v661, %v609
        %v681 = vmul.f32 %v663, %v609
        %v682 = vmul.f32 %v665, %v609
        %v683 = vmul.f32 %v667, %v609
        %v684 = vadd.f32 %v668, 1e-06
        %v685 = vadd.f32 %v669, 1e-06
        %v686 = vadd.f32 %v670, 1e-06
        %v687 = vadd.f32 %v671, 1e-06
        %v688 = vadd.f32 %v672, 1e-06
        %v689 = vadd.f32 %v673, 1e-06
        %v690 = vadd.f32 %v674, 1e-06
        %v691 = vadd.f32 %v675, 1e-06
        %v692 = vadd.f32 %v676, 1e-06
        %v693 = vadd.f32 %v677, 1e-06
        %v694 = vadd.f32 %v678, 1e-06
        %v695 = vadd.f32 %v679, 1e-06
        %v696 = vadd.f32 %v680, 1e-06
        %v697 = vadd.f32 %v681, 1e-06
        %v698 = vadd.f32 %v682, 1e-06
        %v699 = vadd.f32 %v683, 1e-06
        %v700 = vrsqrt.pop %v684
        %v701 = vrsqrt.pop %v685
        %v702 = vrsqrt.pop %v686
        %v703 = vrsqrt.pop %v687
        %v704 = vrsqrt.pop %v688
        %v705 = vrsqrt.pop %v689
        %v706 = vrsqrt.pop %v690
        %v707 = vrsqrt.pop %v691
        %v708 = vrsqrt.pop %v692
        %v709 = vrsqrt.pop %v693
        %v710 = vrsqrt.pop %v694
        %v711 = vrsqrt.pop %v695
        %v712 = vrsqrt.pop %v696
        %v713 = vrsqrt.pop %v697
        %v714 = vrsqrt.pop %v698
        %v715 = vrsqrt.pop %v699
        %v716 = vmul.f32 %v590, %v700
        %v717 = vmul.f32 %v591, %v701
        %v718 = vmul.f32 %v592, %v702
        %v719 = vmul.f32 %v593, %v703
        %v720 = vmul.f32 %v594, %v704
        %v721 = vmul.f32 %v595, %v705
        %v722 = vmul.f32 %v596, %v706
        %v723 = vmul.f32 %v597, %v707
        %v724 = vmul.f32 %v598, %v708
        %v725 = vmul.f32 %v599, %v709
        %v726 = vmul.f32 %v600, %v710
        %v727 = vmul.f32 %v601, %v711
        %v728 = vmul.f32 %v602, %v712
        %v729 = vmul.f32 %v603, %v713
        %v730 = vmul.f32 %v604, %v714
        %v731 = vmul.f32 %v605, %v715
        %v732 = vlaneseq
        %v733 = vshrl.u32 %v732, 7
        %v734 = vsub.s32 0, %v733
        %v735 = vrot.slane %v586, %v734
        %v736 = vmul.f32 %v716, %v735
        %v737 = vmul.f32 %v717, %v735
        %v738 = vmul.f32 %v718, %v735
        %v739 = vmul.f32 %v719, %v735
        %v740 = vmul.f32 %v720, %v735
        %v741 = vmul.f32 %v721, %v735
        %v742 = vmul.f32 %v722, %v735
        %v743 = vmul.f32 %v723, %v735
        %v744 = vmul.f32 %v724, %v735
        %v745 = vmul.f32 %v725, %v735
        %v746 = vmul.f32 %v726, %v735
        %v747 = vmul.f32 %v727, %v735
        %v748 = vmul.f32 %v728, %v735
        %v749 = vmul.f32 %v729, %v735
        %v750 = vmul.f32 %v730, %v735
        %v751 = vmul.f32 %v731, %v735
        %v752 = vpack.c.bf16 %v737, %v736
        %v753 = vpack.c.bf16 %v739, %v738
        %v754 = vpack.c.bf16 %v741, %v740
        %v755 = vpack.c.bf16 %v743, %v742
        %v756 = vpack.c.bf16 %v745, %v744
        %v757 = vpack.c.bf16 %v747, %v746
        %v758 = vpack.c.bf16 %v749, %v748
        %v759 = vpack.c.bf16 %v751, %v750
        %v760 = vld [vmem:[%s478] sm:$0xf]
        %v761 = vld [vmem:[%s478 + $0x4] sm:$0xf]
        %v762 = vld [vmem:[%s478 + $0x8] sm:$0xf]
        %v763 = vld [vmem:[%s478 + $0xc] sm:$0xf]
        %v764 = vld [vmem:[%s478 + $0x10] sm:$0xf]
        %v765 = vld [vmem:[%s478 + $0x14] sm:$0xf]
        %v766 = vld [vmem:[%s478 + $0x18] sm:$0xf]
        %v767 = vld [vmem:[%s478 + $0x1c] sm:$0xf]
        %v768 = vld [vmem:[%s478 + $0x20] sm:$0xf]
        %v769 = vld [vmem:[%s478 + $0x24] sm:$0xf]
        %v770 = vld [vmem:[%s478 + $0x28] sm:$0xf]
        %v771 = vld [vmem:[%s478 + $0x2c] sm:$0xf]
        %v772 = vld [vmem:[%s478 + $0x30] sm:$0xf]
        %v773 = vld [vmem:[%s478 + $0x34] sm:$0xf]
        %v774 = vld [vmem:[%s478 + $0x38] sm:$0xf]
        %v775 = vld [vmem:[%s478 + $0x3c] sm:$0xf]
        %v792 = vunpack.c.l.b16 %v760
        %v793 = vunpack.c.l.b16 %v761
        %v794 = vunpack.c.l.b16 %v762
        %v795 = vunpack.c.l.b16 %v763
        %v796 = vunpack.c.l.b16 %v764
        %v797 = vunpack.c.l.b16 %v765
        %v798 = vunpack.c.l.b16 %v766
        %v799 = vunpack.c.l.b16 %v767
        %v800 = vunpack.c.l.b16 %v768
        %v801 = vunpack.c.l.b16 %v769
        %v802 = vunpack.c.l.b16 %v770
        %v803 = vunpack.c.l.b16 %v771
        %v804 = vunpack.c.l.b16 %v772
        %v805 = vunpack.c.l.b16 %v773
        %v806 = vunpack.c.l.b16 %v774
        %v807 = vunpack.c.l.b16 %v775
        %v808 = vpack.c.b16 %v793, %v792
        %v809 = vpack.c.b16 %v795, %v794
        %v810 = vpack.c.b16 %v797, %v796
        %v811 = vpack.c.b16 %v799, %v798
        %v812 = vpack.c.b16 %v801, %v800
        %v813 = vpack.c.b16 %v803, %v802
        %v814 = vpack.c.b16 %v805, %v804
        %v815 = vpack.c.b16 %v807, %v806
        %824 = vmatprep.subr.bf16.mxu0 0
        %825 = vmatpush1.bf16.msra.mxu0 %v815
        %826 = vmatprep.subr.bf16.mxu0 0
        %827 = vmatpush1.bf16.msra.mxu0 %v814
        %828 = vmatprep.subr.bf16.mxu0 0
        %829 = vmatpush1.bf16.msra.mxu0 %v813
        %830 = vmatprep.subr.bf16.mxu0 0
        %831 = vmatpush1.bf16.msra.mxu0 %v812
        %832 = vmatprep.subr.bf16.mxu0 0
        %833 = vmatpush1.bf16.msra.mxu0 %v811
        %834 = vmatprep.subr.bf16.mxu0 0
        %835 = vmatpush1.bf16.msra.mxu0 %v810
        %836 = vmatprep.subr.bf16.mxu0 0
        %837 = vmatpush1.bf16.msra.mxu0 %v809
        %838 = vmatprep.subr.bf16.mxu0 0
        %839 = vmatpush1.bf16.msra.mxu0 %v808
        %840 = vmatprep.subr.bf16.mxu0 0
        %841 = vmatpush2.bf16.msra.mxu0 0
        %842 = vmatprep.subr.bf16.mxu0 0
        %843 = vmatpush2.bf16.msra.mxu0 0
        %844 = vmatprep.subr.bf16.mxu0 0
        %845 = vmatpush2.bf16.msra.mxu0 0
        %846 = vmatprep.subr.bf16.mxu0 0
        %847 = vmatpush2.bf16.msra.mxu0 0
        %848 = vmatprep.subr.bf16.mxu0 0
        %849 = vmatpush2.bf16.msra.mxu0 0
        %850 = vmatprep.subr.bf16.mxu0 0
        %851 = vmatpush2.bf16.msra.mxu0 0
        %852 = vmatprep.subr.bf16.mxu0 0
        %853 = vmatpush2.bf16.msra.mxu0 0
        %854 = vmatprep.subr.bf16.mxu0 0
        %855 = vmatpush2.bf16.msra.mxu0 0
        %856 = vmatprep.mubr.bf16.mxu0 0
        %857 = vmatmul.mubr.bf16.gmra.mxu0 %v619
        %v858 = vpop.f32.mrf.mxu0
        %v859 = vadd.f32 0.0, %v858
        %v860 = vpop.f32.mrf.mxu0
        %v861 = vpop.f32.mrf.mxu0
        %v862 = vpop.f32.mrf.mxu0
        %863 = vdwg.mxu0
        %v864 = vld [vmem:[%s487] sm:$0xff]
        %v865 = vld [vmem:[%s487 + $0x8] sm:$0xff]
        %v866 = vld [vmem:[%s487 + $0x10] sm:$0xff]
        %v867 = vld [vmem:[%s487 + $0x18] sm:$0xff]
        %v868 = vld [vmem:[%s487 + $0x20] sm:$0xff]
        %v869 = vld [vmem:[%s487 + $0x28] sm:$0xff]
        %v870 = vld [vmem:[%s487 + $0x30] sm:$0xff]
        %v871 = vld [vmem:[%s487 + $0x38] sm:$0xff]
        %v872 = vld [vmem:[%s487 + $0x40] sm:$0xff]
        %v873 = vld [vmem:[%s487 + $0x48] sm:$0xff]
        %v874 = vld [vmem:[%s487 + $0x50] sm:$0xff]
        %v875 = vld [vmem:[%s487 + $0x58] sm:$0xff]
        %v876 = vld [vmem:[%s487 + $0x60] sm:$0xff]
        %v877 = vld [vmem:[%s487 + $0x68] sm:$0xff]
        %v878 = vld [vmem:[%s487 + $0x70] sm:$0xff]
        %v879 = vld [vmem:[%s487 + $0x78] sm:$0xff]
        %v896 = vunpack.c.l.b16 %v864
        %v897 = vunpack.c.h.b16 %v864
        %v898 = vunpack.c.l.b16 %v865
        %v899 = vunpack.c.h.b16 %v865
        %v900 = vunpack.c.l.b16 %v866
        %v901 = vunpack.c.h.b16 %v866
        %v902 = vunpack.c.l.b16 %v867
        %v903 = vunpack.c.h.b16 %v867
        %v904 = vunpack.c.l.b16 %v868
        %v905 = vunpack.c.h.b16 %v868
        %v906 = vunpack.c.l.b16 %v869
        %v907 = vunpack.c.h.b16 %v869
        %v908 = vunpack.c.l.b16 %v870
        %v909 = vunpack.c.h.b16 %v870
        %v910 = vunpack.c.l.b16 %v871
        %v911 = vunpack.c.h.b16 %v871
        %v912 = vunpack.c.l.b16 %v872
        %v913 = vunpack.c.h.b16 %v872
        %v914 = vunpack.c.l.b16 %v873
        %v915 = vunpack.c.h.b16 %v873
        %v916 = vunpack.c.l.b16 %v874
        %v917 = vunpack.c.h.b16 %v874
        %v918 = vunpack.c.l.b16 %v875
        %v919 = vunpack.c.h.b16 %v875
        %v920 = vunpack.c.l.b16 %v876
        %v921 = vunpack.c.h.b16 %v876
        %v922 = vunpack.c.l.b16 %v877
        %v923 = vunpack.c.h.b16 %v877
        %v924 = vunpack.c.l.b16 %v878
        %v925 = vunpack.c.h.b16 %v878
        %v926 = vunpack.c.l.b16 %v879
        %v927 = vunpack.c.h.b16 %v879
        %v928 = vpack.c.b16 %v898, %v896
        %v929 = vpack.c.b16 %v899, %v897
        %v930 = vpack.c.b16 %v902, %v900
        %v931 = vpack.c.b16 %v903, %v901
        %v932 = vpack.c.b16 %v906, %v904
        %v933 = vpack.c.b16 %v907, %v905
        %v934 = vpack.c.b16 %v910, %v908
        %v935 = vpack.c.b16 %v911, %v909
        %v936 = vpack.c.b16 %v914, %v912
        %v937 = vpack.c.b16 %v915, %v913
        %v938 = vpack.c.b16 %v918, %v916
        %v939 = vpack.c.b16 %v919, %v917
        %v940 = vpack.c.b16 %v922, %v920
        %v941 = vpack.c.b16 %v923, %v921
        %v942 = vpack.c.b16 %v926, %v924
        %v943 = vpack.c.b16 %v927, %v925
        %960 = vmatprep.subr.bf16.mxu0 %v943
        %961 = vmatpush1.bf16.msra.mxu0 %v942
        %962 = vmatprep.subr.bf16.mxu0 %v941
        %963 = vmatpush1.bf16.msra.mxu0 %v940
        %964 = vmatprep.subr.bf16.mxu0 %v939
        %965 = vmatpush1.bf16.msra.mxu0 %v938
        %966 = vmatprep.subr.bf16.mxu0 %v937
        %967 = vmatpush1.bf16.msra.mxu0 %v936
        %968 = vmatprep.subr.bf16.mxu0 %v935
        %969 = vmatpush1.bf16.msra.mxu0 %v934
        %970 = vmatprep.subr.bf16.mxu0 %v933
        %971 = vmatpush1.bf16.msra.mxu0 %v932
        %972 = vmatprep.subr.bf16.mxu0 %v931
        %973 = vmatpush1.bf16.msra.mxu0 %v930
        %974 = vmatprep.subr.bf16.mxu0 %v929
        %975 = vmatpush1.bf16.msra.mxu0 %v928
        %976 = vmatprep.subr.bf16.mxu0 0
        %977 = vmatpush2.bf16.msra.mxu0 0
        %978 = vmatprep.subr.bf16.mxu0 0
        %979 = vmatpush2.bf16.msra.mxu0 0
        %980 = vmatprep.subr.bf16.mxu0 0
        %981 = vmatpush2.bf16.msra.mxu0 0
        %982 = vmatprep.subr.bf16.mxu0 0
        %983 = vmatpush2.bf16.msra.mxu0 0
        %984 = vmatprep.subr.bf16.mxu0 0
        %985 = vmatpush2.bf16.msra.mxu0 0
        %986 = vmatprep.subr.bf16.mxu0 0
        %987 = vmatpush2.bf16.msra.mxu0 0
        %988 = vmatprep.subr.bf16.mxu0 0
        %989 = vmatpush2.bf16.msra.mxu0 0
        %990 = vmatprep.subr.bf16.mxu0 0
        %991 = vmatpush2.bf16.msra.mxu0 0
        %992 = vmatprep.mubr.bf16.mxu0 0
        %993 = vmatmul.mubr.bf16.gmra.mxu0 %v752
        %v994 = vpop.f32.mrf.mxu0
        %v995 = vadd.f32 0.0, %v994
        %v996 = vpop.f32.mrf.mxu0
        %v997 = vadd.f32 0.0, %v996
        %v998 = vpop.f32.mrf.mxu0
        %v999 = vadd.f32 0.0, %v998
        %v1000 = vpop.f32.mrf.mxu0
        %v1001 = vadd.f32 0.0, %v1000
        %1002 = vmatprep.mubr.bf16.mxu0 0
        %1003 = vmatmul.mubr.bf16.gmra.mxu0 %v753
        %v1004 = vpop.f32.mrf.mxu0
        %v1005 = vadd.f32 0.0, %v1004
        %v1006 = vpop.f32.mrf.mxu0
        %v1007 = vadd.f32 0.0, %v1006
        %v1008 = vpop.f32.mrf.mxu0
        %v1009 = vadd.f32 0.0, %v1008
        %v1010 = vpop.f32.mrf.mxu0
        %v1011 = vadd.f32 0.0, %v1010
        %1012 = vmatprep.mubr.bf16.mxu0 0
        %1013 = vmatmul.mubr.bf16.gmra.mxu0 %v754
        %v1014 = vpop.f32.mrf.mxu0
        %v1015 = vadd.f32 0.0, %v1014
        %v1016 = vpop.f32.mrf.mxu0
        %v1017 = vadd.f32 0.0, %v1016
        %v1018 = vpop.f32.mrf.mxu0
        %v1019 = vadd.f32 0.0, %v1018
        %v1020 = vpop.f32.mrf.mxu0
        %v1021 = vadd.f32 0.0, %v1020
        %1022 = vmatprep.mubr.bf16.mxu0 0
        %1023 = vmatmul.mubr.bf16.gmra.mxu0 %v755
        %v1024 = vpop.f32.mrf.mxu0
        %v1025 = vadd.f32 0.0, %v1024
        %v1026 = vpop.f32.mrf.mxu0
        %v1027 = vadd.f32 0.0, %v1026
        %v1028 = vpop.f32.mrf.mxu0
        %v1029 = vadd.f32 0.0, %v1028
        %v1030 = vpop.f32.mrf.mxu0
        %v1031 = vadd.f32 0.0, %v1030
        %1032 = vmatprep.mubr.bf16.mxu0 0
        %1033 = vmatmul.mubr.bf16.gmra.mxu0 %v756
        %v1034 = vpop.f32.mrf.mxu0
        %v1035 = vadd.f32 0.0, %v1034
        %v1036 = vpop.f32.mrf.mxu0
        %v1037 = vadd.f32 0.0, %v1036
        %v1038 = vpop.f32.mrf.mxu0
        %v1039 = vadd.f32 0.0, %v1038
        %v1040 = vpop.f32.mrf.mxu0
        %v1041 = vadd.f32 0.0, %v1040
        %1042 = vmatprep.mubr.bf16.mxu0 0
        %1043 = vmatmul.mubr.bf16.gmra.mxu0 %v757
        %v1044 = vpop.f32.mrf.mxu0
        %v1045 = vadd.f32 0.0, %v1044
        %v1046 = vpop.f32.mrf.mxu0
        %v1047 = vadd.f32 0.0, %v1046
        %v1048 = vpop.f32.mrf.mxu0
        %v1049 = vadd.f32 0.0, %v1048
        %v1050 = vpop.f32.mrf.mxu0
        %v1051 = vadd.f32 0.0, %v1050
        %1052 = vmatprep.mubr.bf16.mxu0 0
        %1053 = vmatmul.mubr.bf16.gmra.mxu0 %v758
        %v1054 = vpop.f32.mrf.mxu0
        %v1055 = vadd.f32 0.0, %v1054
        %v1056 = vpop.f32.mrf.mxu0
        %v1057 = vadd.f32 0.0, %v1056
        %v1058 = vpop.f32.mrf.mxu0
        %v1059 = vadd.f32 0.0, %v1058
        %v1060 = vpop.f32.mrf.mxu0
        %v1061 = vadd.f32 0.0, %v1060
        %1062 = vmatprep.mubr.bf16.mxu0 0
        %1063 = vmatmul.mubr.bf16.gmra.mxu0 %v759
        %v1064 = vpop.f32.mrf.mxu0
        %v1065 = vadd.f32 0.0, %v1064
        %v1066 = vpop.f32.mrf.mxu0
        %v1067 = vadd.f32 0.0, %v1066
        %v1068 = vpop.f32.mrf.mxu0
        %v1069 = vadd.f32 0.0, %v1068
        %v1070 = vpop.f32.mrf.mxu0
        %v1071 = vadd.f32 0.0, %v1070
        %1072 = vdwg.mxu0
        %v1073 = vmul.f32 %v859, 0.17677669
        %v1074 = vpack.c.bf16 %v1073, %v1073
        %v1075 = vpack.c.bf16 %v999, %v995
        %v1076 = vpack.c.bf16 %v1009, %v1005
        %v1077 = vpack.c.bf16 %v1019, %v1015
        %v1078 = vpack.c.bf16 %v1029, %v1025
        %v1079 = vpack.c.bf16 %v1039, %v1035
        %v1080 = vpack.c.bf16 %v1049, %v1045
        %v1081 = vpack.c.bf16 %v1059, %v1055
        %v1082 = vpack.c.bf16 %v1069, %v1065
        %v1083 = vpack.c.bf16 %v1001, %v997
        %v1084 = vpack.c.bf16 %v1011, %v1007
        %v1085 = vpack.c.bf16 %v1021, %v1017
        %v1086 = vpack.c.bf16 %v1031, %v1027
        %v1087 = vpack.c.bf16 %v1041, %v1037
        %v1088 = vpack.c.bf16 %v1051, %v1047
        %v1089 = vpack.c.bf16 %v1061, %v1057
        %v1090 = vpack.c.bf16 %v1071, %v1067
        %v1091 = vld [vmem:[%s496] sm:$0xf]
        %v1092 = vld [vmem:[%s496 + $0x4] sm:$0xf]
        %v1093 = vld [vmem:[%s496 + $0x8] sm:$0xf]
        %v1094 = vld [vmem:[%s496 + $0xc] sm:$0xf]
        %v1095 = vld [vmem:[%s496 + $0x10] sm:$0xf]
        %v1096 = vld [vmem:[%s496 + $0x14] sm:$0xf]
        %v1097 = vld [vmem:[%s496 + $0x18] sm:$0xf]
        %v1098 = vld [vmem:[%s496 + $0x1c] sm:$0xf]
        %v1099 = vld [vmem:[%s496 + $0x20] sm:$0xf]
        %v1100 = vld [vmem:[%s496 + $0x24] sm:$0xf]
        %v1101 = vld [vmem:[%s496 + $0x28] sm:$0xf]
        %v1102 = vld [vmem:[%s496 + $0x2c] sm:$0xf]
        %v1103 = vld [vmem:[%s496 + $0x30] sm:$0xf]
        %v1104 = vld [vmem:[%s496 + $0x34] sm:$0xf]
        %v1105 = vld [vmem:[%s496 + $0x38] sm:$0xf]
        %v1106 = vld [vmem:[%s496 + $0x3c] sm:$0xf]
        %vm1107 = vcmask 261120
        %v1109 = vsel %vm1107, %v1074, 0
        %v1112 = vsel %vm1107, %v1075, 0
        %v1115 = vsel %vm1107, %v1076, 0
        %v1118 = vsel %vm1107, %v1077, 0
        %v1121 = vsel %vm1107, %v1078, 0
        %v1124 = vsel %vm1107, %v1079, 0
        %v1127 = vsel %vm1107, %v1080, 0
        %v1130 = vsel %vm1107, %v1081, 0
        %v1133 = vsel %vm1107, %v1082, 0
        %1135 = vmatprep.subr.bf16.mxu0 0
        %1136 = vmatpush1.bf16.xpose.msra.mxu0 %v1133
        %1137 = vmatprep.subr.bf16.mxu0 0
        %1138 = vmatpush1.bf16.xpose.msra.mxu0 %v1130
        %1139 = vmatprep.subr.bf16.mxu0 0
        %1140 = vmatpush1.bf16.xpose.msra.mxu0 %v1127
        %1141 = vmatprep.subr.bf16.mxu0 0
        %1142 = vmatpush1.bf16.xpose.msra.mxu0 %v1124
        %1143 = vmatprep.subr.bf16.mxu0 0
        %1144 = vmatpush1.bf16.xpose.msra.mxu0 %v1121
        %1145 = vmatprep.subr.bf16.mxu0 0
        %1146 = vmatpush1.bf16.xpose.msra.mxu0 %v1118
        %1147 = vmatprep.subr.bf16.mxu0 0
        %1148 = vmatpush1.bf16.xpose.msra.mxu0 %v1115
        %1149 = vmatprep.subr.bf16.mxu0 0
        %1150 = vmatpush1.bf16.xpose.msra.mxu0 %v1112
        %1151 = vmatprep.subr.bf16.mxu0 0
        %1152 = vmatpush2.bf16.xpose.msra.mxu0 0
        %1153 = vmatprep.subr.bf16.mxu0 0
        %1154 = vmatpush2.bf16.xpose.msra.mxu0 0
        %1155 = vmatprep.subr.bf16.mxu0 0
        %1156 = vmatpush2.bf16.xpose.msra.mxu0 0
        %1157 = vmatprep.subr.bf16.mxu0 0
        %1158 = vmatpush2.bf16.xpose.msra.mxu0 0
        %1159 = vmatprep.subr.bf16.mxu0 0
        %1160 = vmatpush2.bf16.xpose.msra.mxu0 0
        %1161 = vmatprep.subr.bf16.mxu0 0
        %1162 = vmatpush2.bf16.xpose.msra.mxu0 0
        %1163 = vmatprep.subr.bf16.mxu0 0
        %1164 = vmatpush2.bf16.xpose.msra.mxu0 0
        %1165 = vmatprep.subr.bf16.mxu0 0
        %1166 = vmatpush2.bf16.xpose.msra.mxu0 0
        %1167 = vmatprep.mubr.bf16.mxu0 0
        %1168 = vmatmul.mubr.bf16.gmra.mxu0 %v1109
        %v1169 = vpop.f32.mrf.mxu0
        %v1170 = vadd.f32 0.0, %v1169
        %v1171 = vpop.f32.mrf.mxu0
        %v1172 = vpop.f32.mrf.mxu0
        %v1173 = vpop.f32.mrf.mxu0
        %1174 = vdwg.mxu0
        %1175 = vmax.xlane.f32.xlu0 %v1170
        %v1176 = vpop.xlane.xlu0 %1175
        %v1177 = vsub.f32 %v1170, %v1176
        %v1178 = vmul.f32 %v1177, 1.442695
        %v1179 = vpow.pop %v1178
        %1180 = vadd.xlane.f32.xlu0 %v1179
        %v1181 = vpop.xlane.xlu0 %1180
        %v1182 = vrcp.pop %v1181
        %v1183 = vmul.f32 %v1179, %v1182
        %v1184 = vpack.c.bf16 %v1183, %v1183
        %1185 = vmatprep.subr.bf16.mxu0 0
        %1186 = vmatpush1.bf16.msra.mxu0 %v1090
        %1187 = vmatprep.subr.bf16.mxu0 0
        %1188 = vmatpush1.bf16.msra.mxu0 %v1089
        %1189 = vmatprep.subr.bf16.mxu0 0
        %1190 = vmatpush1.bf16.msra.mxu0 %v1088
        %1191 = vmatprep.subr.bf16.mxu0 0
        %1192 = vmatpush1.bf16.msra.mxu0 %v1087
        %1193 = vmatprep.subr.bf16.mxu0 0
        %1194 = vmatpush1.bf16.msra.mxu0 %v1086
        %1195 = vmatprep.subr.bf16.mxu0 0
        %1196 = vmatpush1.bf16.msra.mxu0 %v1085
        %1197 = vmatprep.subr.bf16.mxu0 0
        %1198 = vmatpush1.bf16.msra.mxu0 %v1084
        %1199 = vmatprep.subr.bf16.mxu0 0
        %1200 = vmatpush1.bf16.msra.mxu0 %v1083
        %1201 = vmatprep.subr.bf16.mxu0 0
        %1202 = vmatpush2.bf16.msra.mxu0 0
        %1203 = vmatprep.subr.bf16.mxu0 0
        %1204 = vmatpush2.bf16.msra.mxu0 0
        %1205 = vmatprep.subr.bf16.mxu0 0
        %1206 = vmatpush2.bf16.msra.mxu0 0
        %1207 = vmatprep.subr.bf16.mxu0 0
        %1208 = vmatpush2.bf16.msra.mxu0 0
        %1209 = vmatprep.subr.bf16.mxu0 0
        %1210 = vmatpush2.bf16.msra.mxu0 0
        %1211 = vmatprep.subr.bf16.mxu0 0
        %1212 = vmatpush2.bf16.msra.mxu0 0
        %1213 = vmatprep.subr.bf16.mxu0 0
        %1214 = vmatpush2.bf16.msra.mxu0 0
        %1215 = vmatprep.subr.bf16.mxu0 0
        %1216 = vmatpush2.bf16.msra.mxu0 0
        %1217 = vmatprep.mubr.bf16.mxu0 0
        %1218 = vmatmul.mubr.bf16.gmra.mxu0 %v1184
        %v1219 = vpop.f32.mrf.mxu0
        %v1220 = vadd.f32 0.0, %v1219
        %v1221 = vpop.f32.mrf.mxu0
        %v1222 = vpop.f32.mrf.mxu0
        %v1223 = vpop.f32.mrf.mxu0
        %1224 = vdwg.mxu0
        %v1225 = vpack.c.bf16 %v1220, %v1220
        %1227 = vrot.lane.b32.xlu0 %v1074, 96
        %v1228 = vpop.permute.xlu0 %1227
        %1237 = vrot.lane.b32.xlu0 %v1075, 96
        %v1238 = vpop.permute.xlu0 %1237
        %1239 = vrot.lane.b32.xlu0 %v1076, 96
        %v1240 = vpop.permute.xlu0 %1239
        %1241 = vrot.lane.b32.xlu0 %v1077, 96
        %v1242 = vpop.permute.xlu0 %1241
        %1243 = vrot.lane.b32.xlu0 %v1078, 96
        %v1244 = vpop.permute.xlu0 %1243
        %1245 = vrot.lane.b32.xlu0 %v1079, 96
        %v1246 = vpop.permute.xlu0 %1245
        %1247 = vrot.lane.b32.xlu0 %v1080, 96
        %v1248 = vpop.permute.xlu0 %1247
        %1249 = vrot.lane.b32.xlu0 %v1081, 96
        %v1250 = vpop.permute.xlu0 %1249
        %1251 = vrot.lane.b32.xlu0 %v1082, 96
        %v1252 = vpop.permute.xlu0 %1251
        %v1254 = vsel %vm1107, %v1228, 0
        %v1257 = vsel %vm1107, %v1238, 0
        %v1260 = vsel %vm1107, %v1240, 0
        %v1263 = vsel %vm1107, %v1242, 0
        %v1266 = vsel %vm1107, %v1244, 0
        %v1269 = vsel %vm1107, %v1246, 0
        %v1272 = vsel %vm1107, %v1248, 0
        %v1275 = vsel %vm1107, %v1250, 0
        %v1278 = vsel %vm1107, %v1252, 0
        %1280 = vmatprep.subr.bf16.mxu0 0
        %1281 = vmatpush1.bf16.xpose.msra.mxu0 %v1278
        %1282 = vmatprep.subr.bf16.mxu0 0
        %1283 = vmatpush1.bf16.xpose.msra.mxu0 %v1275
        %1284 = vmatprep.subr.bf16.mxu0 0
        %1285 = vmatpush1.bf16.xpose.msra.mxu0 %v1272
        %1286 = vmatprep.subr.bf16.mxu0 0
        %1287 = vmatpush1.bf16.xpose.msra.mxu0 %v1269
        %1288 = vmatprep.subr.bf16.mxu0 0
        %1289 = vmatpush1.bf16.xpose.msra.mxu0 %v1266
        %1290 = vmatprep.subr.bf16.mxu0 0
        %1291 = vmatpush1.bf16.xpose.msra.mxu0 %v1263
        %1292 = vmatprep.subr.bf16.mxu0 0
        %1293 = vmatpush1.bf16.xpose.msra.mxu0 %v1260
        %1294 = vmatprep.subr.bf16.mxu0 0
        %1295 = vmatpush1.bf16.xpose.msra.mxu0 %v1257
        %1296 = vmatprep.subr.bf16.mxu0 0
        %1297 = vmatpush2.bf16.xpose.msra.mxu0 0
        %1298 = vmatprep.subr.bf16.mxu0 0
        %1299 = vmatpush2.bf16.xpose.msra.mxu0 0
        %1300 = vmatprep.subr.bf16.mxu0 0
        %1301 = vmatpush2.bf16.xpose.msra.mxu0 0
        %1302 = vmatprep.subr.bf16.mxu0 0
        %1303 = vmatpush2.bf16.xpose.msra.mxu0 0
        %1304 = vmatprep.subr.bf16.mxu0 0
        %1305 = vmatpush2.bf16.xpose.msra.mxu0 0
        %1306 = vmatprep.subr.bf16.mxu0 0
        %1307 = vmatpush2.bf16.xpose.msra.mxu0 0
        %1308 = vmatprep.subr.bf16.mxu0 0
        %1309 = vmatpush2.bf16.xpose.msra.mxu0 0
        %1310 = vmatprep.subr.bf16.mxu0 0
        %1311 = vmatpush2.bf16.xpose.msra.mxu0 0
        %1312 = vmatprep.mubr.bf16.mxu0 0
        %1313 = vmatmul.mubr.bf16.gmra.mxu0 %v1254
        %v1314 = vpop.f32.mrf.mxu0
        %v1315 = vadd.f32 0.0, %v1314
        %v1316 = vpop.f32.mrf.mxu0
        %v1317 = vpop.f32.mrf.mxu0
        %v1318 = vpop.f32.mrf.mxu0
        %1319 = vdwg.mxu0
        %1320 = vmax.xlane.f32.xlu0 %v1315
        %v1321 = vpop.xlane.xlu0 %1320
        %v1322 = vsub.f32 %v1315, %v1321
        %v1323 = vmul.f32 %v1322, 1.442695
        %v1324 = vpow.pop %v1323
        %1325 = vadd.xlane.f32.xlu0 %v1324
        %v1326 = vpop.xlane.xlu0 %1325
        %v1327 = vrcp.pop %v1326
        %v1328 = vmul.f32 %v1324, %v1327
        %v1329 = vpack.c.bf16 %v1328, %v1328
        %1338 = vrot.lane.b32.xlu0 %v1083, 96
        %v1339 = vpop.permute.xlu0 %1338
        %1340 = vrot.lane.b32.xlu0 %v1084, 96
        %v1341 = vpop.permute.xlu0 %1340
        %1342 = vrot.lane.b32.xlu0 %v1085, 96
        %v1343 = vpop.permute.xlu0 %1342
        %1344 = vrot.lane.b32.xlu0 %v1086, 96
        %v1345 = vpop.permute.xlu0 %1344
        %1346 = vrot.lane.b32.xlu0 %v1087, 96
        %v1347 = vpop.permute.xlu0 %1346
        %1348 = vrot.lane.b32.xlu0 %v1088, 96
        %v1349 = vpop.permute.xlu0 %1348
        %1350 = vrot.lane.b32.xlu0 %v1089, 96
        %v1351 = vpop.permute.xlu0 %1350
        %1352 = vrot.lane.b32.xlu0 %v1090, 96
        %v1353 = vpop.permute.xlu0 %1352
        %1362 = vmatprep.subr.bf16.mxu0 0
        %1363 = vmatpush1.bf16.msra.mxu0 %v1353
        %1364 = vmatprep.subr.bf16.mxu0 0
        %1365 = vmatpush1.bf16.msra.mxu0 %v1351
        %1366 = vmatprep.subr.bf16.mxu0 0
        %1367 = vmatpush1.bf16.msra.mxu0 %v1349
        %1368 = vmatprep.subr.bf16.mxu0 0
        %1369 = vmatpush1.bf16.msra.mxu0 %v1347
        %1370 = vmatprep.subr.bf16.mxu0 0
        %1371 = vmatpush1.bf16.msra.mxu0 %v1345
        %1372 = vmatprep.subr.bf16.mxu0 0
        %1373 = vmatpush1.bf16.msra.mxu0 %v1343
        %1374 = vmatprep.subr.bf16.mxu0 0
        %1375 = vmatpush1.bf16.msra.mxu0 %v1341
        %1376 = vmatprep.subr.bf16.mxu0 0
        %1377 = vmatpush1.bf16.msra.mxu0 %v1339
        %1378 = vmatprep.subr.bf16.mxu0 0
        %1379 = vmatpush2.bf16.msra.mxu0 0
        %1380 = vmatprep.subr.bf16.mxu0 0
        %1381 = vmatpush2.bf16.msra.mxu0 0
        %1382 = vmatprep.subr.bf16.mxu0 0
        %1383 = vmatpush2.bf16.msra.mxu0 0
        %1384 = vmatprep.subr.bf16.mxu0 0
        %1385 = vmatpush2.bf16.msra.mxu0 0
        %1386 = vmatprep.subr.bf16.mxu0 0
        %1387 = vmatpush2.bf16.msra.mxu0 0
        %1388 = vmatprep.subr.bf16.mxu0 0
        %1389 = vmatpush2.bf16.msra.mxu0 0
        %1390 = vmatprep.subr.bf16.mxu0 0
        %1391 = vmatpush2.bf16.msra.mxu0 0
        %1392 = vmatprep.subr.bf16.mxu0 0
        %1393 = vmatpush2.bf16.msra.mxu0 0
        %1394 = vmatprep.mubr.bf16.mxu0 0
        %1395 = vmatmul.mubr.bf16.gmra.mxu0 %v1329
        %v1396 = vpop.f32.mrf.mxu0
        %v1397 = vadd.f32 0.0, %v1396
        %v1398 = vpop.f32.mrf.mxu0
        %v1399 = vpop.f32.mrf.mxu0
        %v1400 = vpop.f32.mrf.mxu0
        %1401 = vdwg.mxu0
        %v1402 = vpack.c.bf16 %v1397, %v1397
        %v1407 = vunpack.c.l.b16 %v1095
        %v1408 = vunpack.c.l.b16 %v1096
        %v1409 = vunpack.c.l.b16 %v1097
        %v1410 = vunpack.c.l.b16 %v1098
        %v1411 = vpack.c.b16 %v1408, %v1407
        %v1412 = vpack.c.b16 %v1410, %v1409
        %v1416 = vsel %vm1107, %v1402, 0
        %1418 = vmatprep.subr.bf16.mxu0 0
        %1419 = vmatpush1.bf16.msra.mxu0 0
        %1420 = vmatprep.subr.bf16.mxu0 0
        %1421 = vmatpush1.bf16.msra.mxu0 0
        %1422 = vmatprep.subr.bf16.mxu0 0
        %1423 = vmatpush1.bf16.msra.mxu0 0
        %1424 = vmatprep.subr.bf16.mxu0 0
        %1425 = vmatpush1.bf16.msra.mxu0 0
        %1426 = vmatprep.subr.bf16.mxu0 0
        %1427 = vmatpush1.bf16.msra.mxu0 0
        %1428 = vmatprep.subr.bf16.mxu0 0
        %1429 = vmatpush1.bf16.msra.mxu0 0
        %1430 = vmatprep.subr.bf16.mxu0 0
        %1431 = vmatpush1.bf16.msra.mxu0 %v1412
        %1432 = vmatprep.subr.bf16.mxu0 0
        %1433 = vmatpush1.bf16.msra.mxu0 %v1411
        %1434 = vmatprep.subr.bf16.mxu0 0
        %1435 = vmatpush2.bf16.msra.mxu0 0
        %1436 = vmatprep.subr.bf16.mxu0 0
        %1437 = vmatpush2.bf16.msra.mxu0 0
        %1438 = vmatprep.subr.bf16.mxu0 0
        %1439 = vmatpush2.bf16.msra.mxu0 0
        %1440 = vmatprep.subr.bf16.mxu0 0
        %1441 = vmatpush2.bf16.msra.mxu0 0
        %1442 = vmatprep.subr.bf16.mxu0 0
        %1443 = vmatpush2.bf16.msra.mxu0 0
        %1444 = vmatprep.subr.bf16.mxu0 0
        %1445 = vmatpush2.bf16.msra.mxu0 0
        %1446 = vmatprep.subr.bf16.mxu0 0
        %1447 = vmatpush2.bf16.msra.mxu0 0
        %1448 = vmatprep.subr.bf16.mxu0 0
        %1449 = vmatpush2.bf16.msra.mxu0 0
        %1450 = vmatprep.mubr.bf16.mxu0 0
        %1451 = vmatmul.mubr.bf16.gmra.mxu0 %v1416
        %v1452 = vpop.f32.mrf.mxu0
        %v1453 = vadd.f32 0.0, %v1452
        %v1454 = vpop.f32.mrf.mxu0
        %v1455 = vpop.f32.mrf.mxu0
        %v1456 = vpop.f32.mrf.mxu0
        %1457 = vdwg.mxu0
        %v1462 = vunpack.c.l.b16 %v1091
        %v1463 = vunpack.c.l.b16 %v1092
        %v1464 = vunpack.c.l.b16 %v1093
        %v1465 = vunpack.c.l.b16 %v1094
        %v1466 = vpack.c.b16 %v1463, %v1462
        %v1467 = vpack.c.b16 %v1465, %v1464
        %v1471 = vsel %vm1107, %v1225, 0
        %1473 = vmatprep.subr.bf16.mxu0 0
        %1474 = vmatpush1.bf16.msra.mxu0 0
        %1475 = vmatprep.subr.bf16.mxu0 0
        %1476 = vmatpush1.bf16.msra.mxu0 0
        %1477 = vmatprep.subr.bf16.mxu0 0
        %1478 = vmatpush1.bf16.msra.mxu0 0
        %1479 = vmatprep.subr.bf16.mxu0 0
        %1480 = vmatpush1.bf16.msra.mxu0 0
        %1481 = vmatprep.subr.bf16.mxu0 0
        %1482 = vmatpush1.bf16.msra.mxu0 0
        %1483 = vmatprep.subr.bf16.mxu0 0
        %1484 = vmatpush1.bf16.msra.mxu0 0
        %1485 = vmatprep.subr.bf16.mxu0 0
        %1486 = vmatpush1.bf16.msra.mxu0 %v1467
        %1487 = vmatprep.subr.bf16.mxu0 0
        %1488 = vmatpush1.bf16.msra.mxu0 %v1466
        %1489 = vmatprep.subr.bf16.mxu0 0
        %1490 = vmatpush2.bf16.msra.mxu0 0
        %1491 = vmatprep.subr.bf16.mxu0 0
        %1492 = vmatpush2.bf16.msra.mxu0 0
        %1493 = vmatprep.subr.bf16.mxu0 0
        %1494 = vmatpush2.bf16.msra.mxu0 0
        %1495 = vmatprep.subr.bf16.mxu0 0
        %1496 = vmatpush2.bf16.msra.mxu0 0
        %1497 = vmatprep.subr.bf16.mxu0 0
        %1498 = vmatpush2.bf16.msra.mxu0 0
        %1499 = vmatprep.subr.bf16.mxu0 0
        %1500 = vmatpush2.bf16.msra.mxu0 0
        %1501 = vmatprep.subr.bf16.mxu0 0
        %1502 = vmatpush2.bf16.msra.mxu0 0
        %1503 = vmatprep.subr.bf16.mxu0 0
        %1504 = vmatpush2.bf16.msra.mxu0 0
        %1505 = vmatprep.mubr.bf16.mxu0 0
        %1506 = vmatmul.mubr.bf16.gmra.mxu0 %v1471
        %v1507 = vpop.f32.mrf.mxu0
        %v1508 = vadd.f32 %v1453, %v1507
        %v1509 = vpop.f32.mrf.mxu0
        %v1510 = vpop.f32.mrf.mxu0
        %v1511 = vpop.f32.mrf.mxu0
        %1512 = vdwg.mxu0
        %1513 = vrot.lane.b32.xlu0 %v1074, 64
        %v1514 = vpop.permute.xlu0 %1513
        %1515 = vrot.lane.b32.xlu0 %v1075, 64
        %v1516 = vpop.permute.xlu0 %1515
        %1517 = vrot.lane.b32.xlu0 %v1076, 64
        %v1518 = vpop.permute.xlu0 %1517
        %1519 = vrot.lane.b32.xlu0 %v1077, 64
        %v1520 = vpop.permute.xlu0 %1519
        %1521 = vrot.lane.b32.xlu0 %v1078, 64
        %v1522 = vpop.permute.xlu0 %1521
        %1523 = vrot.lane.b32.xlu0 %v1079, 64
        %v1524 = vpop.permute.xlu0 %1523
        %1525 = vrot.lane.b32.xlu0 %v1080, 64
        %v1526 = vpop.permute.xlu0 %1525
        %1527 = vrot.lane.b32.xlu0 %v1081, 64
        %v1528 = vpop.permute.xlu0 %1527
        %1529 = vrot.lane.b32.xlu0 %v1082, 64
        %v1530 = vpop.permute.xlu0 %1529
        %v1532 = vsel %vm1107, %v1514, 0
        %v1535 = vsel %vm1107, %v1516, 0
        %v1538 = vsel %vm1107, %v1518, 0
        %v1541 = vsel %vm1107, %v1520, 0
        %v1544 = vsel %vm1107, %v1522, 0
        %v1547 = vsel %vm1107, %v1524, 0
        %v1550 = vsel %vm1107, %v1526, 0
        %v1553 = vsel %vm1107, %v1528, 0
        %v1556 = vsel %vm1107, %v1530, 0
        %1558 = vmatprep.subr.bf16.mxu0 0
        %1559 = vmatpush1.bf16.xpose.msra.mxu0 %v1556
        %1560 = vmatprep.subr.bf16.mxu0 0
        %1561 = vmatpush1.bf16.xpose.msra.mxu0 %v1553
        %1562 = vmatprep.subr.bf16.mxu0 0
        %1563 = vmatpush1.bf16.xpose.msra.mxu0 %v1550
        %1564 = vmatprep.subr.bf16.mxu0 0
        %1565 = vmatpush1.bf16.xpose.msra.mxu0 %v1547
        %1566 = vmatprep.subr.bf16.mxu0 0
        %1567 = vmatpush1.bf16.xpose.msra.mxu0 %v1544
        %1568 = vmatprep.subr.bf16.mxu0 0
        %1569 = vmatpush1.bf16.xpose.msra.mxu0 %v1541
        %1570 = vmatprep.subr.bf16.mxu0 0
        %1571 = vmatpush1.bf16.xpose.msra.mxu0 %v1538
        %1572 = vmatprep.subr.bf16.mxu0 0
        %1573 = vmatpush1.bf16.xpose.msra.mxu0 %v1535
        %1574 = vmatprep.subr.bf16.mxu0 0
        %1575 = vmatpush2.bf16.xpose.msra.mxu0 0
        %1576 = vmatprep.subr.bf16.mxu0 0
        %1577 = vmatpush2.bf16.xpose.msra.mxu0 0
        %1578 = vmatprep.subr.bf16.mxu0 0
        %1579 = vmatpush2.bf16.xpose.msra.mxu0 0
        %1580 = vmatprep.subr.bf16.mxu0 0
        %1581 = vmatpush2.bf16.xpose.msra.mxu0 0
        %1582 = vmatprep.subr.bf16.mxu0 0
        %1583 = vmatpush2.bf16.xpose.msra.mxu0 0
        %1584 = vmatprep.subr.bf16.mxu0 0
        %1585 = vmatpush2.bf16.xpose.msra.mxu0 0
        %1586 = vmatprep.subr.bf16.mxu0 0
        %1587 = vmatpush2.bf16.xpose.msra.mxu0 0
        %1588 = vmatprep.subr.bf16.mxu0 0
        %1589 = vmatpush2.bf16.xpose.msra.mxu0 0
        %1590 = vmatprep.mubr.bf16.mxu0 0
        %1591 = vmatmul.mubr.bf16.gmra.mxu0 %v1532
        %v1592 = vpop.f32.mrf.mxu0
        %v1593 = vadd.f32 0.0, %v1592
        %v1594 = vpop.f32.mrf.mxu0
        %v1595 = vpop.f32.mrf.mxu0
        %v1596 = vpop.f32.mrf.mxu0
        %1597 = vdwg.mxu0
        %1598 = vmax.xlane.f32.xlu0 %v1593
        %v1599 = vpop.xlane.xlu0 %1598
        %v1600 = vsub.f32 %v1593, %v1599
        %v1601 = vmul.f32 %v1600, 1.442695
        %v1602 = vpow.pop %v1601
        %1603 = vadd.xlane.f32.xlu0 %v1602
        %v1604 = vpop.xlane.xlu0 %1603
        %v1605 = vrcp.pop %v1604
        %v1606 = vmul.f32 %v1602, %v1605
        %v1607 = vpack.c.bf16 %v1606, %v1606
        %1608 = vrot.lane.b32.xlu0 %v1083, 64
        %v1609 = vpop.permute.xlu0 %1608
        %1610 = vrot.lane.b32.xlu0 %v1084, 64
        %v1611 = vpop.permute.xlu0 %1610
        %1612 = vrot.lane.b32.xlu0 %v1085, 64
        %v1613 = vpop.permute.xlu0 %1612
        %1614 = vrot.lane.b32.xlu0 %v1086, 64
        %v1615 = vpop.permute.xlu0 %1614
        %1616 = vrot.lane.b32.xlu0 %v1087, 64
        %v1617 = vpop.permute.xlu0 %1616
        %1618 = vrot.lane.b32.xlu0 %v1088, 64
        %v1619 = vpop.permute.xlu0 %1618
        %1620 = vrot.lane.b32.xlu0 %v1089, 64
        %v1621 = vpop.permute.xlu0 %1620
        %1622 = vrot.lane.b32.xlu0 %v1090, 64
        %v1623 = vpop.permute.xlu0 %1622
        %1632 = vmatprep.subr.bf16.mxu0 0
        %1633 = vmatpush1.bf16.msra.mxu0 %v1623
        %1634 = vmatprep.subr.bf16.mxu0 0
        %1635 = vmatpush1.bf16.msra.mxu0 %v1621
        %1636 = vmatprep.subr.bf16.mxu0 0
        %1637 = vmatpush1.bf16.msra.mxu0 %v1619
        %1638 = vmatprep.subr.bf16.mxu0 0
        %1639 = vmatpush1.bf16.msra.mxu0 %v1617
        %1640 = vmatprep.subr.bf16.mxu0 0
        %1641 = vmatpush1.bf16.msra.mxu0 %v1615
        %1642 = vmatprep.subr.bf16.mxu0 0
        %1643 = vmatpush1.bf16.msra.mxu0 %v1613
        %1644 = vmatprep.subr.bf16.mxu0 0
        %1645 = vmatpush1.bf16.msra.mxu0 %v1611
        %1646 = vmatprep.subr.bf16.mxu0 0
        %1647 = vmatpush1.bf16.msra.mxu0 %v1609
        %1648 = vmatprep.subr.bf16.mxu0 0
        %1649 = vmatpush2.bf16.msra.mxu0 0
        %1650 = vmatprep.subr.bf16.mxu0 0
        %1651 = vmatpush2.bf16.msra.mxu0 0
        %1652 = vmatprep.subr.bf16.mxu0 0
        %1653 = vmatpush2.bf16.msra.mxu0 0
        %1654 = vmatprep.subr.bf16.mxu0 0
        %1655 = vmatpush2.bf16.msra.mxu0 0
        %1656 = vmatprep.subr.bf16.mxu0 0
        %1657 = vmatpush2.bf16.msra.mxu0 0
        %1658 = vmatprep.subr.bf16.mxu0 0
        %1659 = vmatpush2.bf16.msra.mxu0 0
        %1660 = vmatprep.subr.bf16.mxu0 0
        %1661 = vmatpush2.bf16.msra.mxu0 0
        %1662 = vmatprep.subr.bf16.mxu0 0
        %1663 = vmatpush2.bf16.msra.mxu0 0
        %1664 = vmatprep.mubr.bf16.mxu0 0
        %1665 = vmatmul.mubr.bf16.gmra.mxu0 %v1607
        %v1666 = vpop.f32.mrf.mxu0
        %v1667 = vadd.f32 0.0, %v1666
        %v1668 = vpop.f32.mrf.mxu0
        %v1669 = vpop.f32.mrf.mxu0
        %v1670 = vpop.f32.mrf.mxu0
        %1671 = vdwg.mxu0
        %v1672 = vpack.c.bf16 %v1667, %v1667
        %v1677 = vunpack.c.l.b16 %v1099
        %v1678 = vunpack.c.l.b16 %v1100
        %v1679 = vunpack.c.l.b16 %v1101
        %v1680 = vunpack.c.l.b16 %v1102
        %v1681 = vpack.c.b16 %v1678, %v1677
        %v1682 = vpack.c.b16 %v1680, %v1679
        %v1686 = vsel %vm1107, %v1672, 0
        %1688 = vmatprep.subr.bf16.mxu0 0
        %1689 = vmatpush1.bf16.msra.mxu0 0
        %1690 = vmatprep.subr.bf16.mxu0 0
        %1691 = vmatpush1.bf16.msra.mxu0 0
        %1692 = vmatprep.subr.bf16.mxu0 0
        %1693 = vmatpush1.bf16.msra.mxu0 0
        %1694 = vmatprep.subr.bf16.mxu0 0
        %1695 = vmatpush1.bf16.msra.mxu0 0
        %1696 = vmatprep.subr.bf16.mxu0 0
        %1697 = vmatpush1.bf16.msra.mxu0 0
        %1698 = vmatprep.subr.bf16.mxu0 0
        %1699 = vmatpush1.bf16.msra.mxu0 0
        %1700 = vmatprep.subr.bf16.mxu0 0
        %1701 = vmatpush1.bf16.msra.mxu0 %v1682
        %1702 = vmatprep.subr.bf16.mxu0 0
        %1703 = vmatpush1.bf16.msra.mxu0 %v1681
        %1704 = vmatprep.subr.bf16.mxu0 0
        %1705 = vmatpush2.bf16.msra.mxu0 0
        %1706 = vmatprep.subr.bf16.mxu0 0
        %1707 = vmatpush2.bf16.msra.mxu0 0
        %1708 = vmatprep.subr.bf16.mxu0 0
        %1709 = vmatpush2.bf16.msra.mxu0 0
        %1710 = vmatprep.subr.bf16.mxu0 0
        %1711 = vmatpush2.bf16.msra.mxu0 0
        %1712 = vmatprep.subr.bf16.mxu0 0
        %1713 = vmatpush2.bf16.msra.mxu0 0
        %1714 = vmatprep.subr.bf16.mxu0 0
        %1715 = vmatpush2.bf16.msra.mxu0 0
        %1716 = vmatprep.subr.bf16.mxu0 0
        %1717 = vmatpush2.bf16.msra.mxu0 0
        %1718 = vmatprep.subr.bf16.mxu0 0
        %1719 = vmatpush2.bf16.msra.mxu0 0
        %1720 = vmatprep.mubr.bf16.mxu0 0
        %1721 = vmatmul.mubr.bf16.gmra.mxu0 %v1686
        %v1722 = vpop.f32.mrf.mxu0
        %v1723 = vadd.f32 0.0, %v1722
        %v1724 = vpop.f32.mrf.mxu0
        %v1725 = vpop.f32.mrf.mxu0
        %v1726 = vpop.f32.mrf.mxu0
        %1727 = vdwg.mxu0
        %v1728 = vadd.f32 %v1508, %v1723
        %1729 = vrot.lane.b32.xlu0 %v1074, 32
        %v1730 = vpop.permute.xlu0 %1729
        %1731 = vrot.lane.b32.xlu0 %v1075, 32
        %v1732 = vpop.permute.xlu0 %1731
        %1733 = vrot.lane.b32.xlu0 %v1076, 32
        %v1734 = vpop.permute.xlu0 %1733
        %1735 = vrot.lane.b32.xlu0 %v1077, 32
        %v1736 = vpop.permute.xlu0 %1735
        %1737 = vrot.lane.b32.xlu0 %v1078, 32
        %v1738 = vpop.permute.xlu0 %1737
        %1739 = vrot.lane.b32.xlu0 %v1079, 32
        %v1740 = vpop.permute.xlu0 %1739
        %1741 = vrot.lane.b32.xlu0 %v1080, 32
        %v1742 = vpop.permute.xlu0 %1741
        %1743 = vrot.lane.b32.xlu0 %v1081, 32
        %v1744 = vpop.permute.xlu0 %1743
        %1745 = vrot.lane.b32.xlu0 %v1082, 32
        %v1746 = vpop.permute.xlu0 %1745
        %v1748 = vsel %vm1107, %v1730, 0
        %v1751 = vsel %vm1107, %v1732, 0
        %v1754 = vsel %vm1107, %v1734, 0
        %v1757 = vsel %vm1107, %v1736, 0
        %v1760 = vsel %vm1107, %v1738, 0
        %v1763 = vsel %vm1107, %v1740, 0
        %v1766 = vsel %vm1107, %v1742, 0
        %v1769 = vsel %vm1107, %v1744, 0
        %v1772 = vsel %vm1107, %v1746, 0
        %1774 = vmatprep.subr.bf16.mxu0 0
        %1775 = vmatpush1.bf16.xpose.msra.mxu0 %v1772
        %1776 = vmatprep.subr.bf16.mxu0 0
        %1777 = vmatpush1.bf16.xpose.msra.mxu0 %v1769
        %1778 = vmatprep.subr.bf16.mxu0 0
        %1779 = vmatpush1.bf16.xpose.msra.mxu0 %v1766
        %1780 = vmatprep.subr.bf16.mxu0 0
        %1781 = vmatpush1.bf16.xpose.msra.mxu0 %v1763
        %1782 = vmatprep.subr.bf16.mxu0 0
        %1783 = vmatpush1.bf16.xpose.msra.mxu0 %v1760
        %1784 = vmatprep.subr.bf16.mxu0 0
        %1785 = vmatpush1.bf16.xpose.msra.mxu0 %v1757
        %1786 = vmatprep.subr.bf16.mxu0 0
        %1787 = vmatpush1.bf16.xpose.msra.mxu0 %v1754
        %1788 = vmatprep.subr.bf16.mxu0 0
        %1789 = vmatpush1.bf16.xpose.msra.mxu0 %v1751
        %1790 = vmatprep.subr.bf16.mxu0 0
        %1791 = vmatpush2.bf16.xpose.msra.mxu0 0
        %1792 = vmatprep.subr.bf16.mxu0 0
        %1793 = vmatpush2.bf16.xpose.msra.mxu0 0
        %1794 = vmatprep.subr.bf16.mxu0 0
        %1795 = vmatpush2.bf16.xpose.msra.mxu0 0
        %1796 = vmatprep.subr.bf16.mxu0 0
        %1797 = vmatpush2.bf16.xpose.msra.mxu0 0
        %1798 = vmatprep.subr.bf16.mxu0 0
        %1799 = vmatpush2.bf16.xpose.msra.mxu0 0
        %1800 = vmatprep.subr.bf16.mxu0 0
        %1801 = vmatpush2.bf16.xpose.msra.mxu0 0
        %1802 = vmatprep.subr.bf16.mxu0 0
        %1803 = vmatpush2.bf16.xpose.msra.mxu0 0
        %1804 = vmatprep.subr.bf16.mxu0 0
        %1805 = vmatpush2.bf16.xpose.msra.mxu0 0
        %1806 = vmatprep.mubr.bf16.mxu0 0
        %1807 = vmatmul.mubr.bf16.gmra.mxu0 %v1748
        %v1808 = vpop.f32.mrf.mxu0
        %v1809 = vadd.f32 0.0, %v1808
        %v1810 = vpop.f32.mrf.mxu0
        %v1811 = vpop.f32.mrf.mxu0
        %v1812 = vpop.f32.mrf.mxu0
        %1813 = vdwg.mxu0
        %1814 = vmax.xlane.f32.xlu0 %v1809
        %v1815 = vpop.xlane.xlu0 %1814
        %v1816 = vsub.f32 %v1809, %v1815
        %v1817 = vmul.f32 %v1816, 1.442695
        %v1818 = vpow.pop %v1817
        %1819 = vadd.xlane.f32.xlu0 %v1818
        %v1820 = vpop.xlane.xlu0 %1819
        %v1821 = vrcp.pop %v1820
        %v1822 = vmul.f32 %v1818, %v1821
        %v1823 = vpack.c.bf16 %v1822, %v1822
        %1824 = vrot.lane.b32.xlu0 %v1083, 32
        %v1825 = vpop.permute.xlu0 %1824
        %1826 = vrot.lane.b32.xlu0 %v1084, 32
        %v1827 = vpop.permute.xlu0 %1826
        %1828 = vrot.lane.b32.xlu0 %v1085, 32
        %v1829 = vpop.permute.xlu0 %1828
        %1830 = vrot.lane.b32.xlu0 %v1086, 32
        %v1831 = vpop.permute.xlu0 %1830
        %1832 = vrot.lane.b32.xlu0 %v1087, 32
        %v1833 = vpop.permute.xlu0 %1832
        %1834 = vrot.lane.b32.xlu0 %v1088, 32
        %v1835 = vpop.permute.xlu0 %1834
        %1836 = vrot.lane.b32.xlu0 %v1089, 32
        %v1837 = vpop.permute.xlu0 %1836
        %1838 = vrot.lane.b32.xlu0 %v1090, 32
        %v1839 = vpop.permute.xlu0 %1838
        %1848 = vmatprep.subr.bf16.mxu0 0
        %1849 = vmatpush1.bf16.msra.mxu0 %v1839
        %1850 = vmatprep.subr.bf16.mxu0 0
        %1851 = vmatpush1.bf16.msra.mxu0 %v1837
        %1852 = vmatprep.subr.bf16.mxu0 0
        %1853 = vmatpush1.bf16.msra.mxu0 %v1835
        %1854 = vmatprep.subr.bf16.mxu0 0
        %1855 = vmatpush1.bf16.msra.mxu0 %v1833
        %1856 = vmatprep.subr.bf16.mxu0 0
        %1857 = vmatpush1.bf16.msra.mxu0 %v1831
        %1858 = vmatprep.subr.bf16.mxu0 0
        %1859 = vmatpush1.bf16.msra.mxu0 %v1829
        %1860 = vmatprep.subr.bf16.mxu0 0
        %1861 = vmatpush1.bf16.msra.mxu0 %v1827
        %1862 = vmatprep.subr.bf16.mxu0 0
        %1863 = vmatpush1.bf16.msra.mxu0 %v1825
        %1864 = vmatprep.subr.bf16.mxu0 0
        %1865 = vmatpush2.bf16.msra.mxu0 0
        %1866 = vmatprep.subr.bf16.mxu0 0
        %1867 = vmatpush2.bf16.msra.mxu0 0
        %1868 = vmatprep.subr.bf16.mxu0 0
        %1869 = vmatpush2.bf16.msra.mxu0 0
        %1870 = vmatprep.subr.bf16.mxu0 0
        %1871 = vmatpush2.bf16.msra.mxu0 0
        %1872 = vmatprep.subr.bf16.mxu0 0
        %1873 = vmatpush2.bf16.msra.mxu0 0
        %1874 = vmatprep.subr.bf16.mxu0 0
        %1875 = vmatpush2.bf16.msra.mxu0 0
        %1876 = vmatprep.subr.bf16.mxu0 0
        %1877 = vmatpush2.bf16.msra.mxu0 0
        %1878 = vmatprep.subr.bf16.mxu0 0
        %1879 = vmatpush2.bf16.msra.mxu0 0
        %1880 = vmatprep.mubr.bf16.mxu0 0
        %1881 = vmatmul.mubr.bf16.gmra.mxu0 %v1823
        %v1882 = vpop.f32.mrf.mxu0
        %v1883 = vadd.f32 0.0, %v1882
        %v1884 = vpop.f32.mrf.mxu0
        %v1885 = vpop.f32.mrf.mxu0
        %v1886 = vpop.f32.mrf.mxu0
        %1887 = vdwg.mxu0
        %v1888 = vpack.c.bf16 %v1883, %v1883
        %v1893 = vunpack.c.l.b16 %v1103
        %v1894 = vunpack.c.l.b16 %v1104
        %v1895 = vunpack.c.l.b16 %v1105
        %v1896 = vunpack.c.l.b16 %v1106
        %v1897 = vpack.c.b16 %v1894, %v1893
        %v1898 = vpack.c.b16 %v1896, %v1895
        %v1902 = vsel %vm1107, %v1888, 0
        %1904 = vmatprep.subr.bf16.mxu0 0
        %1905 = vmatpush1.bf16.msra.mxu0 0
        %1906 = vmatprep.subr.bf16.mxu0 0
        %1907 = vmatpush1.bf16.msra.mxu0 0
        %1908 = vmatprep.subr.bf16.mxu0 0
        %1909 = vmatpush1.bf16.msra.mxu0 0
        %1910 = vmatprep.subr.bf16.mxu0 0
        %1911 = vmatpush1.bf16.msra.mxu0 0
        %1912 = vmatprep.subr.bf16.mxu0 0
        %1913 = vmatpush1.bf16.msra.mxu0 0
        %1914 = vmatprep.subr.bf16.mxu0 0
        %1915 = vmatpush1.bf16.msra.mxu0 0
        %1916 = vmatprep.subr.bf16.mxu0 0
        %1917 = vmatpush1.bf16.msra.mxu0 %v1898
        %1918 = vmatprep.subr.bf16.mxu0 0
        %1919 = vmatpush1.bf16.msra.mxu0 %v1897
        %1920 = vmatprep.subr.bf16.mxu0 0
        %1921 = vmatpush2.bf16.msra.mxu0 0
        %1922 = vmatprep.subr.bf16.mxu0 0
        %1923 = vmatpush2.bf16.msra.mxu0 0
        %1924 = vmatprep.subr.bf16.mxu0 0
        %1925 = vmatpush2.bf16.msra.mxu0 0
        %1926 = vmatprep.subr.bf16.mxu0 0
        %1927 = vmatpush2.bf16.msra.mxu0 0
        %1928 = vmatprep.subr.bf16.mxu0 0
        %1929 = vmatpush2.bf16.msra.mxu0 0
        %1930 = vmatprep.subr.bf16.mxu0 0
        %1931 = vmatpush2.bf16.msra.mxu0 0
        %1932 = vmatprep.subr.bf16.mxu0 0
        %1933 = vmatpush2.bf16.msra.mxu0 0
        %1934 = vmatprep.subr.bf16.mxu0 0
        %1935 = vmatpush2.bf16.msra.mxu0 0
        %1936 = vmatprep.mubr.bf16.mxu0 0
        %1937 = vmatmul.mubr.bf16.gmra.mxu0 %v1902
        %v1938 = vpop.f32.mrf.mxu0
        %v1939 = vadd.f32 0.0, %v1938
        %v1940 = vpop.f32.mrf.mxu0
        %v1941 = vpop.f32.mrf.mxu0
        %v1942 = vpop.f32.mrf.mxu0
        %1943 = vdwg.mxu0
        %v1944 = vadd.f32 %v1728, %v1939
        %v1945 = vadd.f32 %v589, %v1944
        %v1946 = vmul.f32 %v1945, %v1945
        %1947 = vadd.xlane.f32.xlu0 %v1946
        %v1948 = vpop.xlane.xlu0 %1947
        %v1949 = vmul.f32 %v1948, %v609
        %v1950 = vadd.f32 %v1949, 1e-06
        %v1951 = vrsqrt.pop %v1950
        %v1952 = vmul.f32 %v1945, %v1951
        %v1953 = vlaneseq
        %v1954 = vshrl.u32 %v1953, 7
        %v1955 = vsub.s32 2, %v1954
        %v1956 = vrot.slane %v586, %v1955
        %v1957 = vmul.f32 %v1952, %v1956
        %v1958 = vpack.c.bf16 %v1957, %v1957
        %v1959 = vld [vmem:[%s505] sm:$0xff]
        %v1960 = vld [vmem:[%s505 + $0x8] sm:$0xff]
        %v1961 = vld [vmem:[%s505 + $0x10] sm:$0xff]
        %v1962 = vld [vmem:[%s505 + $0x18] sm:$0xff]
        %v1963 = vld [vmem:[%s505 + $0x20] sm:$0xff]
        %v1964 = vld [vmem:[%s505 + $0x28] sm:$0xff]
        %v1965 = vld [vmem:[%s505 + $0x30] sm:$0xff]
        %v1966 = vld [vmem:[%s505 + $0x38] sm:$0xff]
        %v1967 = vld [vmem:[%s505 + $0x40] sm:$0xff]
        %v1968 = vld [vmem:[%s505 + $0x48] sm:$0xff]
        %v1969 = vld [vmem:[%s505 + $0x50] sm:$0xff]
        %v1970 = vld [vmem:[%s505 + $0x58] sm:$0xff]
        %v1971 = vld [vmem:[%s505 + $0x60] sm:$0xff]
        %v1972 = vld [vmem:[%s505 + $0x68] sm:$0xff]
        %v1973 = vld [vmem:[%s505 + $0x70] sm:$0xff]
        %v1974 = vld [vmem:[%s505 + $0x78] sm:$0xff]
        %v1975 = vld [vmem:[%s505 + $0x80] sm:$0xff]
        %v1976 = vld [vmem:[%s505 + $0x88] sm:$0xff]
        %v1977 = vld [vmem:[%s505 + $0x90] sm:$0xff]
        %v1978 = vld [vmem:[%s505 + $0x98] sm:$0xff]
        %v1979 = vld [vmem:[%s505 + $0xa0] sm:$0xff]
        %v1980 = vld [vmem:[%s505 + $0xa8] sm:$0xff]
        %v1981 = vld [vmem:[%s505 + $0xb0] sm:$0xff]
        %v1982 = vld [vmem:[%s505 + $0xb8] sm:$0xff]
        %v1983 = vld [vmem:[%s505 + $0xc0] sm:$0xff]
        %v1984 = vld [vmem:[%s505 + $0xc8] sm:$0xff]
        %v1985 = vld [vmem:[%s505 + $0xd0] sm:$0xff]
        %v1986 = vld [vmem:[%s505 + $0xd8] sm:$0xff]
        %v1987 = vld [vmem:[%s505 + $0xe0] sm:$0xff]
        %v1988 = vld [vmem:[%s505 + $0xe8] sm:$0xff]
        %v1989 = vld [vmem:[%s505 + $0xf0] sm:$0xff]
        %v1990 = vld [vmem:[%s505 + $0xf8] sm:$0xff]
        %v1991 = vld [vmem:[%s505 + $0x100] sm:$0xff]
        %v1992 = vld [vmem:[%s505 + $0x108] sm:$0xff]
        %v1993 = vld [vmem:[%s505 + $0x110] sm:$0xff]
        %v1994 = vld [vmem:[%s505 + $0x118] sm:$0xff]
        %v1995 = vld [vmem:[%s505 + $0x120] sm:$0xff]
        %v1996 = vld [vmem:[%s505 + $0x128] sm:$0xff]
        %v1997 = vld [vmem:[%s505 + $0x130] sm:$0xff]
        %v1998 = vld [vmem:[%s505 + $0x138] sm:$0xff]
        %v1999 = vld [vmem:[%s505 + $0x140] sm:$0xff]
        %v2000 = vld [vmem:[%s505 + $0x148] sm:$0xff]
        %v2001 = vld [vmem:[%s505 + $0x150] sm:$0xff]
        %v2002 = vld [vmem:[%s505 + $0x158] sm:$0xff]
        %v2003 = vld [vmem:[%s505 + $0x160] sm:$0xff]
        %v2004 = vld [vmem:[%s505 + $0x168] sm:$0xff]
        %v2005 = vld [vmem:[%s505 + $0x170] sm:$0xff]
        %v2006 = vld [vmem:[%s505 + $0x178] sm:$0xff]
        %v2007 = vld [vmem:[%s505 + $0x180] sm:$0xff]
        %v2008 = vld [vmem:[%s505 + $0x188] sm:$0xff]
        %v2009 = vld [vmem:[%s505 + $0x190] sm:$0xff]
        %v2010 = vld [vmem:[%s505 + $0x198] sm:$0xff]
        %v2011 = vld [vmem:[%s505 + $0x1a0] sm:$0xff]
        %v2012 = vld [vmem:[%s505 + $0x1a8] sm:$0xff]
        %v2013 = vld [vmem:[%s505 + $0x1b0] sm:$0xff]
        %v2014 = vld [vmem:[%s505 + $0x1b8] sm:$0xff]
        %v2015 = vld [vmem:[%s505 + $0x1c0] sm:$0xff]
        %v2016 = vld [vmem:[%s505 + $0x1c8] sm:$0xff]
        %v2017 = vld [vmem:[%s505 + $0x1d0] sm:$0xff]
        %v2018 = vld [vmem:[%s505 + $0x1d8] sm:$0xff]
        %v2019 = vld [vmem:[%s505 + $0x1e0] sm:$0xff]
        %v2020 = vld [vmem:[%s505 + $0x1e8] sm:$0xff]
        %v2021 = vld [vmem:[%s505 + $0x1f0] sm:$0xff]
        %v2022 = vld [vmem:[%s505 + $0x1f8] sm:$0xff]
        %v2087 = vunpack.c.l.b16 %v1959
        %v2088 = vunpack.c.h.b16 %v1959
        %v2089 = vunpack.c.l.b16 %v1960
        %v2090 = vunpack.c.h.b16 %v1960
        %v2091 = vunpack.c.l.b16 %v1961
        %v2092 = vunpack.c.h.b16 %v1961
        %v2093 = vunpack.c.l.b16 %v1962
        %v2094 = vunpack.c.h.b16 %v1962
        %v2095 = vunpack.c.l.b16 %v1963
        %v2096 = vunpack.c.h.b16 %v1963
        %v2097 = vunpack.c.l.b16 %v1964
        %v2098 = vunpack.c.h.b16 %v1964
        %v2099 = vunpack.c.l.b16 %v1965
        %v2100 = vunpack.c.h.b16 %v1965
        %v2101 = vunpack.c.l.b16 %v1966
        %v2102 = vunpack.c.h.b16 %v1966
        %v2103 = vunpack.c.l.b16 %v1967
        %v2104 = vunpack.c.h.b16 %v1967
        %v2105 = vunpack.c.l.b16 %v1968
        %v2106 = vunpack.c.h.b16 %v1968
        %v2107 = vunpack.c.l.b16 %v1969
        %v2108 = vunpack.c.h.b16 %v1969
        %v2109 = vunpack.c.l.b16 %v1970
        %v2110 = vunpack.c.h.b16 %v1970
        %v2111 = vunpack.c.l.b16 %v1971
        %v2112 = vunpack.c.h.b16 %v1971
        %v2113 = vunpack.c.l.b16 %v1972
        %v2114 = vunpack.c.h.b16 %v1972
        %v2115 = vunpack.c.l.b16 %v1973
        %v2116 = vunpack.c.h.b16 %v1973
        %v2117 = vunpack.c.l.b16 %v1974
        %v2118 = vunpack.c.h.b16 %v1974
        %v2119 = vunpack.c.l.b16 %v1975
        %v2120 = vunpack.c.h.b16 %v1975
        %v2121 = vunpack.c.l.b16 %v1976
        %v2122 = vunpack.c.h.b16 %v1976
        %v2123 = vunpack.c.l.b16 %v1977
        %v2124 = vunpack.c.h.b16 %v1977
        %v2125 = vunpack.c.l.b16 %v1978
        %v2126 = vunpack.c.h.b16 %v1978
        %v2127 = vunpack.c.l.b16 %v1979
        %v2128 = vunpack.c.h.b16 %v1979
        %v2129 = vunpack.c.l.b16 %v1980
        %v2130 = vunpack.c.h.b16 %v1980
        %v2131 = vunpack.c.l.b16 %v1981
        %v2132 = vunpack.c.h.b16 %v1981
        %v2133 = vunpack.c.l.b16 %v1982
        %v2134 = vunpack.c.h.b16 %v1982
        %v2135 = vunpack.c.l.b16 %v1983
        %v2136 = vunpack.c.h.b16 %v1983
        %v2137 = vunpack.c.l.b16 %v1984
        %v2138 = vunpack.c.h.b16 %v1984
        %v2139 = vunpack.c.l.b16 %v1985
        %v2140 = vunpack.c.h.b16 %v1985
        %v2141 = vunpack.c.l.b16 %v1986
        %v2142 = vunpack.c.h.b16 %v1986
        %v2143 = vunpack.c.l.b16 %v1987
        %v2144 = vunpack.c.h.b16 %v1987
        %v2145 = vunpack.c.l.b16 %v1988
        %v2146 = vunpack.c.h.b16 %v1988
        %v2147 = vunpack.c.l.b16 %v1989
        %v2148 = vunpack.c.h.b16 %v1989
        %v2149 = vunpack.c.l.b16 %v1990
        %v2150 = vunpack.c.h.b16 %v1990
        %v2151 = vunpack.c.l.b16 %v1991
        %v2152 = vunpack.c.h.b16 %v1991
        %v2153 = vunpack.c.l.b16 %v1992
        %v2154 = vunpack.c.h.b16 %v1992
        %v2155 = vunpack.c.l.b16 %v1993
        %v2156 = vunpack.c.h.b16 %v1993
        %v2157 = vunpack.c.l.b16 %v1994
        %v2158 = vunpack.c.h.b16 %v1994
        %v2159 = vunpack.c.l.b16 %v1995
        %v2160 = vunpack.c.h.b16 %v1995
        %v2161 = vunpack.c.l.b16 %v1996
        %v2162 = vunpack.c.h.b16 %v1996
        %v2163 = vunpack.c.l.b16 %v1997
        %v2164 = vunpack.c.h.b16 %v1997
        %v2165 = vunpack.c.l.b16 %v1998
        %v2166 = vunpack.c.h.b16 %v1998
        %v2167 = vunpack.c.l.b16 %v1999
        %v2168 = vunpack.c.h.b16 %v1999
        %v2169 = vunpack.c.l.b16 %v2000
        %v2170 = vunpack.c.h.b16 %v2000
        %v2171 = vunpack.c.l.b16 %v2001
        %v2172 = vunpack.c.h.b16 %v2001
        %v2173 = vunpack.c.l.b16 %v2002
        %v2174 = vunpack.c.h.b16 %v2002
        %v2175 = vunpack.c.l.b16 %v2003
        %v2176 = vunpack.c.h.b16 %v2003
        %v2177 = vunpack.c.l.b16 %v2004
        %v2178 = vunpack.c.h.b16 %v2004
        %v2179 = vunpack.c.l.b16 %v2005
        %v2180 = vunpack.c.h.b16 %v2005
        %v2181 = vunpack.c.l.b16 %v2006
        %v2182 = vunpack.c.h.b16 %v2006
        %v2183 = vunpack.c.l.b16 %v2007
        %v2184 = vunpack.c.h.b16 %v2007
        %v2185 = vunpack.c.l.b16 %v2008
        %v2186 = vunpack.c.h.b16 %v2008
        %v2187 = vunpack.c.l.b16 %v2009
        %v2188 = vunpack.c.h.b16 %v2009
        %v2189 = vunpack.c.l.b16 %v2010
        %v2190 = vunpack.c.h.b16 %v2010
        %v2191 = vunpack.c.l.b16 %v2011
        %v2192 = vunpack.c.h.b16 %v2011
        %v2193 = vunpack.c.l.b16 %v2012
        %v2194 = vunpack.c.h.b16 %v2012
        %v2195 = vunpack.c.l.b16 %v2013
        %v2196 = vunpack.c.h.b16 %v2013
        %v2197 = vunpack.c.l.b16 %v2014
        %v2198 = vunpack.c.h.b16 %v2014
        %v2199 = vunpack.c.l.b16 %v2015
        %v2200 = vunpack.c.h.b16 %v2015
        %v2201 = vunpack.c.l.b16 %v2016
        %v2202 = vunpack.c.h.b16 %v2016
        %v2203 = vunpack.c.l.b16 %v2017
        %v2204 = vunpack.c.h.b16 %v2017
        %v2205 = vunpack.c.l.b16 %v2018
        %v2206 = vunpack.c.h.b16 %v2018
        %v2207 = vunpack.c.l.b16 %v2019
        %v2208 = vunpack.c.h.b16 %v2019
        %v2209 = vunpack.c.l.b16 %v2020
        %v2210 = vunpack.c.h.b16 %v2020
        %v2211 = vunpack.c.l.b16 %v2021
        %v2212 = vunpack.c.h.b16 %v2021
        %v2213 = vunpack.c.l.b16 %v2022
        %v2214 = vunpack.c.h.b16 %v2022
        %v2215 = vpack.c.b16 %v2095, %v2087
        %v2216 = vpack.c.b16 %v2096, %v2088
        %v2217 = vpack.c.b16 %v2097, %v2089
        %v2218 = vpack.c.b16 %v2098, %v2090
        %v2219 = vpack.c.b16 %v2099, %v2091
        %v2220 = vpack.c.b16 %v2100, %v2092
        %v2221 = vpack.c.b16 %v2101, %v2093
        %v2222 = vpack.c.b16 %v2102, %v2094
        %v2223 = vpack.c.b16 %v2111, %v2103
        %v2224 = vpack.c.b16 %v2112, %v2104
        %v2225 = vpack.c.b16 %v2113, %v2105
        %v2226 = vpack.c.b16 %v2114, %v2106
        %v2227 = vpack.c.b16 %v2115, %v2107
        %v2228 = vpack.c.b16 %v2116, %v2108
        %v2229 = vpack.c.b16 %v2117, %v2109
        %v2230 = vpack.c.b16 %v2118, %v2110
        %v2231 = vpack.c.b16 %v2127, %v2119
        %v2232 = vpack.c.b16 %v2128, %v2120
        %v2233 = vpack.c.b16 %v2129, %v2121
        %v2234 = vpack.c.b16 %v2130, %v2122
        %v2235 = vpack.c.b16 %v2131, %v2123
        %v2236 = vpack.c.b16 %v2132, %v2124
        %v2237 = vpack.c.b16 %v2133, %v2125
        %v2238 = vpack.c.b16 %v2134, %v2126
        %v2239 = vpack.c.b16 %v2143, %v2135
        %v2240 = vpack.c.b16 %v2144, %v2136
        %v2241 = vpack.c.b16 %v2145, %v2137
        %v2242 = vpack.c.b16 %v2146, %v2138
        %v2243 = vpack.c.b16 %v2147, %v2139
        %v2244 = vpack.c.b16 %v2148, %v2140
        %v2245 = vpack.c.b16 %v2149, %v2141
        %v2246 = vpack.c.b16 %v2150, %v2142
        %v2247 = vpack.c.b16 %v2159, %v2151
        %v2248 = vpack.c.b16 %v2160, %v2152
        %v2249 = vpack.c.b16 %v2161, %v2153
        %v2250 = vpack.c.b16 %v2162, %v2154
        %v2251 = vpack.c.b16 %v2163, %v2155
        %v2252 = vpack.c.b16 %v2164, %v2156
        %v2253 = vpack.c.b16 %v2165, %v2157
        %v2254 = vpack.c.b16 %v2166, %v2158
        %v2255 = vpack.c.b16 %v2175, %v2167
        %v2256 = vpack.c.b16 %v2176, %v2168
        %v2257 = vpack.c.b16 %v2177, %v2169
        %v2258 = vpack.c.b16 %v2178, %v2170
        %v2259 = vpack.c.b16 %v2179, %v2171
        %v2260 = vpack.c.b16 %v2180, %v2172
        %v2261 = vpack.c.b16 %v2181, %v2173
        %v2262 = vpack.c.b16 %v2182, %v2174
        %v2263 = vpack.c.b16 %v2191, %v2183
        %v2264 = vpack.c.b16 %v2192, %v2184
        %v2265 = vpack.c.b16 %v2193, %v2185
        %v2266 = vpack.c.b16 %v2194, %v2186
        %v2267 = vpack.c.b16 %v2195, %v2187
        %v2268 = vpack.c.b16 %v2196, %v2188
        %v2269 = vpack.c.b16 %v2197, %v2189
        %v2270 = vpack.c.b16 %v2198, %v2190
        %v2271 = vpack.c.b16 %v2207, %v2199
        %v2272 = vpack.c.b16 %v2208, %v2200
        %v2273 = vpack.c.b16 %v2209, %v2201
        %v2274 = vpack.c.b16 %v2210, %v2202
        %v2275 = vpack.c.b16 %v2211, %v2203
        %v2276 = vpack.c.b16 %v2212, %v2204
        %v2277 = vpack.c.b16 %v2213, %v2205
        %v2278 = vpack.c.b16 %v2214, %v2206
        %2343 = vmatprep.subr.bf16.mxu0 %v2272
        %2344 = vmatpush1.bf16.msra.mxu0 %v2271
        %2345 = vmatprep.subr.bf16.mxu0 %v2264
        %2346 = vmatpush1.bf16.msra.mxu0 %v2263
        %2347 = vmatprep.subr.bf16.mxu0 %v2256
        %2348 = vmatpush1.bf16.msra.mxu0 %v2255
        %2349 = vmatprep.subr.bf16.mxu0 %v2248
        %2350 = vmatpush1.bf16.msra.mxu0 %v2247
        %2351 = vmatprep.subr.bf16.mxu0 %v2240
        %2352 = vmatpush1.bf16.msra.mxu0 %v2239
        %2353 = vmatprep.subr.bf16.mxu0 %v2232
        %2354 = vmatpush1.bf16.msra.mxu0 %v2231
        %2355 = vmatprep.subr.bf16.mxu0 %v2224
        %2356 = vmatpush1.bf16.msra.mxu0 %v2223
        %2357 = vmatprep.subr.bf16.mxu0 %v2216
        %2358 = vmatpush1.bf16.msra.mxu0 %v2215
        %2359 = vmatprep.subr.bf16.mxu0 0
        %2360 = vmatpush2.bf16.msra.mxu0 0
        %2361 = vmatprep.subr.bf16.mxu0 0
        %2362 = vmatpush2.bf16.msra.mxu0 0
        %2363 = vmatprep.subr.bf16.mxu0 0
        %2364 = vmatpush2.bf16.msra.mxu0 0
        %2365 = vmatprep.subr.bf16.mxu0 0
        %2366 = vmatpush2.bf16.msra.mxu0 0
        %2367 = vmatprep.subr.bf16.mxu0 0
        %2368 = vmatpush2.bf16.msra.mxu0 0
        %2369 = vmatprep.subr.bf16.mxu0 0
        %2370 = vmatpush2.bf16.msra.mxu0 0
        %2371 = vmatprep.subr.bf16.mxu0 0
        %2372 = vmatpush2.bf16.msra.mxu0 0
        %2373 = vmatprep.subr.bf16.mxu0 0
        %2374 = vmatpush2.bf16.msra.mxu0 0
        %2375 = vmatprep.mubr.bf16.mxu0 0
        %2376 = vmatmul.mubr.bf16.gmra.mxu0 %v1958
        %v2377 = vpop.f32.mrf.mxu0
        %v2378 = vadd.f32 0.0, %v2377
        %v2379 = vpop.f32.mrf.mxu0
        %v2380 = vadd.f32 0.0, %v2379
        %v2381 = vpop.f32.mrf.mxu0
        %v2382 = vpop.f32.mrf.mxu0
        %2383 = vdwg.mxu0
        %2384 = vmatprep.subr.bf16.mxu0 %v2274
        %2385 = vmatpush1.bf16.msra.mxu0 %v2273
        %2386 = vmatprep.subr.bf16.mxu0 %v2266
        %2387 = vmatpush1.bf16.msra.mxu0 %v2265
        %2388 = vmatprep.subr.bf16.mxu0 %v2258
        %2389 = vmatpush1.bf16.msra.mxu0 %v2257
        %2390 = vmatprep.subr.bf16.mxu0 %v2250
        %2391 = vmatpush1.bf16.msra.mxu0 %v2249
        %2392 = vmatprep.subr.bf16.mxu0 %v2242
        %2393 = vmatpush1.bf16.msra.mxu0 %v2241
        %2394 = vmatprep.subr.bf16.mxu0 %v2234
        %2395 = vmatpush1.bf16.msra.mxu0 %v2233
        %2396 = vmatprep.subr.bf16.mxu0 %v2226
        %2397 = vmatpush1.bf16.msra.mxu0 %v2225
        %2398 = vmatprep.subr.bf16.mxu0 %v2218
        %2399 = vmatpush1.bf16.msra.mxu0 %v2217
        %2400 = vmatprep.subr.bf16.mxu0 0
        %2401 = vmatpush2.bf16.msra.mxu0 0
        %2402 = vmatprep.subr.bf16.mxu0 0
        %2403 = vmatpush2.bf16.msra.mxu0 0
        %2404 = vmatprep.subr.bf16.mxu0 0
        %2405 = vmatpush2.bf16.msra.mxu0 0
        %2406 = vmatprep.subr.bf16.mxu0 0
        %2407 = vmatpush2.bf16.msra.mxu0 0
        %2408 = vmatprep.subr.bf16.mxu0 0
        %2409 = vmatpush2.bf16.msra.mxu0 0
        %2410 = vmatprep.subr.bf16.mxu0 0
        %2411 = vmatpush2.bf16.msra.mxu0 0
        %2412 = vmatprep.subr.bf16.mxu0 0
        %2413 = vmatpush2.bf16.msra.mxu0 0
        %2414 = vmatprep.subr.bf16.mxu0 0
        %2415 = vmatpush2.bf16.msra.mxu0 0
        %2416 = vmatprep.mubr.bf16.mxu0 0
        %2417 = vmatmul.mubr.bf16.gmra.mxu0 %v1958
        %v2418 = vpop.f32.mrf.mxu0
        %v2419 = vadd.f32 0.0, %v2418
        %v2420 = vpop.f32.mrf.mxu0
        %v2421 = vadd.f32 0.0, %v2420
        %v2422 = vpop.f32.mrf.mxu0
        %v2423 = vpop.f32.mrf.mxu0
        %2424 = vdwg.mxu0
        %2425 = vmatprep.subr.bf16.mxu0 %v2276
        %2426 = vmatpush1.bf16.msra.mxu0 %v2275
        %2427 = vmatprep.subr.bf16.mxu0 %v2268
        %2428 = vmatpush1.bf16.msra.mxu0 %v2267
        %2429 = vmatprep.subr.bf16.mxu0 %v2260
        %2430 = vmatpush1.bf16.msra.mxu0 %v2259
        %2431 = vmatprep.subr.bf16.mxu0 %v2252
        %2432 = vmatpush1.bf16.msra.mxu0 %v2251
        %2433 = vmatprep.subr.bf16.mxu0 %v2244
        %2434 = vmatpush1.bf16.msra.mxu0 %v2243
        %2435 = vmatprep.subr.bf16.mxu0 %v2236
        %2436 = vmatpush1.bf16.msra.mxu0 %v2235
        %2437 = vmatprep.subr.bf16.mxu0 %v2228
        %2438 = vmatpush1.bf16.msra.mxu0 %v2227
        %2439 = vmatprep.subr.bf16.mxu0 %v2220
        %2440 = vmatpush1.bf16.msra.mxu0 %v2219
        %2441 = vmatprep.subr.bf16.mxu0 0
        %2442 = vmatpush2.bf16.msra.mxu0 0
        %2443 = vmatprep.subr.bf16.mxu0 0
        %2444 = vmatpush2.bf16.msra.mxu0 0
        %2445 = vmatprep.subr.bf16.mxu0 0
        %2446 = vmatpush2.bf16.msra.mxu0 0
        %2447 = vmatprep.subr.bf16.mxu0 0
        %2448 = vmatpush2.bf16.msra.mxu0 0
        %2449 = vmatprep.subr.bf16.mxu0 0
        %2450 = vmatpush2.bf16.msra.mxu0 0
        %2451 = vmatprep.subr.bf16.mxu0 0
        %2452 = vmatpush2.bf16.msra.mxu0 0
        %2453 = vmatprep.subr.bf16.mxu0 0
        %2454 = vmatpush2.bf16.msra.mxu0 0
        %2455 = vmatprep.subr.bf16.mxu0 0
        %2456 = vmatpush2.bf16.msra.mxu0 0
        %2457 = vmatprep.mubr.bf16.mxu0 0
        %2458 = vmatmul.mubr.bf16.gmra.mxu0 %v1958
        %v2459 = vpop.f32.mrf.mxu0
        %v2460 = vadd.f32 0.0, %v2459
        %v2461 = vpop.f32.mrf.mxu0
        %v2462 = vadd.f32 0.0, %v2461
        %v2463 = vpop.f32.mrf.mxu0
        %v2464 = vpop.f32.mrf.mxu0
        %2465 = vdwg.mxu0
        %2466 = vmatprep.subr.bf16.mxu0 %v2278
        %2467 = vmatpush1.bf16.msra.mxu0 %v2277
        %2468 = vmatprep.subr.bf16.mxu0 %v2270
        %2469 = vmatpush1.bf16.msra.mxu0 %v2269
        %2470 = vmatprep.subr.bf16.mxu0 %v2262
        %2471 = vmatpush1.bf16.msra.mxu0 %v2261
        %2472 = vmatprep.subr.bf16.mxu0 %v2254
        %2473 = vmatpush1.bf16.msra.mxu0 %v2253
        %2474 = vmatprep.subr.bf16.mxu0 %v2246
        %2475 = vmatpush1.bf16.msra.mxu0 %v2245
        %2476 = vmatprep.subr.bf16.mxu0 %v2238
        %2477 = vmatpush1.bf16.msra.mxu0 %v2237
        %2478 = vmatprep.subr.bf16.mxu0 %v2230
        %2479 = vmatpush1.bf16.msra.mxu0 %v2229
        %2480 = vmatprep.subr.bf16.mxu0 %v2222
        %2481 = vmatpush1.bf16.msra.mxu0 %v2221
        %2482 = vmatprep.subr.bf16.mxu0 0
        %2483 = vmatpush2.bf16.msra.mxu0 0
        %2484 = vmatprep.subr.bf16.mxu0 0
        %2485 = vmatpush2.bf16.msra.mxu0 0
        %2486 = vmatprep.subr.bf16.mxu0 0
        %2487 = vmatpush2.bf16.msra.mxu0 0
        %2488 = vmatprep.subr.bf16.mxu0 0
        %2489 = vmatpush2.bf16.msra.mxu0 0
        %2490 = vmatprep.subr.bf16.mxu0 0
        %2491 = vmatpush2.bf16.msra.mxu0 0
        %2492 = vmatprep.subr.bf16.mxu0 0
        %2493 = vmatpush2.bf16.msra.mxu0 0
        %2494 = vmatprep.subr.bf16.mxu0 0
        %2495 = vmatpush2.bf16.msra.mxu0 0
        %2496 = vmatprep.subr.bf16.mxu0 0
        %2497 = vmatpush2.bf16.msra.mxu0 0
        %2498 = vmatprep.mubr.bf16.mxu0 0
        %2499 = vmatmul.mubr.bf16.gmra.mxu0 %v1958
        %v2500 = vpop.f32.mrf.mxu0
        %v2501 = vadd.f32 0.0, %v2500
        %v2502 = vpop.f32.mrf.mxu0
        %v2503 = vadd.f32 0.0, %v2502
        %v2504 = vpop.f32.mrf.mxu0
        %v2505 = vpop.f32.mrf.mxu0
        %2506 = vdwg.mxu0
        %v2507 = vxor.u32 %v2378, 2147483648
        %v2508 = vxor.u32 %v2380, 2147483648
        %v2509 = vxor.u32 %v2419, 2147483648
        %v2510 = vxor.u32 %v2421, 2147483648
        %v2511 = vmul.f32 %v2507, 1.442695
        %v2512 = vpow.pop %v2511
        %v2513 = vmul.f32 %v2508, 1.442695
        %v2514 = vpow.pop %v2513
        %v2515 = vmul.f32 %v2509, 1.442695
        %v2516 = vpow.pop %v2515
        %v2517 = vmul.f32 %v2510, 1.442695
        %v2518 = vpow.pop %v2517
        %v2519 = vadd.f32 %v2512, 1.0
        %v2520 = vadd.f32 %v2514, 1.0
        %v2521 = vadd.f32 %v2516, 1.0
        %v2522 = vadd.f32 %v2518, 1.0
        %v2523 = vrcp.pop %v2519
        %v2524 = vmul.f32 1.0, %v2523
        %v2525 = vrcp.pop %v2520
        %v2526 = vmul.f32 1.0, %v2525
        %v2527 = vrcp.pop %v2521
        %v2528 = vmul.f32 1.0, %v2527
        %v2529 = vrcp.pop %v2522
        %v2530 = vmul.f32 1.0, %v2529
        %v2531 = vmul.f32 %v2378, %v2524
        %v2532 = vmul.f32 %v2380, %v2526
        %v2533 = vmul.f32 %v2419, %v2528
        %v2534 = vmul.f32 %v2421, %v2530
        %v2535 = vmul.f32 %v2531, %v2460
        %v2536 = vmul.f32 %v2532, %v2462
        %v2537 = vmul.f32 %v2533, %v2501
        %v2538 = vmul.f32 %v2534, %v2503
        %v2539 = vpack.c.bf16 %v2535, %v2535
        %v2540 = vpack.c.bf16 %v2536, %v2536
        %v2541 = vpack.c.bf16 %v2537, %v2537
        %v2542 = vpack.c.bf16 %v2538, %v2538
        %v2543 = vld [vmem:[%s514] sm:$0xf]
        %v2544 = vld [vmem:[%s514 + $0x4] sm:$0xf]
        %v2545 = vld [vmem:[%s514 + $0x8] sm:$0xf]
        %v2546 = vld [vmem:[%s514 + $0xc] sm:$0xf]
        %v2547 = vld [vmem:[%s514 + $0x10] sm:$0xf]
        %v2548 = vld [vmem:[%s514 + $0x14] sm:$0xf]
        %v2549 = vld [vmem:[%s514 + $0x18] sm:$0xf]
        %v2550 = vld [vmem:[%s514 + $0x1c] sm:$0xf]
        %v2551 = vld [vmem:[%s514 + $0x20] sm:$0xf]
        %v2552 = vld [vmem:[%s514 + $0x24] sm:$0xf]
        %v2553 = vld [vmem:[%s514 + $0x28] sm:$0xf]
        %v2554 = vld [vmem:[%s514 + $0x2c] sm:$0xf]
        %v2555 = vld [vmem:[%s514 + $0x30] sm:$0xf]
        %v2556 = vld [vmem:[%s514 + $0x34] sm:$0xf]
        %v2557 = vld [vmem:[%s514 + $0x38] sm:$0xf]
        %v2558 = vld [vmem:[%s514 + $0x3c] sm:$0xf]
        %v2559 = vld [vmem:[%s514 + $0x40] sm:$0xf]
        %v2560 = vld [vmem:[%s514 + $0x44] sm:$0xf]
        %v2561 = vld [vmem:[%s514 + $0x48] sm:$0xf]
        %v2562 = vld [vmem:[%s514 + $0x4c] sm:$0xf]
        %v2563 = vld [vmem:[%s514 + $0x50] sm:$0xf]
        %v2564 = vld [vmem:[%s514 + $0x54] sm:$0xf]
        %v2565 = vld [vmem:[%s514 + $0x58] sm:$0xf]
        %v2566 = vld [vmem:[%s514 + $0x5c] sm:$0xf]
        %v2567 = vld [vmem:[%s514 + $0x60] sm:$0xf]
        %v2568 = vld [vmem:[%s514 + $0x64] sm:$0xf]
        %v2569 = vld [vmem:[%s514 + $0x68] sm:$0xf]
        %v2570 = vld [vmem:[%s514 + $0x6c] sm:$0xf]
        %v2571 = vld [vmem:[%s514 + $0x70] sm:$0xf]
        %v2572 = vld [vmem:[%s514 + $0x74] sm:$0xf]
        %v2573 = vld [vmem:[%s514 + $0x78] sm:$0xf]
        %v2574 = vld [vmem:[%s514 + $0x7c] sm:$0xf]
        %v2575 = vld [vmem:[%s514 + $0x80] sm:$0xf]
        %v2576 = vld [vmem:[%s514 + $0x84] sm:$0xf]
        %v2577 = vld [vmem:[%s514 + $0x88] sm:$0xf]
        %v2578 = vld [vmem:[%s514 + $0x8c] sm:$0xf]
        %v2579 = vld [vmem:[%s514 + $0x90] sm:$0xf]
        %v2580 = vld [vmem:[%s514 + $0x94] sm:$0xf]
        %v2581 = vld [vmem:[%s514 + $0x98] sm:$0xf]
        %v2582 = vld [vmem:[%s514 + $0x9c] sm:$0xf]
        %v2583 = vld [vmem:[%s514 + $0xa0] sm:$0xf]
        %v2584 = vld [vmem:[%s514 + $0xa4] sm:$0xf]
        %v2585 = vld [vmem:[%s514 + $0xa8] sm:$0xf]
        %v2586 = vld [vmem:[%s514 + $0xac] sm:$0xf]
        %v2587 = vld [vmem:[%s514 + $0xb0] sm:$0xf]
        %v2588 = vld [vmem:[%s514 + $0xb4] sm:$0xf]
        %v2589 = vld [vmem:[%s514 + $0xb8] sm:$0xf]
        %v2590 = vld [vmem:[%s514 + $0xbc] sm:$0xf]
        %v2591 = vld [vmem:[%s514 + $0xc0] sm:$0xf]
        %v2592 = vld [vmem:[%s514 + $0xc4] sm:$0xf]
        %v2593 = vld [vmem:[%s514 + $0xc8] sm:$0xf]
        %v2594 = vld [vmem:[%s514 + $0xcc] sm:$0xf]
        %v2595 = vld [vmem:[%s514 + $0xd0] sm:$0xf]
        %v2596 = vld [vmem:[%s514 + $0xd4] sm:$0xf]
        %v2597 = vld [vmem:[%s514 + $0xd8] sm:$0xf]
        %v2598 = vld [vmem:[%s514 + $0xdc] sm:$0xf]
        %v2599 = vld [vmem:[%s514 + $0xe0] sm:$0xf]
        %v2600 = vld [vmem:[%s514 + $0xe4] sm:$0xf]
        %v2601 = vld [vmem:[%s514 + $0xe8] sm:$0xf]
        %v2602 = vld [vmem:[%s514 + $0xec] sm:$0xf]
        %v2603 = vld [vmem:[%s514 + $0xf0] sm:$0xf]
        %v2604 = vld [vmem:[%s514 + $0xf4] sm:$0xf]
        %v2605 = vld [vmem:[%s514 + $0xf8] sm:$0xf]
        %v2606 = vld [vmem:[%s514 + $0xfc] sm:$0xf]
        %v2671 = vunpack.c.l.b16 %v2543
        %v2672 = vunpack.c.l.b16 %v2544
        %v2673 = vunpack.c.l.b16 %v2545
        %v2674 = vunpack.c.l.b16 %v2546
        %v2675 = vunpack.c.l.b16 %v2547
        %v2676 = vunpack.c.l.b16 %v2548
        %v2677 = vunpack.c.l.b16 %v2549
        %v2678 = vunpack.c.l.b16 %v2550
        %v2679 = vunpack.c.l.b16 %v2551
        %v2680 = vunpack.c.l.b16 %v2552
        %v2681 = vunpack.c.l.b16 %v2553
        %v2682 = vunpack.c.l.b16 %v2554
        %v2683 = vunpack.c.l.b16 %v2555
        %v2684 = vunpack.c.l.b16 %v2556
        %v2685 = vunpack.c.l.b16 %v2557
        %v2686 = vunpack.c.l.b16 %v2558
        %v2687 = vunpack.c.l.b16 %v2559
        %v2688 = vunpack.c.l.b16 %v2560
        %v2689 = vunpack.c.l.b16 %v2561
        %v2690 = vunpack.c.l.b16 %v2562
        %v2691 = vunpack.c.l.b16 %v2563
        %v2692 = vunpack.c.l.b16 %v2564
        %v2693 = vunpack.c.l.b16 %v2565
        %v2694 = vunpack.c.l.b16 %v2566
        %v2695 = vunpack.c.l.b16 %v2567
        %v2696 = vunpack.c.l.b16 %v2568
        %v2697 = vunpack.c.l.b16 %v2569
        %v2698 = vunpack.c.l.b16 %v2570
        %v2699 = vunpack.c.l.b16 %v2571
        %v2700 = vunpack.c.l.b16 %v2572
        %v2701 = vunpack.c.l.b16 %v2573
        %v2702 = vunpack.c.l.b16 %v2574
        %v2703 = vunpack.c.l.b16 %v2575
        %v2704 = vunpack.c.l.b16 %v2576
        %v2705 = vunpack.c.l.b16 %v2577
        %v2706 = vunpack.c.l.b16 %v2578
        %v2707 = vunpack.c.l.b16 %v2579
        %v2708 = vunpack.c.l.b16 %v2580
        %v2709 = vunpack.c.l.b16 %v2581
        %v2710 = vunpack.c.l.b16 %v2582
        %v2711 = vunpack.c.l.b16 %v2583
        %v2712 = vunpack.c.l.b16 %v2584
        %v2713 = vunpack.c.l.b16 %v2585
        %v2714 = vunpack.c.l.b16 %v2586
        %v2715 = vunpack.c.l.b16 %v2587
        %v2716 = vunpack.c.l.b16 %v2588
        %v2717 = vunpack.c.l.b16 %v2589
        %v2718 = vunpack.c.l.b16 %v2590
        %v2719 = vunpack.c.l.b16 %v2591
        %v2720 = vunpack.c.l.b16 %v2592
        %v2721 = vunpack.c.l.b16 %v2593
        %v2722 = vunpack.c.l.b16 %v2594
        %v2723 = vunpack.c.l.b16 %v2595
        %v2724 = vunpack.c.l.b16 %v2596
        %v2725 = vunpack.c.l.b16 %v2597
        %v2726 = vunpack.c.l.b16 %v2598
        %v2727 = vunpack.c.l.b16 %v2599
        %v2728 = vunpack.c.l.b16 %v2600
        %v2729 = vunpack.c.l.b16 %v2601
        %v2730 = vunpack.c.l.b16 %v2602
        %v2731 = vunpack.c.l.b16 %v2603
        %v2732 = vunpack.c.l.b16 %v2604
        %v2733 = vunpack.c.l.b16 %v2605
        %v2734 = vunpack.c.l.b16 %v2606
        %v2735 = vpack.c.b16 %v2672, %v2671
        %v2736 = vpack.c.b16 %v2674, %v2673
        %v2737 = vpack.c.b16 %v2676, %v2675
        %v2738 = vpack.c.b16 %v2678, %v2677
        %v2739 = vpack.c.b16 %v2680, %v2679
        %v2740 = vpack.c.b16 %v2682, %v2681
        %v2741 = vpack.c.b16 %v2684, %v2683
        %v2742 = vpack.c.b16 %v2686, %v2685
        %v2743 = vpack.c.b16 %v2688, %v2687
        %v2744 = vpack.c.b16 %v2690, %v2689
        %v2745 = vpack.c.b16 %v2692, %v2691
        %v2746 = vpack.c.b16 %v2694, %v2693
        %v2747 = vpack.c.b16 %v2696, %v2695
        %v2748 = vpack.c.b16 %v2698, %v2697
        %v2749 = vpack.c.b16 %v2700, %v2699
        %v2750 = vpack.c.b16 %v2702, %v2701
        %v2751 = vpack.c.b16 %v2704, %v2703
        %v2752 = vpack.c.b16 %v2706, %v2705
        %v2753 = vpack.c.b16 %v2708, %v2707
        %v2754 = vpack.c.b16 %v2710, %v2709
        %v2755 = vpack.c.b16 %v2712, %v2711
        %v2756 = vpack.c.b16 %v2714, %v2713
        %v2757 = vpack.c.b16 %v2716, %v2715
        %v2758 = vpack.c.b16 %v2718, %v2717
        %v2759 = vpack.c.b16 %v2720, %v2719
        %v2760 = vpack.c.b16 %v2722, %v2721
        %v2761 = vpack.c.b16 %v2724, %v2723
        %v2762 = vpack.c.b16 %v2726, %v2725
        %v2763 = vpack.c.b16 %v2728, %v2727
        %v2764 = vpack.c.b16 %v2730, %v2729
        %v2765 = vpack.c.b16 %v2732, %v2731
        %v2766 = vpack.c.b16 %v2734, %v2733
        %2799 = vmatprep.subr.bf16.mxu0 0
        %2800 = vmatpush1.bf16.msra.mxu0 %v2742
        %2801 = vmatprep.subr.bf16.mxu0 0
        %2802 = vmatpush1.bf16.msra.mxu0 %v2741
        %2803 = vmatprep.subr.bf16.mxu0 0
        %2804 = vmatpush1.bf16.msra.mxu0 %v2740
        %2805 = vmatprep.subr.bf16.mxu0 0
        %2806 = vmatpush1.bf16.msra.mxu0 %v2739
        %2807 = vmatprep.subr.bf16.mxu0 0
        %2808 = vmatpush1.bf16.msra.mxu0 %v2738
        %2809 = vmatprep.subr.bf16.mxu0 0
        %2810 = vmatpush1.bf16.msra.mxu0 %v2737
        %2811 = vmatprep.subr.bf16.mxu0 0
        %2812 = vmatpush1.bf16.msra.mxu0 %v2736
        %2813 = vmatprep.subr.bf16.mxu0 0
        %2814 = vmatpush1.bf16.msra.mxu0 %v2735
        %2815 = vmatprep.subr.bf16.mxu0 0
        %2816 = vmatpush2.bf16.msra.mxu0 %v2750
        %2817 = vmatprep.subr.bf16.mxu0 0
        %2818 = vmatpush2.bf16.msra.mxu0 %v2749
        %2819 = vmatprep.subr.bf16.mxu0 0
        %2820 = vmatpush2.bf16.msra.mxu0 %v2748
        %2821 = vmatprep.subr.bf16.mxu0 0
        %2822 = vmatpush2.bf16.msra.mxu0 %v2747
        %2823 = vmatprep.subr.bf16.mxu0 0
        %2824 = vmatpush2.bf16.msra.mxu0 %v2746
        %2825 = vmatprep.subr.bf16.mxu0 0
        %2826 = vmatpush2.bf16.msra.mxu0 %v2745
        %2827 = vmatprep.subr.bf16.mxu0 0
        %2828 = vmatpush2.bf16.msra.mxu0 %v2744
        %2829 = vmatprep.subr.bf16.mxu0 0
        %2830 = vmatpush2.bf16.msra.mxu0 %v2743
        %2831 = vmatprep.mubr.bf16.mxu0 %v2540
        %2832 = vmatmul.mubr.bf16.gmra.mxu0 %v2539
        %v2833 = vpop.f32.mrf.mxu0
        %v2834 = vadd.f32 0.0, %v2833
        %v2835 = vpop.f32.mrf.mxu0
        %v2836 = vpop.f32.mrf.mxu0
        %v2837 = vpop.f32.mrf.mxu0
        %2838 = vdwg.mxu0
        %2839 = vmatprep.subr.bf16.mxu0 0
        %2840 = vmatpush1.bf16.msra.mxu0 %v2758
        %2841 = vmatprep.subr.bf16.mxu0 0
        %2842 = vmatpush1.bf16.msra.mxu0 %v2757
        %2843 = vmatprep.subr.bf16.mxu0 0
        %2844 = vmatpush1.bf16.msra.mxu0 %v2756
        %2845 = vmatprep.subr.bf16.mxu0 0
        %2846 = vmatpush1.bf16.msra.mxu0 %v2755
        %2847 = vmatprep.subr.bf16.mxu0 0
        %2848 = vmatpush1.bf16.msra.mxu0 %v2754
        %2849 = vmatprep.subr.bf16.mxu0 0
        %2850 = vmatpush1.bf16.msra.mxu0 %v2753
        %2851 = vmatprep.subr.bf16.mxu0 0
        %2852 = vmatpush1.bf16.msra.mxu0 %v2752
        %2853 = vmatprep.subr.bf16.mxu0 0
        %2854 = vmatpush1.bf16.msra.mxu0 %v2751
        %2855 = vmatprep.subr.bf16.mxu0 0
        %2856 = vmatpush2.bf16.msra.mxu0 %v2766
        %2857 = vmatprep.subr.bf16.mxu0 0
        %2858 = vmatpush2.bf16.msra.mxu0 %v2765
        %2859 = vmatprep.subr.bf16.mxu0 0
        %2860 = vmatpush2.bf16.msra.mxu0 %v2764
        %2861 = vmatprep.subr.bf16.mxu0 0
        %2862 = vmatpush2.bf16.msra.mxu0 %v2763
        %2863 = vmatprep.subr.bf16.mxu0 0
        %2864 = vmatpush2.bf16.msra.mxu0 %v2762
        %2865 = vmatprep.subr.bf16.mxu0 0
        %2866 = vmatpush2.bf16.msra.mxu0 %v2761
        %2867 = vmatprep.subr.bf16.mxu0 0
        %2868 = vmatpush2.bf16.msra.mxu0 %v2760
        %2869 = vmatprep.subr.bf16.mxu0 0
        %2870 = vmatpush2.bf16.msra.mxu0 %v2759
        %2871 = vmatprep.mubr.bf16.mxu0 %v2542
        %2872 = vmatmul.mubr.bf16.gmra.mxu0 %v2541
        %v2873 = vpop.f32.mrf.mxu0
        %v2874 = vadd.f32 %v2834, %v2873
        %v2875 = vpop.f32.mrf.mxu0
        %v2876 = vpop.f32.mrf.mxu0
        %v2877 = vpop.f32.mrf.mxu0
        %2878 = vdwg.mxu0
        %v2879 = vadd.f32 %v1945, %v2874
        %2880 = vst [vmem:[%s588] sm:$0xff] %v2879
        %p2881 = scmp.eq.s32.totalorder %s39, 1
        // Predicated region
        $region89: #{tpu_custom_call.1} parent=51 // pred_check
          %p2882 = pneg %p2881
        $region90: #{tpu_custom_call.1} parent=51 // pred_check_branch
          %2884 = sbr.rel (%p2882) target = $region92
        $region91: #{tpu_custom_call.1} parent=51 // pred_region
          %v2885 = vmul.f32 %v2879, %v2879
          %2886 = vadd.xlane.f32.xlu0 %v2885
          %v2887 = vpop.xlane.xlu0 %2886
          %v2888 = vmul.f32 %v2887, %v609
          %v2889 = vadd.f32 %v2888, 1e-06
          %v2890 = vrsqrt.pop %v2889
          %v2891 = vmul.f32 %v2879, %v2890
          %v2892 = vlaneseq
          %v2893 = vshrl.u32 %v2892, 7
          %v2894 = vsub.s32 3, %v2893
          %v2895 = vrot.slane %v586, %v2894
          %v2896 = vmul.f32 %v2891, %v2895
          %2897 = vst [vmem:[%s576] sm:$0xff] %v2896
        $region92: #{tpu_custom_call.1} parent=51 // pred_fallthru
          _
        %s2898 = sand.u32 %s258, 1
        %s2899 = scalar_lea.sflag [#allocation5], %s2898
        %s2900 = sand.u32 %s258, 1
        %s2901 = smul.addr %s2900, 8
        %s2902 = scalar_lea.vmem [#allocation17], %s2901
        // Predicated region
        $region93: #{tpu_custom_call.1} parent=51 // pred_check
          %p2903 = pneg %p268
        $region94: #{tpu_custom_call.1} parent=51 // pred_check_branch
          %2905 = sbr.rel (%p2903) target = $region96
        $region95: #{tpu_custom_call.1} parent=51 // pred_region
          %s2907 = ssub.s32 128, 128
          %2908 = vsyncadd %s2899, %s2907
          %s2909 = smul.addr %s40, 128
          %s2910 = scalar_lea.hbm %s8, %s2909
          %s2912 = sshll.u32 %s2902, 4
          %s2913 = int_to_ptr.vmem [resolvable:$true] %s2912
          %2915 = dma.vmem_to_hbm [thread:$0]  %s2913, 128, %s2910, %s2899
        $region96: #{tpu_custom_call.1} parent=51 // pred_fallthru
          _
      $region52: #{tpu_custom_call.1} parent=5 // pred_fallthru
        _
      %p2916 = scmp.le.s32.totalorder 2, %s30
      // Predicated region
      $region97: #{tpu_custom_call.1} parent=5 // pred_check
        %p2917 = pneg %p2916
      $region98: #{tpu_custom_call.1} parent=5 // pred_check_branch
        %2919 = sbr.rel (%p2917) target = $region100
      $region99: #{tpu_custom_call.1} parent=5 // pred_region
        %s2920 = ssub.s32 %s30, 2
        // Predicated region
        $region101: #{tpu_custom_call.1} parent=99 // pred_check
          %p2921 = pneg %p274
        $region102: #{tpu_custom_call.1} parent=99 // pred_check_branch
          %2923 = sbr.rel (%p2921) target = $region104
        $region103: #{tpu_custom_call.1} parent=99 // pred_region
          %s2924 = sand.u32 %s259, 1
          %s2925 = scalar_lea.sflag [#allocation5], %s2924
          %s2926 = sand.u32 %s259, 1
          %s2927 = smul.addr %s2926, 8
          %s2928 = scalar_lea.vmem [#allocation17], %s2927
          %2929 = dma.done %s2925, 128
        $region104: #{tpu_custom_call.1} parent=99 // pred_fallthru
          _
      $region100: #{tpu_custom_call.1} parent=5 // pred_fallthru
        _
    $region6: #{tpu_custom_call.1} parent=1 // loop_footer
      %s34 = sadd.s32 1, %s30
    $region7: #{tpu_custom_call.1} parent=1 // loop_footer_branch
      %29 = sbr.rel target = $region3
    $region8: #{tpu_custom_call.1} parent=1 // loop_exit
      _
    %2930 = vsyncpa [#allocation4], 1
    %s2931 = scalar_lea.sflag [#allocation4], 1
    %2932 = vsyncpa %s2931, 1
    %2933 = vsyncpa [#allocation7], 1
    %s2934 = scalar_lea.sflag [#allocation7], 1
    %2935 = vsyncpa %s2934, 1
    %2936 = vsyncpa [#allocation10], 1
    %s2937 = scalar_lea.sflag [#allocation10], 1
    %2938 = vsyncpa %s2937, 1
    %2939 = vsyncpa [#allocation13], 1
    %s2940 = scalar_lea.sflag [#allocation13], 1
    %2941 = vsyncpa %s2940, 1
    %2942 = vsyncpa [#allocation16], 1
    %s2943 = scalar_lea.sflag [#allocation16], 1
    %2944 = vsyncpa %s2943, 1
    %2945 = vsyncpa [#allocation5], 1
    %s2946 = scalar_lea.sflag [#allocation5], 1
    %2947 = vsyncpa %s2946, 1

</llo_original>
